<compile_context>
chip_gen: v5e
topology: v5e:2x2
jax: 0.10.0
libtpu: 0.0.40
codegen_flags: <defaults>
</compile_context>

<pallas_src>
import functools

import numpy as np
import jax
import jax.numpy as jnp
from jax import lax
from jax.experimental import pallas as pl
from jax.experimental.pallas import tpu as pltpu


def _cbam_kernel(x_ref, w1t_ref, w2t_ref, rc_ref, wsp_ref, o_ref, *, H, W, K, pad):
    """CBAM forward for a (TB, C, HW) block.

    x_ref  : (TB, C, HW)   input features (NCHW, spatial flattened onto lanes)
    w1t_ref: (C, Cr)       fc1 weight, pre-transposed (in x out)
    w2t_ref: (Cr, C)       fc2 weight, pre-transposed
    rc_ref : (2, HW) i32   [row-index ; col-index] table of the flat grid
    wsp_ref: (2, K*K) f32  spatial-conv weight (avg plane ; max plane), SMEM
    o_ref  : (TB, C, HW)
    """
    xs = x_ref[...].astype(jnp.float32)                      # (TB, C, HW)

    # ---------------- Channel attention (no lane concat) ----------------
    avg = jnp.mean(xs, axis=2)                               # (TB, C)
    mx = jnp.max(xs, axis=2)                                 # (TB, C)
    w1t = w1t_ref[...]
    w2t = w2t_ref[...]

    def mlp(v):                                              # (TB, C) -> (TB, C)
        h = jnp.maximum(
            jnp.dot(v, w1t, preferred_element_type=jnp.float32), 0.0)
        return jnp.dot(h, w2t, preferred_element_type=jnp.float32)

    ca = jax.nn.sigmoid(mlp(avg) + mlp(mx))                  # (TB, C)
    out = xs * ca[:, :, None]                                # (TB, C, HW)

    # ------------- Spatial attention: KxK conv via lane rolls -------------
    ch_avg = jnp.mean(out, axis=1)                           # (TB, HW)
    ch_max = jnp.max(out, axis=1)                            # (TB, HW)

    row_id = rc_ref[0:1, :]                                  # (1, HW) i32
    col_id = rc_ref[1:2, :]                                  # (1, HW) i32
    HW = H * W

    acc = jnp.zeros_like(ch_avg)                             # (TB, HW) f32
    for di in range(K):
        oi = di - pad
        rmask = (row_id + oi >= 0) & (row_id + oi < H)       # (1, HW)
        for dj in range(K):
            oj = dj - pad
            mask = rmask & ((col_id + oj >= 0) & (col_id + oj < W))
            s = oi * W + oj                                  # flat source offset
            if s == 0:
                av, mv = ch_avg, ch_max
            else:
                shift = (-s) % HW                            # shifted[p] = x[p+s]
                av = pltpu.roll(ch_avg, shift, axis=1)
                mv = pltpu.roll(ch_max, shift, axis=1)
            t = di * K + dj
            contrib = av * wsp_ref[0, t] + mv * wsp_ref[1, t]
            acc = acc + jnp.where(mask, contrib, 0.0)

    sa = jax.nn.sigmoid(acc)                                 # (TB, HW)
    o_ref[...] = (out * sa[:, None, :]).astype(o_ref.dtype)


def _pick_tb(B, C, HW, budget_bytes):
    """Largest divisor of B whose per-step resident footprint fits the budget."""
    # Rough estimate: in/out blocks (double-buffered) + in-kernel f32 temps.
    per_b = 16 * C * HW * 4
    cap = max(1, budget_bytes // per_b)
    tb = 1
    for cand in range(min(B, cap), 0, -1):
        if B % cand == 0:
            tb = cand
            break
    return tb


def cbam_forward(x_nchw, w1, w2, wsp):
    """CBAM forward.

    x_nchw: (B, C, H, W).  w1: (C//ratio, C), w2: (C, C//ratio) -- PyTorch
    1x1-conv weight layouts.  wsp: (2, K, K) spatial-attention conv weight.
    Returns (B, C, H, W) with the input dtype.
    """
    B, C, H, W = x_nchw.shape
    Cr = w1.shape[0]
    K = wsp.shape[-1]
    pad = (K - 1) // 2
    HW = H * W

    # Generation-aware VMEM budget: ~75% of physical, fallback assumes v7x.
    try:
        vmem_cap = int(pltpu.get_tpu_info().vmem_capacity_bytes)
    except Exception:
        vmem_cap = 64 * 1024 * 1024
    budget = min((vmem_cap * 3) // 4, 112 * 1024 * 1024)

    TB = _pick_tb(B, C, HW, budget)

    x_flat = x_nchw.reshape(B, C, HW)                        # free reshape
    w1t = jnp.asarray(w1, jnp.float32).T                     # (C, Cr)
    w2t = jnp.asarray(w2, jnp.float32).T                     # (Cr, C)
    wsp_flat = jnp.asarray(wsp, jnp.float32).reshape(2, K * K)

    # Static row/col index table of the flattened spatial grid (border masks).
    pos = np.arange(HW, dtype=np.int32)
    rc = jnp.asarray(np.stack([pos // W, pos % W], axis=0))  # (2, HW) i32

    kernel = functools.partial(_cbam_kernel, H=H, W=W, K=K, pad=pad)

    out_flat = pl.pallas_call(
        kernel,
        out_shape=jax.ShapeDtypeStruct((B, C, HW), x_nchw.dtype),
        grid_spec=pltpu.PrefetchScalarGridSpec(
            num_scalar_prefetch=0,
            grid=(B // TB,),
            in_specs=[
                pl.BlockSpec((TB, C, HW), lambda b: (b, 0, 0)),
                pl.BlockSpec((C, Cr), lambda b: (0, 0)),
                pl.BlockSpec((Cr, C), lambda b: (0, 0)),
                pl.BlockSpec((2, HW), lambda b: (0, 0)),
                pl.BlockSpec(memory_space=pltpu.MemorySpace.SMEM),
            ],
            out_specs=pl.BlockSpec((TB, C, HW), lambda b: (b, 0, 0)),
        ),
        compiler_params=pltpu.CompilerParams(
            dimension_semantics=("parallel",),
            vmem_limit_bytes=int(budget)),
    )(x_flat, w1t, w2t, rc, wsp_flat)

    return out_flat.reshape(B, C, H, W)


def cbam_reference(x, w1, w2, wsp):
    """Pure-JAX reference matching the PyTorch module semantics."""
    avg = jnp.mean(x, axis=(2, 3))                           # (B, C)
    mx = jnp.max(x, axis=(2, 3))                             # (B, C)

    def mlp(v):
        return jnp.maximum(v @ w1.T, 0.0) @ w2.T

    ca = jax.nn.sigmoid(mlp(avg) + mlp(mx))                  # (B, C)
    out = x * ca[:, :, None, None]

    ch_avg = jnp.mean(out, axis=1, keepdims=True)
    ch_max = jnp.max(out, axis=1, keepdims=True)
    feat = jnp.concatenate([ch_avg, ch_max], axis=1)         # (B, 2, H, W)
    K = wsp.shape[-1]
    pad = (K - 1) // 2
    conv = lax.conv_general_dilated(
        feat, wsp.reshape(1, 2, K, K),
        window_strides=(1, 1), padding=((pad, pad), (pad, pad)),
        dimension_numbers=("NCHW", "OIHW", "NCHW"))
    sa = jax.nn.sigmoid(conv)                                # (B, 1, H, W)
    return out * sa


if __name__ == "__main__":
    # Shapes consistent with the module: in_planes=128, ratio=16 -> hidden=8.
    # C=128 keeps every vreg / store lane-dense; H*W=256 is a lane multiple.
    B, C, H, W = 2, 128, 16, 16
    ratio, K = 16, 7
    Cr = C // ratio

    key = jax.random.PRNGKey(0)
    k1, k2, k3, k4 = jax.random.split(key, 4)
    x = jax.random.normal(k1, (B, C, H, W), jnp.float32)
    # Parameters in the PyTorch layouts:
    #   fc1: Conv2d(C, C//ratio, 1, bias=False)  -> w1: (Cr, C)
    #   fc2: Conv2d(C//ratio, C, 1, bias=False)  -> w2: (C, Cr)
    #   sa.conv1: Conv2d(2, 1, 7, bias=False)    -> wsp: (2, 7, 7)
    w1 = jax.random.normal(k2, (Cr, C), jnp.float32) * 0.1
    w2 = jax.random.normal(k3, (C, Cr), jnp.float32) * 0.1
    wsp = jax.random.normal(k4, (2, K, K), jnp.float32) * 0.1

    out = cbam_forward(x, w1, w2, wsp)
    out = jax.block_until_ready(out)

    ref = cbam_reference(x, w1, w2, wsp)
    assert out.shape == (B, C, H, W)
    assert jnp.allclose(out, ref, atol=1e-4, rtol=1e-4), (
        "Pallas CBAM output mismatch vs JAX reference")

    print("KERNEL_OK")
</pallas_src>

<mosaic_0001>
module attributes {stable_mosaic.version = 11 : i64} {
  func.func @_cbam_kernel(%arg0: i32, %arg1: memref<2x128x256xf32, #tpu.memory_space<vmem>>, %arg2: memref<128x8xf32, #tpu.memory_space<vmem>>, %arg3: memref<8x128xf32, #tpu.memory_space<vmem>>, %arg4: memref<2x256xi32, #tpu.memory_space<vmem>>, %arg5: memref<2x49xf32, #tpu.memory_space<smem>>, %arg6: memref<2x128x256xf32, #tpu.memory_space<vmem>>) attributes {dimension_semantics = [#tpu.dimension_semantics<parallel>], iteration_bounds = array<i64: 1>, scalar_prefetch = 0 : i64, scratch_operands = 0 : i64, tpu.core_type = #tpu.core_type<tc>, window_params = [{transform_indices = @transform_0, window_bounds = array<i64: 2, 128, 256>}, {pipeline_mode = #tpu.pipeline_mode<synchronous>, transform_indices = @transform_1, window_bounds = array<i64: 128, 8>}, {pipeline_mode = #tpu.pipeline_mode<synchronous>, transform_indices = @transform_2, window_bounds = array<i64: 8, 128>}, {pipeline_mode = #tpu.pipeline_mode<synchronous>, transform_indices = @transform_3, window_bounds = array<i64: 2, 256>}, {transform_indices = @transform_4, window_bounds = array<i64: 2, 49>}, {transform_indices = @transform_5, window_bounds = array<i64: 2, 128, 256>}]} {
    %c0 = arith.constant 0 : index
    %c0_0 = arith.constant 0 : index
    %c0_1 = arith.constant 0 : index
    %0 = vector.load %arg1[%c0, %c0_0, %c0_1] : memref<2x128x256xf32, #tpu.memory_space<vmem>>, vector<2x128x256xf32>
    %cst = arith.constant dense<0.000000e+00> : vector<2x128xf32>
    %1 = vector.multi_reduction <add>, %0, %cst [2] : vector<2x128x256xf32> to vector<2x128xf32>
    %cst_2 = arith.constant 2.560000e+02 : f32
    %2 = vector.broadcast %cst_2 : f32 to vector<2x128xf32>
    %3 = arith.divf %1, %2 : vector<2x128xf32>
    %cst_3 = arith.constant dense<0xFF800000> : vector<2x128xf32>
    %4 = vector.multi_reduction <maximumf>, %0, %cst_3 [2] : vector<2x128x256xf32> to vector<2x128xf32>
    %c0_4 = arith.constant 0 : index
    %c0_5 = arith.constant 0 : index
    %5 = vector.load %arg2[%c0_4, %c0_5] : memref<128x8xf32, #tpu.memory_space<vmem>>, vector<128x8xf32>
    %c0_6 = arith.constant 0 : index
    %c0_7 = arith.constant 0 : index
    %6 = vector.load %arg3[%c0_6, %c0_7] : memref<8x128xf32, #tpu.memory_space<vmem>>, vector<8x128xf32>
    %cst_8 = arith.constant dense<0.000000e+00> : vector<2x8xf32>
    %7 = tpu.matmul %3, %5, %cst_8 {dimension_numbers = #tpu.dot_dimension_numbers<[1], [0], [0], [1], [0, 0, 1, 1], [], []>} : vector<2x128xf32>, vector<128x8xf32>, vector<2x8xf32> -> vector<2x8xf32>
    %cst_9 = arith.constant 0.000000e+00 : f32
    %8 = vector.broadcast %cst_9 : f32 to vector<2x8xf32>
    %9 = arith.maximumf %7, %8 : vector<2x8xf32>
    %cst_10 = arith.constant dense<0.000000e+00> : vector<2x128xf32>
    %10 = tpu.matmul %9, %6, %cst_10 {dimension_numbers = #tpu.dot_dimension_numbers<[1], [0], [0], [1], [0, 0, 1, 1], [], []>} : vector<2x8xf32>, vector<8x128xf32>, vector<2x128xf32> -> vector<2x128xf32>
    %cst_11 = arith.constant dense<0.000000e+00> : vector<2x8xf32>
    %11 = tpu.matmul %4, %5, %cst_11 {dimension_numbers = #tpu.dot_dimension_numbers<[1], [0], [0], [1], [0, 0, 1, 1], [], []>} : vector<2x128xf32>, vector<128x8xf32>, vector<2x8xf32> -> vector<2x8xf32>
    %cst_12 = arith.constant 0.000000e+00 : f32
    %12 = vector.broadcast %cst_12 : f32 to vector<2x8xf32>
    %13 = arith.maximumf %11, %12 : vector<2x8xf32>
    %cst_13 = arith.constant dense<0.000000e+00> : vector<2x128xf32>
    %14 = tpu.matmul %13, %6, %cst_13 {dimension_numbers = #tpu.dot_dimension_numbers<[1], [0], [0], [1], [0, 0, 1, 1], [], []>} : vector<2x8xf32>, vector<8x128xf32>, vector<2x128xf32> -> vector<2x128xf32>
    %15 = arith.addf %10, %14 : vector<2x128xf32>
    %16 = arith.negf %15 : vector<2x128xf32>
    %17 = math.exp %16 : vector<2x128xf32>
    %cst_14 = arith.constant 1.000000e+00 : f32
    %18 = vector.broadcast %cst_14 : f32 to vector<2x128xf32>
    %19 = arith.addf %18, %17 : vector<2x128xf32>
    %20 = arith.divf %18, %19 : vector<2x128xf32>
    %21 = vector.shape_cast %20 : vector<2x128xf32> to vector<2x128x1xf32>
    %22 = vector.broadcast %21 : vector<2x128x1xf32> to vector<2x128x256xf32>
    %23 = arith.mulf %0, %22 : vector<2x128x256xf32>
    %cst_15 = arith.constant dense<0.000000e+00> : vector<2x256xf32>
    %24 = vector.multi_reduction <add>, %23, %cst_15 [1] : vector<2x128x256xf32> to vector<2x256xf32>
    %cst_16 = arith.constant 1.280000e+02 : f32
    %25 = vector.broadcast %cst_16 : f32 to vector<2x256xf32>
    %26 = arith.divf %24, %25 : vector<2x256xf32>
    %cst_17 = arith.constant dense<0xFF800000> : vector<2x256xf32>
    %27 = vector.multi_reduction <maximumf>, %23, %cst_17 [1] : vector<2x128x256xf32> to vector<2x256xf32>
    %c0_18 = arith.constant 0 : index
    %c0_19 = arith.constant 0 : index
    %28 = vector.load %arg4[%c0_18, %c0_19] : memref<2x256xi32, #tpu.memory_space<vmem>>, vector<1x256xi32>
    %c1 = arith.constant 1 : index
    %c0_20 = arith.constant 0 : index
    %29 = vector.load %arg4[%c1, %c0_20] : memref<2x256xi32, #tpu.memory_space<vmem>>, vector<1x256xi32>
    %cst_21 = arith.constant 0.000000e+00 : f32
    %30 = vector.broadcast %cst_21 : f32 to vector<2x256xf32>
    %c-3_i32 = arith.constant -3 : i32
    %31 = vector.broadcast %c-3_i32 : i32 to vector<1x256xi32>
    %32 = arith.addi %28, %31 : vector<1x256xi32>
    %c0_i32 = arith.constant 0 : i32
    %33 = vector.broadcast %c0_i32 : i32 to vector<1x256xi32>
    %34 = arith.cmpi sge, %32, %33 : vector<1x256xi32>
    %c-3_i32_22 = arith.constant -3 : i32
    %35 = vector.broadcast %c-3_i32_22 : i32 to vector<1x256xi32>
    %36 = arith.addi %28, %35 : vector<1x256xi32>
    %c16_i32 = arith.constant 16 : i32
    %37 = vector.broadcast %c16_i32 : i32 to vector<1x256xi32>
    %38 = arith.cmpi slt, %36, %37 : vector<1x256xi32>
    %39 = arith.andi %34, %38 : vector<1x256xi1>
    %c-3_i32_23 = arith.constant -3 : i32
    %40 = vector.broadcast %c-3_i32_23 : i32 to vector<1x256xi32>
    %41 = arith.addi %29, %40 : vector<1x256xi32>
    %c0_i32_24 = arith.constant 0 : i32
    %42 = vector.broadcast %c0_i32_24 : i32 to vector<1x256xi32>
    %43 = arith.cmpi sge, %41, %42 : vector<1x256xi32>
    %c-3_i32_25 = arith.constant -3 : i32
    %44 = vector.broadcast %c-3_i32_25 : i32 to vector<1x256xi32>
    %45 = arith.addi %29, %44 : vector<1x256xi32>
    %c16_i32_26 = arith.constant 16 : i32
    %46 = vector.broadcast %c16_i32_26 : i32 to vector<1x256xi32>
    %47 = arith.cmpi slt, %45, %46 : vector<1x256xi32>
    %48 = arith.andi %43, %47 : vector<1x256xi1>
    %49 = arith.andi %39, %48 : vector<1x256xi1>
    %c51_i32 = arith.constant 51 : i32
    %50 = tpu.dynamic_rotate %26 by %c51_i32 dim 1 : vector<2x256xf32>, i32 -> vector<2x256xf32>
    %c51_i32_27 = arith.constant 51 : i32
    %51 = tpu.dynamic_rotate %27 by %c51_i32_27 dim 1 : vector<2x256xf32>, i32 -> vector<2x256xf32>
    %c0_28 = arith.constant 0 : index
    %c0_29 = arith.constant 0 : index
    %52 = memref.load %arg5[%c0_28, %c0_29] : memref<2x49xf32, #tpu.memory_space<smem>>
    %53 = vector.broadcast %52 : f32 to vector<2x256xf32>
    %54 = arith.mulf %50, %53 : vector<2x256xf32>
    %c1_30 = arith.constant 1 : index
    %c0_31 = arith.constant 0 : index
    %55 = memref.load %arg5[%c1_30, %c0_31] : memref<2x49xf32, #tpu.memory_space<smem>>
    %56 = vector.broadcast %55 : f32 to vector<2x256xf32>
    %57 = arith.mulf %51, %56 : vector<2x256xf32>
    %58 = arith.addf %54, %57 : vector<2x256xf32>
    %cst_32 = arith.constant 0.000000e+00 : f32
    %59 = vector.shape_cast %49 : vector<1x256xi1> to vector<1x256xi1>
    %60 = vector.broadcast %59 : vector<1x256xi1> to vector<2x256xi1>
    %61 = vector.broadcast %cst_32 : f32 to vector<2x256xf32>
    %62 = arith.select %60, %58, %61 : vector<2x256xi1>, vector<2x256xf32>
    %63 = arith.addf %30, %62 : vector<2x256xf32>
    %c-2_i32 = arith.constant -2 : i32
    %64 = vector.broadcast %c-2_i32 : i32 to vector<1x256xi32>
    %65 = arith.addi %29, %64 : vector<1x256xi32>
    %c0_i32_33 = arith.constant 0 : i32
    %66 = vector.broadcast %c0_i32_33 : i32 to vector<1x256xi32>
    %67 = arith.cmpi sge, %65, %66 : vector<1x256xi32>
    %c-2_i32_34 = arith.constant -2 : i32
    %68 = vector.broadcast %c-2_i32_34 : i32 to vector<1x256xi32>
    %69 = arith.addi %29, %68 : vector<1x256xi32>
    %c16_i32_35 = arith.constant 16 : i32
    %70 = vector.broadcast %c16_i32_35 : i32 to vector<1x256xi32>
    %71 = arith.cmpi slt, %69, %70 : vector<1x256xi32>
    %72 = arith.andi %67, %71 : vector<1x256xi1>
    %73 = arith.andi %39, %72 : vector<1x256xi1>
    %c50_i32 = arith.constant 50 : i32
    %74 = tpu.dynamic_rotate %26 by %c50_i32 dim 1 : vector<2x256xf32>, i32 -> vector<2x256xf32>
    %c50_i32_36 = arith.constant 50 : i32
    %75 = tpu.dynamic_rotate %27 by %c50_i32_36 dim 1 : vector<2x256xf32>, i32 -> vector<2x256xf32>
    %c0_37 = arith.constant 0 : index
    %c1_38 = arith.constant 1 : index
    %76 = memref.load %arg5[%c0_37, %c1_38] : memref<2x49xf32, #tpu.memory_space<smem>>
    %77 = vector.broadcast %76 : f32 to vector<2x256xf32>
    %78 = arith.mulf %74, %77 : vector<2x256xf32>
    %c1_39 = arith.constant 1 : index
    %c1_40 = arith.constant 1 : index
    %79 = memref.load %arg5[%c1_39, %c1_40] : memref<2x49xf32, #tpu.memory_space<smem>>
    %80 = vector.broadcast %79 : f32 to vector<2x256xf32>
    %81 = arith.mulf %75, %80 : vector<2x256xf32>
    %82 = arith.addf %78, %81 : vector<2x256xf32>
    %cst_41 = arith.constant 0.000000e+00 : f32
    %83 = vector.shape_cast %73 : vector<1x256xi1> to vector<1x256xi1>
    %84 = vector.broadcast %83 : vector<1x256xi1> to vector<2x256xi1>
    %85 = vector.broadcast %cst_41 : f32 to vector<2x256xf32>
    %86 = arith.select %84, %82, %85 : vector<2x256xi1>, vector<2x256xf32>
    %87 = arith.addf %63, %86 : vector<2x256xf32>
    %c-1_i32 = arith.constant -1 : i32
    %88 = vector.broadcast %c-1_i32 : i32 to vector<1x256xi32>
    %89 = arith.addi %29, %88 : vector<1x256xi32>
    %c0_i32_42 = arith.constant 0 : i32
    %90 = vector.broadcast %c0_i32_42 : i32 to vector<1x256xi32>
    %91 = arith.cmpi sge, %89, %90 : vector<1x256xi32>
    %c-1_i32_43 = arith.constant -1 : i32
    %92 = vector.broadcast %c-1_i32_43 : i32 to vector<1x256xi32>
    %93 = arith.addi %29, %92 : vector<1x256xi32>
    %c16_i32_44 = arith.constant 16 : i32
    %94 = vector.broadcast %c16_i32_44 : i32 to vector<1x256xi32>
    %95 = arith.cmpi slt, %93, %94 : vector<1x256xi32>
    %96 = arith.andi %91, %95 : vector<1x256xi1>
    %97 = arith.andi %39, %96 : vector<1x256xi1>
    %c49_i32 = arith.constant 49 : i32
    %98 = tpu.dynamic_rotate %26 by %c49_i32 dim 1 : vector<2x256xf32>, i32 -> vector<2x256xf32>
    %c49_i32_45 = arith.constant 49 : i32
    %99 = tpu.dynamic_rotate %27 by %c49_i32_45 dim 1 : vector<2x256xf32>, i32 -> vector<2x256xf32>
    %c0_46 = arith.constant 0 : index
    %c2 = arith.constant 2 : index
    %100 = memref.load %arg5[%c0_46, %c2] : memref<2x49xf32, #tpu.memory_space<smem>>
    %101 = vector.broadcast %100 : f32 to vector<2x256xf32>
    %102 = arith.mulf %98, %101 : vector<2x256xf32>
    %c1_47 = arith.constant 1 : index
    %c2_48 = arith.constant 2 : index
    %103 = memref.load %arg5[%c1_47, %c2_48] : memref<2x49xf32, #tpu.memory_space<smem>>
    %104 = vector.broadcast %103 : f32 to vector<2x256xf32>
    %105 = arith.mulf %99, %104 : vector<2x256xf32>
    %106 = arith.addf %102, %105 : vector<2x256xf32>
    %cst_49 = arith.constant 0.000000e+00 : f32
    %107 = vector.shape_cast %97 : vector<1x256xi1> to vector<1x256xi1>
    %108 = vector.broadcast %107 : vector<1x256xi1> to vector<2x256xi1>
    %109 = vector.broadcast %cst_49 : f32 to vector<2x256xf32>
    %110 = arith.select %108, %106, %109 : vector<2x256xi1>, vector<2x256xf32>
    %111 = arith.addf %87, %110 : vector<2x256xf32>
    %c0_i32_50 = arith.constant 0 : i32
    %112 = vector.broadcast %c0_i32_50 : i32 to vector<1x256xi32>
    %113 = arith.addi %29, %112 : vector<1x256xi32>
    %c0_i32_51 = arith.constant 0 : i32
    %114 = vector.broadcast %c0_i32_51 : i32 to vector<1x256xi32>
    %115 = arith.cmpi sge, %113, %114 : vector<1x256xi32>
    %c0_i32_52 = arith.constant 0 : i32
    %116 = vector.broadcast %c0_i32_52 : i32 to vector<1x256xi32>
    %117 = arith.addi %29, %116 : vector<1x256xi32>
    %c16_i32_53 = arith.constant 16 : i32
    %118 = vector.broadcast %c16_i32_53 : i32 to vector<1x256xi32>
    %119 = arith.cmpi slt, %117, %118 : vector<1x256xi32>
    %120 = arith.andi %115, %119 : vector<1x256xi1>
    %121 = arith.andi %39, %120 : vector<1x256xi1>
    %c48_i32 = arith.constant 48 : i32
    %122 = tpu.dynamic_rotate %26 by %c48_i32 dim 1 : vector<2x256xf32>, i32 -> vector<2x256xf32>
    %c48_i32_54 = arith.constant 48 : i32
    %123 = tpu.dynamic_rotate %27 by %c48_i32_54 dim 1 : vector<2x256xf32>, i32 -> vector<2x256xf32>
    %c0_55 = arith.constant 0 : index
    %c3 = arith.constant 3 : index
    %124 = memref.load %arg5[%c0_55, %c3] : memref<2x49xf32, #tpu.memory_space<smem>>
    %125 = vector.broadcast %124 : f32 to vector<2x256xf32>
    %126 = arith.mulf %122, %125 : vector<2x256xf32>
    %c1_56 = arith.constant 1 : index
    %c3_57 = arith.constant 3 : index
    %127 = memref.load %arg5[%c1_56, %c3_57] : memref<2x49xf32, #tpu.memory_space<smem>>
    %128 = vector.broadcast %127 : f32 to vector<2x256xf32>
    %129 = arith.mulf %123, %128 : vector<2x256xf32>
    %130 = arith.addf %126, %129 : vector<2x256xf32>
    %cst_58 = arith.constant 0.000000e+00 : f32
    %131 = vector.shape_cast %121 : vector<1x256xi1> to vector<1x256xi1>
    %132 = vector.broadcast %131 : vector<1x256xi1> to vector<2x256xi1>
    %133 = vector.broadcast %cst_58 : f32 to vector<2x256xf32>
    %134 = arith.select %132, %130, %133 : vector<2x256xi1>, vector<2x256xf32>
    %135 = arith.addf %111, %134 : vector<2x256xf32>
    %c1_i32 = arith.constant 1 : i32
    %136 = vector.broadcast %c1_i32 : i32 to vector<1x256xi32>
    %137 = arith.addi %29, %136 : vector<1x256xi32>
    %c0_i32_59 = arith.constant 0 : i32
    %138 = vector.broadcast %c0_i32_59 : i32 to vector<1x256xi32>
    %139 = arith.cmpi sge, %137, %138 : vector<1x256xi32>
    %c1_i32_60 = arith.constant 1 : i32
    %140 = vector.broadcast %c1_i32_60 : i32 to vector<1x256xi32>
    %141 = arith.addi %29, %140 : vector<1x256xi32>
    %c16_i32_61 = arith.constant 16 : i32
    %142 = vector.broadcast %c16_i32_61 : i32 to vector<1x256xi32>
    %143 = arith.cmpi slt, %141, %142 : vector<1x256xi32>
    %144 = arith.andi %139, %143 : vector<1x256xi1>
    %145 = arith.andi %39, %144 : vector<1x256xi1>
    %c47_i32 = arith.constant 47 : i32
    %146 = tpu.dynamic_rotate %26 by %c47_i32 dim 1 : vector<2x256xf32>, i32 -> vector<2x256xf32>
    %c47_i32_62 = arith.constant 47 : i32
    %147 = tpu.dynamic_rotate %27 by %c47_i32_62 dim 1 : vector<2x256xf32>, i32 -> vector<2x256xf32>
    %c0_63 = arith.constant 0 : index
    %c4 = arith.constant 4 : index
    %148 = memref.load %arg5[%c0_63, %c4] : memref<2x49xf32, #tpu.memory_space<smem>>
    %149 = vector.broadcast %148 : f32 to vector<2x256xf32>
    %150 = arith.mulf %146, %149 : vector<2x256xf32>
    %c1_64 = arith.constant 1 : index
    %c4_65 = arith.constant 4 : index
    %151 = memref.load %arg5[%c1_64, %c4_65] : memref<2x49xf32, #tpu.memory_space<smem>>
    %152 = vector.broadcast %151 : f32 to vector<2x256xf32>
    %153 = arith.mulf %147, %152 : vector<2x256xf32>
    %154 = arith.addf %150, %153 : vector<2x256xf32>
    %cst_66 = arith.constant 0.000000e+00 : f32
    %155 = vector.shape_cast %145 : vector<1x256xi1> to vector<1x256xi1>
    %156 = vector.broadcast %155 : vector<1x256xi1> to vector<2x256xi1>
    %157 = vector.broadcast %cst_66 : f32 to vector<2x256xf32>
    %158 = arith.select %156, %154, %157 : vector<2x256xi1>, vector<2x256xf32>
    %159 = arith.addf %135, %158 : vector<2x256xf32>
    %c2_i32 = arith.constant 2 : i32
    %160 = vector.broadcast %c2_i32 : i32 to vector<1x256xi32>
    %161 = arith.addi %29, %160 : vector<1x256xi32>
    %c0_i32_67 = arith.constant 0 : i32
    %162 = vector.broadcast %c0_i32_67 : i32 to vector<1x256xi32>
    %163 = arith.cmpi sge, %161, %162 : vector<1x256xi32>
    %c2_i32_68 = arith.constant 2 : i32
    %164 = vector.broadcast %c2_i32_68 : i32 to vector<1x256xi32>
    %165 = arith.addi %29, %164 : vector<1x256xi32>
    %c16_i32_69 = arith.constant 16 : i32
    %166 = vector.broadcast %c16_i32_69 : i32 to vector<1x256xi32>
    %167 = arith.cmpi slt, %165, %166 : vector<1x256xi32>
    %168 = arith.andi %163, %167 : vector<1x256xi1>
    %169 = arith.andi %39, %168 : vector<1x256xi1>
    %c46_i32 = arith.constant 46 : i32
    %170 = tpu.dynamic_rotate %26 by %c46_i32 dim 1 : vector<2x256xf32>, i32 -> vector<2x256xf32>
    %c46_i32_70 = arith.constant 46 : i32
    %171 = tpu.dynamic_rotate %27 by %c46_i32_70 dim 1 : vector<2x256xf32>, i32 -> vector<2x256xf32>
    %c0_71 = arith.constant 0 : index
    %c5 = arith.constant 5 : index
    %172 = memref.load %arg5[%c0_71, %c5] : memref<2x49xf32, #tpu.memory_space<smem>>
    %173 = vector.broadcast %172 : f32 to vector<2x256xf32>
    %174 = arith.mulf %170, %173 : vector<2x256xf32>
    %c1_72 = arith.constant 1 : index
    %c5_73 = arith.constant 5 : index
    %175 = memref.load %arg5[%c1_72, %c5_73] : memref<2x49xf32, #tpu.memory_space<smem>>
    %176 = vector.broadcast %175 : f32 to vector<2x256xf32>
    %177 = arith.mulf %171, %176 : vector<2x256xf32>
    %178 = arith.addf %174, %177 : vector<2x256xf32>
    %cst_74 = arith.constant 0.000000e+00 : f32
    %179 = vector.shape_cast %169 : vector<1x256xi1> to vector<1x256xi1>
    %180 = vector.broadcast %179 : vector<1x256xi1> to vector<2x256xi1>
    %181 = vector.broadcast %cst_74 : f32 to vector<2x256xf32>
    %182 = arith.select %180, %178, %181 : vector<2x256xi1>, vector<2x256xf32>
    %183 = arith.addf %159, %182 : vector<2x256xf32>
    %c3_i32 = arith.constant 3 : i32
    %184 = vector.broadcast %c3_i32 : i32 to vector<1x256xi32>
    %185 = arith.addi %29, %184 : vector<1x256xi32>
    %c0_i32_75 = arith.constant 0 : i32
    %186 = vector.broadcast %c0_i32_75 : i32 to vector<1x256xi32>
    %187 = arith.cmpi sge, %185, %186 : vector<1x256xi32>
    %c3_i32_76 = arith.constant 3 : i32
    %188 = vector.broadcast %c3_i32_76 : i32 to vector<1x256xi32>
    %189 = arith.addi %29, %188 : vector<1x256xi32>
    %c16_i32_77 = arith.constant 16 : i32
    %190 = vector.broadcast %c16_i32_77 : i32 to vector<1x256xi32>
    %191 = arith.cmpi slt, %189, %190 : vector<1x256xi32>
    %192 = arith.andi %187, %191 : vector<1x256xi1>
    %193 = arith.andi %39, %192 : vector<1x256xi1>
    %c45_i32 = arith.constant 45 : i32
    %194 = tpu.dynamic_rotate %26 by %c45_i32 dim 1 : vector<2x256xf32>, i32 -> vector<2x256xf32>
    %c45_i32_78 = arith.constant 45 : i32
    %195 = tpu.dynamic_rotate %27 by %c45_i32_78 dim 1 : vector<2x256xf32>, i32 -> vector<2x256xf32>
    %c0_79 = arith.constant 0 : index
    %c6 = arith.constant 6 : index
    %196 = memref.load %arg5[%c0_79, %c6] : memref<2x49xf32, #tpu.memory_space<smem>>
    %197 = vector.broadcast %196 : f32 to vector<2x256xf32>
    %198 = arith.mulf %194, %197 : vector<2x256xf32>
    %c1_80 = arith.constant 1 : index
    %c6_81 = arith.constant 6 : index
    %199 = memref.load %arg5[%c1_80, %c6_81] : memref<2x49xf32, #tpu.memory_space<smem>>
    %200 = vector.broadcast %199 : f32 to vector<2x256xf32>
    %201 = arith.mulf %195, %200 : vector<2x256xf32>
    %202 = arith.addf %198, %201 : vector<2x256xf32>
    %cst_82 = arith.constant 0.000000e+00 : f32
    %203 = vector.shape_cast %193 : vector<1x256xi1> to vector<1x256xi1>
    %204 = vector.broadcast %203 : vector<1x256xi1> to vector<2x256xi1>
    %205 = vector.broadcast %cst_82 : f32 to vector<2x256xf32>
    %206 = arith.select %204, %202, %205 : vector<2x256xi1>, vector<2x256xf32>
    %207 = arith.addf %183, %206 : vector<2x256xf32>
    %c-2_i32_83 = arith.constant -2 : i32
    %208 = vector.broadcast %c-2_i32_83 : i32 to vector<1x256xi32>
    %209 = arith.addi %28, %208 : vector<1x256xi32>
    %c0_i32_84 = arith.constant 0 : i32
    %210 = vector.broadcast %c0_i32_84 : i32 to vector<1x256xi32>
    %211 = arith.cmpi sge, %209, %210 : vector<1x256xi32>
    %c-2_i32_85 = arith.constant -2 : i32
    %212 = vector.broadcast %c-2_i32_85 : i32 to vector<1x256xi32>
    %213 = arith.addi %28, %212 : vector<1x256xi32>
    %c16_i32_86 = arith.constant 16 : i32
    %214 = vector.broadcast %c16_i32_86 : i32 to vector<1x256xi32>
    %215 = arith.cmpi slt, %213, %214 : vector<1x256xi32>
    %216 = arith.andi %211, %215 : vector<1x256xi1>
    %c-3_i32_87 = arith.constant -3 : i32
    %217 = vector.broadcast %c-3_i32_87 : i32 to vector<1x256xi32>
    %218 = arith.addi %29, %217 : vector<1x256xi32>
    %c0_i32_88 = arith.constant 0 : i32
    %219 = vector.broadcast %c0_i32_88 : i32 to vector<1x256xi32>
    %220 = arith.cmpi sge, %218, %219 : vector<1x256xi32>
    %c-3_i32_89 = arith.constant -3 : i32
    %221 = vector.broadcast %c-3_i32_89 : i32 to vector<1x256xi32>
    %222 = arith.addi %29, %221 : vector<1x256xi32>
    %c16_i32_90 = arith.constant 16 : i32
    %223 = vector.broadcast %c16_i32_90 : i32 to vector<1x256xi32>
    %224 = arith.cmpi slt, %222, %223 : vector<1x256xi32>
    %225 = arith.andi %220, %224 : vector<1x256xi1>
    %226 = arith.andi %216, %225 : vector<1x256xi1>
    %c35_i32 = arith.constant 35 : i32
    %227 = tpu.dynamic_rotate %26 by %c35_i32 dim 1 : vector<2x256xf32>, i32 -> vector<2x256xf32>
    %c35_i32_91 = arith.constant 35 : i32
    %228 = tpu.dynamic_rotate %27 by %c35_i32_91 dim 1 : vector<2x256xf32>, i32 -> vector<2x256xf32>
    %c0_92 = arith.constant 0 : index
    %c7 = arith.constant 7 : index
    %229 = memref.load %arg5[%c0_92, %c7] : memref<2x49xf32, #tpu.memory_space<smem>>
    %230 = vector.broadcast %229 : f32 to vector<2x256xf32>
    %231 = arith.mulf %227, %230 : vector<2x256xf32>
    %c1_93 = arith.constant 1 : index
    %c7_94 = arith.constant 7 : index
    %232 = memref.load %arg5[%c1_93, %c7_94] : memref<2x49xf32, #tpu.memory_space<smem>>
    %233 = vector.broadcast %232 : f32 to vector<2x256xf32>
    %234 = arith.mulf %228, %233 : vector<2x256xf32>
    %235 = arith.addf %231, %234 : vector<2x256xf32>
    %cst_95 = arith.constant 0.000000e+00 : f32
    %236 = vector.shape_cast %226 : vector<1x256xi1> to vector<1x256xi1>
    %237 = vector.broadcast %236 : vector<1x256xi1> to vector<2x256xi1>
    %238 = vector.broadcast %cst_95 : f32 to vector<2x256xf32>
    %239 = arith.select %237, %235, %238 : vector<2x256xi1>, vector<2x256xf32>
    %240 = arith.addf %207, %239 : vector<2x256xf32>
    %c-2_i32_96 = arith.constant -2 : i32
    %241 = vector.broadcast %c-2_i32_96 : i32 to vector<1x256xi32>
    %242 = arith.addi %29, %241 : vector<1x256xi32>
    %c0_i32_97 = arith.constant 0 : i32
    %243 = vector.broadcast %c0_i32_97 : i32 to vector<1x256xi32>
    %244 = arith.cmpi sge, %242, %243 : vector<1x256xi32>
    %c-2_i32_98 = arith.constant -2 : i32
    %245 = vector.broadcast %c-2_i32_98 : i32 to vector<1x256xi32>
    %246 = arith.addi %29, %245 : vector<1x256xi32>
    %c16_i32_99 = arith.constant 16 : i32
    %247 = vector.broadcast %c16_i32_99 : i32 to vector<1x256xi32>
    %248 = arith.cmpi slt, %246, %247 : vector<1x256xi32>
    %249 = arith.andi %244, %248 : vector<1x256xi1>
    %250 = arith.andi %216, %249 : vector<1x256xi1>
    %c34_i32 = arith.constant 34 : i32
    %251 = tpu.dynamic_rotate %26 by %c34_i32 dim 1 : vector<2x256xf32>, i32 -> vector<2x256xf32>
    %c34_i32_100 = arith.constant 34 : i32
    %252 = tpu.dynamic_rotate %27 by %c34_i32_100 dim 1 : vector<2x256xf32>, i32 -> vector<2x256xf32>
    %c0_101 = arith.constant 0 : index
    %c8 = arith.constant 8 : index
    %253 = memref.load %arg5[%c0_101, %c8] : memref<2x49xf32, #tpu.memory_space<smem>>
    %254 = vector.broadcast %253 : f32 to vector<2x256xf32>
    %255 = arith.mulf %251, %254 : vector<2x256xf32>
    %c1_102 = arith.constant 1 : index
    %c8_103 = arith.constant 8 : index
    %256 = memref.load %arg5[%c1_102, %c8_103] : memref<2x49xf32, #tpu.memory_space<smem>>
    %257 = vector.broadcast %256 : f32 to vector<2x256xf32>
    %258 = arith.mulf %252, %257 : vector<2x256xf32>
    %259 = arith.addf %255, %258 : vector<2x256xf32>
    %cst_104 = arith.constant 0.000000e+00 : f32
    %260 = vector.shape_cast %250 : vector<1x256xi1> to vector<1x256xi1>
    %261 = vector.broadcast %260 : vector<1x256xi1> to vector<2x256xi1>
    %262 = vector.broadcast %cst_104 : f32 to vector<2x256xf32>
    %263 = arith.select %261, %259, %262 : vector<2x256xi1>, vector<2x256xf32>
    %264 = arith.addf %240, %263 : vector<2x256xf32>
    %c-1_i32_105 = arith.constant -1 : i32
    %265 = vector.broadcast %c-1_i32_105 : i32 to vector<1x256xi32>
    %266 = arith.addi %29, %265 : vector<1x256xi32>
    %c0_i32_106 = arith.constant 0 : i32
    %267 = vector.broadcast %c0_i32_106 : i32 to vector<1x256xi32>
    %268 = arith.cmpi sge, %266, %267 : vector<1x256xi32>
    %c-1_i32_107 = arith.constant -1 : i32
    %269 = vector.broadcast %c-1_i32_107 : i32 to vector<1x256xi32>
    %270 = arith.addi %29, %269 : vector<1x256xi32>
    %c16_i32_108 = arith.constant 16 : i32
    %271 = vector.broadcast %c16_i32_108 : i32 to vector<1x256xi32>
    %272 = arith.cmpi slt, %270, %271 : vector<1x256xi32>
    %273 = arith.andi %268, %272 : vector<1x256xi1>
    %274 = arith.andi %216, %273 : vector<1x256xi1>
    %c33_i32 = arith.constant 33 : i32
    %275 = tpu.dynamic_rotate %26 by %c33_i32 dim 1 : vector<2x256xf32>, i32 -> vector<2x256xf32>
    %c33_i32_109 = arith.constant 33 : i32
    %276 = tpu.dynamic_rotate %27 by %c33_i32_109 dim 1 : vector<2x256xf32>, i32 -> vector<2x256xf32>
    %c0_110 = arith.constant 0 : index
    %c9 = arith.constant 9 : index
    %277 = memref.load %arg5[%c0_110, %c9] : memref<2x49xf32, #tpu.memory_space<smem>>
    %278 = vector.broadcast %277 : f32 to vector<2x256xf32>
    %279 = arith.mulf %275, %278 : vector<2x256xf32>
    %c1_111 = arith.constant 1 : index
    %c9_112 = arith.constant 9 : index
    %280 = memref.load %arg5[%c1_111, %c9_112] : memref<2x49xf32, #tpu.memory_space<smem>>
    %281 = vector.broadcast %280 : f32 to vector<2x256xf32>
    %282 = arith.mulf %276, %281 : vector<2x256xf32>
    %283 = arith.addf %279, %282 : vector<2x256xf32>
    %cst_113 = arith.constant 0.000000e+00 : f32
    %284 = vector.shape_cast %274 : vector<1x256xi1> to vector<1x256xi1>
    %285 = vector.broadcast %284 : vector<1x256xi1> to vector<2x256xi1>
    %286 = vector.broadcast %cst_113 : f32 to vector<2x256xf32>
    %287 = arith.select %285, %283, %286 : vector<2x256xi1>, vector<2x256xf32>
    %288 = arith.addf %264, %287 : vector<2x256xf32>
    %c0_i32_114 = arith.constant 0 : i32
    %289 = vector.broadcast %c0_i32_114 : i32 to vector<1x256xi32>
    %290 = arith.addi %29, %289 : vector<1x256xi32>
    %c0_i32_115 = arith.constant 0 : i32
    %291 = vector.broadcast %c0_i32_115 : i32 to vector<1x256xi32>
    %292 = arith.cmpi sge, %290, %291 : vector<1x256xi32>
    %c0_i32_116 = arith.constant 0 : i32
    %293 = vector.broadcast %c0_i32_116 : i32 to vector<1x256xi32>
    %294 = arith.addi %29, %293 : vector<1x256xi32>
    %c16_i32_117 = arith.constant 16 : i32
    %295 = vector.broadcast %c16_i32_117 : i32 to vector<1x256xi32>
    %296 = arith.cmpi slt, %294, %295 : vector<1x256xi32>
    %297 = arith.andi %292, %296 : vector<1x256xi1>
    %298 = arith.andi %216, %297 : vector<1x256xi1>
    %c32_i32 = arith.constant 32 : i32
    %299 = tpu.dynamic_rotate %26 by %c32_i32 dim 1 : vector<2x256xf32>, i32 -> vector<2x256xf32>
    %c32_i32_118 = arith.constant 32 : i32
    %300 = tpu.dynamic_rotate %27 by %c32_i32_118 dim 1 : vector<2x256xf32>, i32 -> vector<2x256xf32>
    %c0_119 = arith.constant 0 : index
    %c10 = arith.constant 10 : index
    %301 = memref.load %arg5[%c0_119, %c10] : memref<2x49xf32, #tpu.memory_space<smem>>
    %302 = vector.broadcast %301 : f32 to vector<2x256xf32>
    %303 = arith.mulf %299, %302 : vector<2x256xf32>
    %c1_120 = arith.constant 1 : index
    %c10_121 = arith.constant 10 : index
    %304 = memref.load %arg5[%c1_120, %c10_121] : memref<2x49xf32, #tpu.memory_space<smem>>
    %305 = vector.broadcast %304 : f32 to vector<2x256xf32>
    %306 = arith.mulf %300, %305 : vector<2x256xf32>
    %307 = arith.addf %303, %306 : vector<2x256xf32>
    %cst_122 = arith.constant 0.000000e+00 : f32
    %308 = vector.shape_cast %298 : vector<1x256xi1> to vector<1x256xi1>
    %309 = vector.broadcast %308 : vector<1x256xi1> to vector<2x256xi1>
    %310 = vector.broadcast %cst_122 : f32 to vector<2x256xf32>
    %311 = arith.select %309, %307, %310 : vector<2x256xi1>, vector<2x256xf32>
    %312 = arith.addf %288, %311 : vector<2x256xf32>
    %c1_i32_123 = arith.constant 1 : i32
    %313 = vector.broadcast %c1_i32_123 : i32 to vector<1x256xi32>
    %314 = arith.addi %29, %313 : vector<1x256xi32>
    %c0_i32_124 = arith.constant 0 : i32
    %315 = vector.broadcast %c0_i32_124 : i32 to vector<1x256xi32>
    %316 = arith.cmpi sge, %314, %315 : vector<1x256xi32>
    %c1_i32_125 = arith.constant 1 : i32
    %317 = vector.broadcast %c1_i32_125 : i32 to vector<1x256xi32>
    %318 = arith.addi %29, %317 : vector<1x256xi32>
    %c16_i32_126 = arith.constant 16 : i32
    %319 = vector.broadcast %c16_i32_126 : i32 to vector<1x256xi32>
    %320 = arith.cmpi slt, %318, %319 : vector<1x256xi32>
    %321 = arith.andi %316, %320 : vector<1x256xi1>
    %322 = arith.andi %216, %321 : vector<1x256xi1>
    %c31_i32 = arith.constant 31 : i32
    %323 = tpu.dynamic_rotate %26 by %c31_i32 dim 1 : vector<2x256xf32>, i32 -> vector<2x256xf32>
    %c31_i32_127 = arith.constant 31 : i32
    %324 = tpu.dynamic_rotate %27 by %c31_i32_127 dim 1 : vector<2x256xf32>, i32 -> vector<2x256xf32>
    %c0_128 = arith.constant 0 : index
    %c11 = arith.constant 11 : index
    %325 = memref.load %arg5[%c0_128, %c11] : memref<2x49xf32, #tpu.memory_space<smem>>
    %326 = vector.broadcast %325 : f32 to vector<2x256xf32>
    %327 = arith.mulf %323, %326 : vector<2x256xf32>
    %c1_129 = arith.constant 1 : index
    %c11_130 = arith.constant 11 : index
    %328 = memref.load %arg5[%c1_129, %c11_130] : memref<2x49xf32, #tpu.memory_space<smem>>
    %329 = vector.broadcast %328 : f32 to vector<2x256xf32>
    %330 = arith.mulf %324, %329 : vector<2x256xf32>
    %331 = arith.addf %327, %330 : vector<2x256xf32>
    %cst_131 = arith.constant 0.000000e+00 : f32
    %332 = vector.shape_cast %322 : vector<1x256xi1> to vector<1x256xi1>
    %333 = vector.broadcast %332 : vector<1x256xi1> to vector<2x256xi1>
    %334 = vector.broadcast %cst_131 : f32 to vector<2x256xf32>
    %335 = arith.select %333, %331, %334 : vector<2x256xi1>, vector<2x256xf32>
    %336 = arith.addf %312, %335 : vector<2x256xf32>
    %c2_i32_132 = arith.constant 2 : i32
    %337 = vector.broadcast %c2_i32_132 : i32 to vector<1x256xi32>
    %338 = arith.addi %29, %337 : vector<1x256xi32>
    %c0_i32_133 = arith.constant 0 : i32
    %339 = vector.broadcast %c0_i32_133 : i32 to vector<1x256xi32>
    %340 = arith.cmpi sge, %338, %339 : vector<1x256xi32>
    %c2_i32_134 = arith.constant 2 : i32
    %341 = vector.broadcast %c2_i32_134 : i32 to vector<1x256xi32>
    %342 = arith.addi %29, %341 : vector<1x256xi32>
    %c16_i32_135 = arith.constant 16 : i32
    %343 = vector.broadcast %c16_i32_135 : i32 to vector<1x256xi32>
    %344 = arith.cmpi slt, %342, %343 : vector<1x256xi32>
    %345 = arith.andi %340, %344 : vector<1x256xi1>
    %346 = arith.andi %216, %345 : vector<1x256xi1>
    %c30_i32 = arith.constant 30 : i32
    %347 = tpu.dynamic_rotate %26 by %c30_i32 dim 1 : vector<2x256xf32>, i32 -> vector<2x256xf32>
    %c30_i32_136 = arith.constant 30 : i32
    %348 = tpu.dynamic_rotate %27 by %c30_i32_136 dim 1 : vector<2x256xf32>, i32 -> vector<2x256xf32>
    %c0_137 = arith.constant 0 : index
    %c12 = arith.constant 12 : index
    %349 = memref.load %arg5[%c0_137, %c12] : memref<2x49xf32, #tpu.memory_space<smem>>
    %350 = vector.broadcast %349 : f32 to vector<2x256xf32>
    %351 = arith.mulf %347, %350 : vector<2x256xf32>
    %c1_138 = arith.constant 1 : index
    %c12_139 = arith.constant 12 : index
    %352 = memref.load %arg5[%c1_138, %c12_139] : memref<2x49xf32, #tpu.memory_space<smem>>
    %353 = vector.broadcast %352 : f32 to vector<2x256xf32>
    %354 = arith.mulf %348, %353 : vector<2x256xf32>
    %355 = arith.addf %351, %354 : vector<2x256xf32>
    %cst_140 = arith.constant 0.000000e+00 : f32
    %356 = vector.shape_cast %346 : vector<1x256xi1> to vector<1x256xi1>
    %357 = vector.broadcast %356 : vector<1x256xi1> to vector<2x256xi1>
    %358 = vector.broadcast %cst_140 : f32 to vector<2x256xf32>
    %359 = arith.select %357, %355, %358 : vector<2x256xi1>, vector<2x256xf32>
    %360 = arith.addf %336, %359 : vector<2x256xf32>
    %c3_i32_141 = arith.constant 3 : i32
    %361 = vector.broadcast %c3_i32_141 : i32 to vector<1x256xi32>
    %362 = arith.addi %29, %361 : vector<1x256xi32>
    %c0_i32_142 = arith.constant 0 : i32
    %363 = vector.broadcast %c0_i32_142 : i32 to vector<1x256xi32>
    %364 = arith.cmpi sge, %362, %363 : vector<1x256xi32>
    %c3_i32_143 = arith.constant 3 : i32
    %365 = vector.broadcast %c3_i32_143 : i32 to vector<1x256xi32>
    %366 = arith.addi %29, %365 : vector<1x256xi32>
    %c16_i32_144 = arith.constant 16 : i32
    %367 = vector.broadcast %c16_i32_144 : i32 to vector<1x256xi32>
    %368 = arith.cmpi slt, %366, %367 : vector<1x256xi32>
    %369 = arith.andi %364, %368 : vector<1x256xi1>
    %370 = arith.andi %216, %369 : vector<1x256xi1>
    %c29_i32 = arith.constant 29 : i32
    %371 = tpu.dynamic_rotate %26 by %c29_i32 dim 1 : vector<2x256xf32>, i32 -> vector<2x256xf32>
    %c29_i32_145 = arith.constant 29 : i32
    %372 = tpu.dynamic_rotate %27 by %c29_i32_145 dim 1 : vector<2x256xf32>, i32 -> vector<2x256xf32>
    %c0_146 = arith.constant 0 : index
    %c13 = arith.constant 13 : index
    %373 = memref.load %arg5[%c0_146, %c13] : memref<2x49xf32, #tpu.memory_space<smem>>
    %374 = vector.broadcast %373 : f32 to vector<2x256xf32>
    %375 = arith.mulf %371, %374 : vector<2x256xf32>
    %c1_147 = arith.constant 1 : index
    %c13_148 = arith.constant 13 : index
    %376 = memref.load %arg5[%c1_147, %c13_148] : memref<2x49xf32, #tpu.memory_space<smem>>
    %377 = vector.broadcast %376 : f32 to vector<2x256xf32>
    %378 = arith.mulf %372, %377 : vector<2x256xf32>
    %379 = arith.addf %375, %378 : vector<2x256xf32>
    %cst_149 = arith.constant 0.000000e+00 : f32
    %380 = vector.shape_cast %370 : vector<1x256xi1> to vector<1x256xi1>
    %381 = vector.broadcast %380 : vector<1x256xi1> to vector<2x256xi1>
    %382 = vector.broadcast %cst_149 : f32 to vector<2x256xf32>
    %383 = arith.select %381, %379, %382 : vector<2x256xi1>, vector<2x256xf32>
    %384 = arith.addf %360, %383 : vector<2x256xf32>
    %c-1_i32_150 = arith.constant -1 : i32
    %385 = vector.broadcast %c-1_i32_150 : i32 to vector<1x256xi32>
    %386 = arith.addi %28, %385 : vector<1x256xi32>
    %c0_i32_151 = arith.constant 0 : i32
    %387 = vector.broadcast %c0_i32_151 : i32 to vector<1x256xi32>
    %388 = arith.cmpi sge, %386, %387 : vector<1x256xi32>
    %c-1_i32_152 = arith.constant -1 : i32
    %389 = vector.broadcast %c-1_i32_152 : i32 to vector<1x256xi32>
    %390 = arith.addi %28, %389 : vector<1x256xi32>
    %c16_i32_153 = arith.constant 16 : i32
    %391 = vector.broadcast %c16_i32_153 : i32 to vector<1x256xi32>
    %392 = arith.cmpi slt, %390, %391 : vector<1x256xi32>
    %393 = arith.andi %388, %392 : vector<1x256xi1>
    %c-3_i32_154 = arith.constant -3 : i32
    %394 = vector.broadcast %c-3_i32_154 : i32 to vector<1x256xi32>
    %395 = arith.addi %29, %394 : vector<1x256xi32>
    %c0_i32_155 = arith.constant 0 : i32
    %396 = vector.broadcast %c0_i32_155 : i32 to vector<1x256xi32>
    %397 = arith.cmpi sge, %395, %396 : vector<1x256xi32>
    %c-3_i32_156 = arith.constant -3 : i32
    %398 = vector.broadcast %c-3_i32_156 : i32 to vector<1x256xi32>
    %399 = arith.addi %29, %398 : vector<1x256xi32>
    %c16_i32_157 = arith.constant 16 : i32
    %400 = vector.broadcast %c16_i32_157 : i32 to vector<1x256xi32>
    %401 = arith.cmpi slt, %399, %400 : vector<1x256xi32>
    %402 = arith.andi %397, %401 : vector<1x256xi1>
    %403 = arith.andi %393, %402 : vector<1x256xi1>
    %c19_i32 = arith.constant 19 : i32
    %404 = tpu.dynamic_rotate %26 by %c19_i32 dim 1 : vector<2x256xf32>, i32 -> vector<2x256xf32>
    %c19_i32_158 = arith.constant 19 : i32
    %405 = tpu.dynamic_rotate %27 by %c19_i32_158 dim 1 : vector<2x256xf32>, i32 -> vector<2x256xf32>
    %c0_159 = arith.constant 0 : index
    %c14 = arith.constant 14 : index
    %406 = memref.load %arg5[%c0_159, %c14] : memref<2x49xf32, #tpu.memory_space<smem>>
    %407 = vector.broadcast %406 : f32 to vector<2x256xf32>
    %408 = arith.mulf %404, %407 : vector<2x256xf32>
    %c1_160 = arith.constant 1 : index
    %c14_161 = arith.constant 14 : index
    %409 = memref.load %arg5[%c1_160, %c14_161] : memref<2x49xf32, #tpu.memory_space<smem>>
    %410 = vector.broadcast %409 : f32 to vector<2x256xf32>
    %411 = arith.mulf %405, %410 : vector<2x256xf32>
    %412 = arith.addf %408, %411 : vector<2x256xf32>
    %cst_162 = arith.constant 0.000000e+00 : f32
    %413 = vector.shape_cast %403 : vector<1x256xi1> to vector<1x256xi1>
    %414 = vector.broadcast %413 : vector<1x256xi1> to vector<2x256xi1>
    %415 = vector.broadcast %cst_162 : f32 to vector<2x256xf32>
    %416 = arith.select %414, %412, %415 : vector<2x256xi1>, vector<2x256xf32>
    %417 = arith.addf %384, %416 : vector<2x256xf32>
    %c-2_i32_163 = arith.constant -2 : i32
    %418 = vector.broadcast %c-2_i32_163 : i32 to vector<1x256xi32>
    %419 = arith.addi %29, %418 : vector<1x256xi32>
    %c0_i32_164 = arith.constant 0 : i32
    %420 = vector.broadcast %c0_i32_164 : i32 to vector<1x256xi32>
    %421 = arith.cmpi sge, %419, %420 : vector<1x256xi32>
    %c-2_i32_165 = arith.constant -2 : i32
    %422 = vector.broadcast %c-2_i32_165 : i32 to vector<1x256xi32>
    %423 = arith.addi %29, %422 : vector<1x256xi32>
    %c16_i32_166 = arith.constant 16 : i32
    %424 = vector.broadcast %c16_i32_166 : i32 to vector<1x256xi32>
    %425 = arith.cmpi slt, %423, %424 : vector<1x256xi32>
    %426 = arith.andi %421, %425 : vector<1x256xi1>
    %427 = arith.andi %393, %426 : vector<1x256xi1>
    %c18_i32 = arith.constant 18 : i32
    %428 = tpu.dynamic_rotate %26 by %c18_i32 dim 1 : vector<2x256xf32>, i32 -> vector<2x256xf32>
    %c18_i32_167 = arith.constant 18 : i32
    %429 = tpu.dynamic_rotate %27 by %c18_i32_167 dim 1 : vector<2x256xf32>, i32 -> vector<2x256xf32>
    %c0_168 = arith.constant 0 : index
    %c15 = arith.constant 15 : index
    %430 = memref.load %arg5[%c0_168, %c15] : memref<2x49xf32, #tpu.memory_space<smem>>
    %431 = vector.broadcast %430 : f32 to vector<2x256xf32>
    %432 = arith.mulf %428, %431 : vector<2x256xf32>
    %c1_169 = arith.constant 1 : index
    %c15_170 = arith.constant 15 : index
    %433 = memref.load %arg5[%c1_169, %c15_170] : memref<2x49xf32, #tpu.memory_space<smem>>
    %434 = vector.broadcast %433 : f32 to vector<2x256xf32>
    %435 = arith.mulf %429, %434 : vector<2x256xf32>
    %436 = arith.addf %432, %435 : vector<2x256xf32>
    %cst_171 = arith.constant 0.000000e+00 : f32
    %437 = vector.shape_cast %427 : vector<1x256xi1> to vector<1x256xi1>
    %438 = vector.broadcast %437 : vector<1x256xi1> to vector<2x256xi1>
    %439 = vector.broadcast %cst_171 : f32 to vector<2x256xf32>
    %440 = arith.select %438, %436, %439 : vector<2x256xi1>, vector<2x256xf32>
    %441 = arith.addf %417, %440 : vector<2x256xf32>
    %c-1_i32_172 = arith.constant -1 : i32
    %442 = vector.broadcast %c-1_i32_172 : i32 to vector<1x256xi32>
    %443 = arith.addi %29, %442 : vector<1x256xi32>
    %c0_i32_173 = arith.constant 0 : i32
    %444 = vector.broadcast %c0_i32_173 : i32 to vector<1x256xi32>
    %445 = arith.cmpi sge, %443, %444 : vector<1x256xi32>
    %c-1_i32_174 = arith.constant -1 : i32
    %446 = vector.broadcast %c-1_i32_174 : i32 to vector<1x256xi32>
    %447 = arith.addi %29, %446 : vector<1x256xi32>
    %c16_i32_175 = arith.constant 16 : i32
    %448 = vector.broadcast %c16_i32_175 : i32 to vector<1x256xi32>
    %449 = arith.cmpi slt, %447, %448 : vector<1x256xi32>
    %450 = arith.andi %445, %449 : vector<1x256xi1>
    %451 = arith.andi %393, %450 : vector<1x256xi1>
    %c17_i32 = arith.constant 17 : i32
    %452 = tpu.dynamic_rotate %26 by %c17_i32 dim 1 : vector<2x256xf32>, i32 -> vector<2x256xf32>
    %c17_i32_176 = arith.constant 17 : i32
    %453 = tpu.dynamic_rotate %27 by %c17_i32_176 dim 1 : vector<2x256xf32>, i32 -> vector<2x256xf32>
    %c0_177 = arith.constant 0 : index
    %c16 = arith.constant 16 : index
    %454 = memref.load %arg5[%c0_177, %c16] : memref<2x49xf32, #tpu.memory_space<smem>>
    %455 = vector.broadcast %454 : f32 to vector<2x256xf32>
    %456 = arith.mulf %452, %455 : vector<2x256xf32>
    %c1_178 = arith.constant 1 : index
    %c16_179 = arith.constant 16 : index
    %457 = memref.load %arg5[%c1_178, %c16_179] : memref<2x49xf32, #tpu.memory_space<smem>>
    %458 = vector.broadcast %457 : f32 to vector<2x256xf32>
    %459 = arith.mulf %453, %458 : vector<2x256xf32>
    %460 = arith.addf %456, %459 : vector<2x256xf32>
    %cst_180 = arith.constant 0.000000e+00 : f32
    %461 = vector.shape_cast %451 : vector<1x256xi1> to vector<1x256xi1>
    %462 = vector.broadcast %461 : vector<1x256xi1> to vector<2x256xi1>
    %463 = vector.broadcast %cst_180 : f32 to vector<2x256xf32>
    %464 = arith.select %462, %460, %463 : vector<2x256xi1>, vector<2x256xf32>
    %465 = arith.addf %441, %464 : vector<2x256xf32>
    %c0_i32_181 = arith.constant 0 : i32
    %466 = vector.broadcast %c0_i32_181 : i32 to vector<1x256xi32>
    %467 = arith.addi %29, %466 : vector<1x256xi32>
    %c0_i32_182 = arith.constant 0 : i32
    %468 = vector.broadcast %c0_i32_182 : i32 to vector<1x256xi32>
    %469 = arith.cmpi sge, %467, %468 : vector<1x256xi32>
    %c0_i32_183 = arith.constant 0 : i32
    %470 = vector.broadcast %c0_i32_183 : i32 to vector<1x256xi32>
    %471 = arith.addi %29, %470 : vector<1x256xi32>
    %c16_i32_184 = arith.constant 16 : i32
    %472 = vector.broadcast %c16_i32_184 : i32 to vector<1x256xi32>
    %473 = arith.cmpi slt, %471, %472 : vector<1x256xi32>
    %474 = arith.andi %469, %473 : vector<1x256xi1>
    %475 = arith.andi %393, %474 : vector<1x256xi1>
    %c16_i32_185 = arith.constant 16 : i32
    %476 = tpu.dynamic_rotate %26 by %c16_i32_185 dim 1 : vector<2x256xf32>, i32 -> vector<2x256xf32>
    %c16_i32_186 = arith.constant 16 : i32
    %477 = tpu.dynamic_rotate %27 by %c16_i32_186 dim 1 : vector<2x256xf32>, i32 -> vector<2x256xf32>
    %c0_187 = arith.constant 0 : index
    %c17 = arith.constant 17 : index
    %478 = memref.load %arg5[%c0_187, %c17] : memref<2x49xf32, #tpu.memory_space<smem>>
    %479 = vector.broadcast %478 : f32 to vector<2x256xf32>
    %480 = arith.mulf %476, %479 : vector<2x256xf32>
    %c1_188 = arith.constant 1 : index
    %c17_189 = arith.constant 17 : index
    %481 = memref.load %arg5[%c1_188, %c17_189] : memref<2x49xf32, #tpu.memory_space<smem>>
    %482 = vector.broadcast %481 : f32 to vector<2x256xf32>
    %483 = arith.mulf %477, %482 : vector<2x256xf32>
    %484 = arith.addf %480, %483 : vector<2x256xf32>
    %cst_190 = arith.constant 0.000000e+00 : f32
    %485 = vector.shape_cast %475 : vector<1x256xi1> to vector<1x256xi1>
    %486 = vector.broadcast %485 : vector<1x256xi1> to vector<2x256xi1>
    %487 = vector.broadcast %cst_190 : f32 to vector<2x256xf32>
    %488 = arith.select %486, %484, %487 : vector<2x256xi1>, vector<2x256xf32>
    %489 = arith.addf %465, %488 : vector<2x256xf32>
    %c1_i32_191 = arith.constant 1 : i32
    %490 = vector.broadcast %c1_i32_191 : i32 to vector<1x256xi32>
    %491 = arith.addi %29, %490 : vector<1x256xi32>
    %c0_i32_192 = arith.constant 0 : i32
    %492 = vector.broadcast %c0_i32_192 : i32 to vector<1x256xi32>
    %493 = arith.cmpi sge, %491, %492 : vector<1x256xi32>
    %c1_i32_193 = arith.constant 1 : i32
    %494 = vector.broadcast %c1_i32_193 : i32 to vector<1x256xi32>
    %495 = arith.addi %29, %494 : vector<1x256xi32>
    %c16_i32_194 = arith.constant 16 : i32
    %496 = vector.broadcast %c16_i32_194 : i32 to vector<1x256xi32>
    %497 = arith.cmpi slt, %495, %496 : vector<1x256xi32>
    %498 = arith.andi %493, %497 : vector<1x256xi1>
    %499 = arith.andi %393, %498 : vector<1x256xi1>
    %c15_i32 = arith.constant 15 : i32
    %500 = tpu.dynamic_rotate %26 by %c15_i32 dim 1 : vector<2x256xf32>, i32 -> vector<2x256xf32>
    %c15_i32_195 = arith.constant 15 : i32
    %501 = tpu.dynamic_rotate %27 by %c15_i32_195 dim 1 : vector<2x256xf32>, i32 -> vector<2x256xf32>
    %c0_196 = arith.constant 0 : index
    %c18 = arith.constant 18 : index
    %502 = memref.load %arg5[%c0_196, %c18] : memref<2x49xf32, #tpu.memory_space<smem>>
    %503 = vector.broadcast %502 : f32 to vector<2x256xf32>
    %504 = arith.mulf %500, %503 : vector<2x256xf32>
    %c1_197 = arith.constant 1 : index
    %c18_198 = arith.constant 18 : index
    %505 = memref.load %arg5[%c1_197, %c18_198] : memref<2x49xf32, #tpu.memory_space<smem>>
    %506 = vector.broadcast %505 : f32 to vector<2x256xf32>
    %507 = arith.mulf %501, %506 : vector<2x256xf32>
    %508 = arith.addf %504, %507 : vector<2x256xf32>
    %cst_199 = arith.constant 0.000000e+00 : f32
    %509 = vector.shape_cast %499 : vector<1x256xi1> to vector<1x256xi1>
    %510 = vector.broadcast %509 : vector<1x256xi1> to vector<2x256xi1>
    %511 = vector.broadcast %cst_199 : f32 to vector<2x256xf32>
    %512 = arith.select %510, %508, %511 : vector<2x256xi1>, vector<2x256xf32>
    %513 = arith.addf %489, %512 : vector<2x256xf32>
    %c2_i32_200 = arith.constant 2 : i32
    %514 = vector.broadcast %c2_i32_200 : i32 to vector<1x256xi32>
    %515 = arith.addi %29, %514 : vector<1x256xi32>
    %c0_i32_201 = arith.constant 0 : i32
    %516 = vector.broadcast %c0_i32_201 : i32 to vector<1x256xi32>
    %517 = arith.cmpi sge, %515, %516 : vector<1x256xi32>
    %c2_i32_202 = arith.constant 2 : i32
    %518 = vector.broadcast %c2_i32_202 : i32 to vector<1x256xi32>
    %519 = arith.addi %29, %518 : vector<1x256xi32>
    %c16_i32_203 = arith.constant 16 : i32
    %520 = vector.broadcast %c16_i32_203 : i32 to vector<1x256xi32>
    %521 = arith.cmpi slt, %519, %520 : vector<1x256xi32>
    %522 = arith.andi %517, %521 : vector<1x256xi1>
    %523 = arith.andi %393, %522 : vector<1x256xi1>
    %c14_i32 = arith.constant 14 : i32
    %524 = tpu.dynamic_rotate %26 by %c14_i32 dim 1 : vector<2x256xf32>, i32 -> vector<2x256xf32>
    %c14_i32_204 = arith.constant 14 : i32
    %525 = tpu.dynamic_rotate %27 by %c14_i32_204 dim 1 : vector<2x256xf32>, i32 -> vector<2x256xf32>
    %c0_205 = arith.constant 0 : index
    %c19 = arith.constant 19 : index
    %526 = memref.load %arg5[%c0_205, %c19] : memref<2x49xf32, #tpu.memory_space<smem>>
    %527 = vector.broadcast %526 : f32 to vector<2x256xf32>
    %528 = arith.mulf %524, %527 : vector<2x256xf32>
    %c1_206 = arith.constant 1 : index
    %c19_207 = arith.constant 19 : index
    %529 = memref.load %arg5[%c1_206, %c19_207] : memref<2x49xf32, #tpu.memory_space<smem>>
    %530 = vector.broadcast %529 : f32 to vector<2x256xf32>
    %531 = arith.mulf %525, %530 : vector<2x256xf32>
    %532 = arith.addf %528, %531 : vector<2x256xf32>
    %cst_208 = arith.constant 0.000000e+00 : f32
    %533 = vector.shape_cast %523 : vector<1x256xi1> to vector<1x256xi1>
    %534 = vector.broadcast %533 : vector<1x256xi1> to vector<2x256xi1>
    %535 = vector.broadcast %cst_208 : f32 to vector<2x256xf32>
    %536 = arith.select %534, %532, %535 : vector<2x256xi1>, vector<2x256xf32>
    %537 = arith.addf %513, %536 : vector<2x256xf32>
    %c3_i32_209 = arith.constant 3 : i32
    %538 = vector.broadcast %c3_i32_209 : i32 to vector<1x256xi32>
    %539 = arith.addi %29, %538 : vector<1x256xi32>
    %c0_i32_210 = arith.constant 0 : i32
    %540 = vector.broadcast %c0_i32_210 : i32 to vector<1x256xi32>
    %541 = arith.cmpi sge, %539, %540 : vector<1x256xi32>
    %c3_i32_211 = arith.constant 3 : i32
    %542 = vector.broadcast %c3_i32_211 : i32 to vector<1x256xi32>
    %543 = arith.addi %29, %542 : vector<1x256xi32>
    %c16_i32_212 = arith.constant 16 : i32
    %544 = vector.broadcast %c16_i32_212 : i32 to vector<1x256xi32>
    %545 = arith.cmpi slt, %543, %544 : vector<1x256xi32>
    %546 = arith.andi %541, %545 : vector<1x256xi1>
    %547 = arith.andi %393, %546 : vector<1x256xi1>
    %c13_i32 = arith.constant 13 : i32
    %548 = tpu.dynamic_rotate %26 by %c13_i32 dim 1 : vector<2x256xf32>, i32 -> vector<2x256xf32>
    %c13_i32_213 = arith.constant 13 : i32
    %549 = tpu.dynamic_rotate %27 by %c13_i32_213 dim 1 : vector<2x256xf32>, i32 -> vector<2x256xf32>
    %c0_214 = arith.constant 0 : index
    %c20 = arith.constant 20 : index
    %550 = memref.load %arg5[%c0_214, %c20] : memref<2x49xf32, #tpu.memory_space<smem>>
    %551 = vector.broadcast %550 : f32 to vector<2x256xf32>
    %552 = arith.mulf %548, %551 : vector<2x256xf32>
    %c1_215 = arith.constant 1 : index
    %c20_216 = arith.constant 20 : index
    %553 = memref.load %arg5[%c1_215, %c20_216] : memref<2x49xf32, #tpu.memory_space<smem>>
    %554 = vector.broadcast %553 : f32 to vector<2x256xf32>
    %555 = arith.mulf %549, %554 : vector<2x256xf32>
    %556 = arith.addf %552, %555 : vector<2x256xf32>
    %cst_217 = arith.constant 0.000000e+00 : f32
    %557 = vector.shape_cast %547 : vector<1x256xi1> to vector<1x256xi1>
    %558 = vector.broadcast %557 : vector<1x256xi1> to vector<2x256xi1>
    %559 = vector.broadcast %cst_217 : f32 to vector<2x256xf32>
    %560 = arith.select %558, %556, %559 : vector<2x256xi1>, vector<2x256xf32>
    %561 = arith.addf %537, %560 : vector<2x256xf32>
    %c0_i32_218 = arith.constant 0 : i32
    %562 = vector.broadcast %c0_i32_218 : i32 to vector<1x256xi32>
    %563 = arith.addi %28, %562 : vector<1x256xi32>
    %c0_i32_219 = arith.constant 0 : i32
    %564 = vector.broadcast %c0_i32_219 : i32 to vector<1x256xi32>
    %565 = arith.cmpi sge, %563, %564 : vector<1x256xi32>
    %c0_i32_220 = arith.constant 0 : i32
    %566 = vector.broadcast %c0_i32_220 : i32 to vector<1x256xi32>
    %567 = arith.addi %28, %566 : vector<1x256xi32>
    %c16_i32_221 = arith.constant 16 : i32
    %568 = vector.broadcast %c16_i32_221 : i32 to vector<1x256xi32>
    %569 = arith.cmpi slt, %567, %568 : vector<1x256xi32>
    %570 = arith.andi %565, %569 : vector<1x256xi1>
    %c-3_i32_222 = arith.constant -3 : i32
    %571 = vector.broadcast %c-3_i32_222 : i32 to vector<1x256xi32>
    %572 = arith.addi %29, %571 : vector<1x256xi32>
    %c0_i32_223 = arith.constant 0 : i32
    %573 = vector.broadcast %c0_i32_223 : i32 to vector<1x256xi32>
    %574 = arith.cmpi sge, %572, %573 : vector<1x256xi32>
    %c-3_i32_224 = arith.constant -3 : i32
    %575 = vector.broadcast %c-3_i32_224 : i32 to vector<1x256xi32>
    %576 = arith.addi %29, %575 : vector<1x256xi32>
    %c16_i32_225 = arith.constant 16 : i32
    %577 = vector.broadcast %c16_i32_225 : i32 to vector<1x256xi32>
    %578 = arith.cmpi slt, %576, %577 : vector<1x256xi32>
    %579 = arith.andi %574, %578 : vector<1x256xi1>
    %580 = arith.andi %570, %579 : vector<1x256xi1>
    %c3_i32_226 = arith.constant 3 : i32
    %581 = tpu.dynamic_rotate %26 by %c3_i32_226 dim 1 : vector<2x256xf32>, i32 -> vector<2x256xf32>
    %c3_i32_227 = arith.constant 3 : i32
    %582 = tpu.dynamic_rotate %27 by %c3_i32_227 dim 1 : vector<2x256xf32>, i32 -> vector<2x256xf32>
    %c0_228 = arith.constant 0 : index
    %c21 = arith.constant 21 : index
    %583 = memref.load %arg5[%c0_228, %c21] : memref<2x49xf32, #tpu.memory_space<smem>>
    %584 = vector.broadcast %583 : f32 to vector<2x256xf32>
    %585 = arith.mulf %581, %584 : vector<2x256xf32>
    %c1_229 = arith.constant 1 : index
    %c21_230 = arith.constant 21 : index
    %586 = memref.load %arg5[%c1_229, %c21_230] : memref<2x49xf32, #tpu.memory_space<smem>>
    %587 = vector.broadcast %586 : f32 to vector<2x256xf32>
    %588 = arith.mulf %582, %587 : vector<2x256xf32>
    %589 = arith.addf %585, %588 : vector<2x256xf32>
    %cst_231 = arith.constant 0.000000e+00 : f32
    %590 = vector.shape_cast %580 : vector<1x256xi1> to vector<1x256xi1>
    %591 = vector.broadcast %590 : vector<1x256xi1> to vector<2x256xi1>
    %592 = vector.broadcast %cst_231 : f32 to vector<2x256xf32>
    %593 = arith.select %591, %589, %592 : vector<2x256xi1>, vector<2x256xf32>
    %594 = arith.addf %561, %593 : vector<2x256xf32>
    %c-2_i32_232 = arith.constant -2 : i32
    %595 = vector.broadcast %c-2_i32_232 : i32 to vector<1x256xi32>
    %596 = arith.addi %29, %595 : vector<1x256xi32>
    %c0_i32_233 = arith.constant 0 : i32
    %597 = vector.broadcast %c0_i32_233 : i32 to vector<1x256xi32>
    %598 = arith.cmpi sge, %596, %597 : vector<1x256xi32>
    %c-2_i32_234 = arith.constant -2 : i32
    %599 = vector.broadcast %c-2_i32_234 : i32 to vector<1x256xi32>
    %600 = arith.addi %29, %599 : vector<1x256xi32>
    %c16_i32_235 = arith.constant 16 : i32
    %601 = vector.broadcast %c16_i32_235 : i32 to vector<1x256xi32>
    %602 = arith.cmpi slt, %600, %601 : vector<1x256xi32>
    %603 = arith.andi %598, %602 : vector<1x256xi1>
    %604 = arith.andi %570, %603 : vector<1x256xi1>
    %c2_i32_236 = arith.constant 2 : i32
    %605 = tpu.dynamic_rotate %26 by %c2_i32_236 dim 1 : vector<2x256xf32>, i32 -> vector<2x256xf32>
    %c2_i32_237 = arith.constant 2 : i32
    %606 = tpu.dynamic_rotate %27 by %c2_i32_237 dim 1 : vector<2x256xf32>, i32 -> vector<2x256xf32>
    %c0_238 = arith.constant 0 : index
    %c22 = arith.constant 22 : index
    %607 = memref.load %arg5[%c0_238, %c22] : memref<2x49xf32, #tpu.memory_space<smem>>
    %608 = vector.broadcast %607 : f32 to vector<2x256xf32>
    %609 = arith.mulf %605, %608 : vector<2x256xf32>
    %c1_239 = arith.constant 1 : index
    %c22_240 = arith.constant 22 : index
    %610 = memref.load %arg5[%c1_239, %c22_240] : memref<2x49xf32, #tpu.memory_space<smem>>
    %611 = vector.broadcast %610 : f32 to vector<2x256xf32>
    %612 = arith.mulf %606, %611 : vector<2x256xf32>
    %613 = arith.addf %609, %612 : vector<2x256xf32>
    %cst_241 = arith.constant 0.000000e+00 : f32
    %614 = vector.shape_cast %604 : vector<1x256xi1> to vector<1x256xi1>
    %615 = vector.broadcast %614 : vector<1x256xi1> to vector<2x256xi1>
    %616 = vector.broadcast %cst_241 : f32 to vector<2x256xf32>
    %617 = arith.select %615, %613, %616 : vector<2x256xi1>, vector<2x256xf32>
    %618 = arith.addf %594, %617 : vector<2x256xf32>
    %c-1_i32_242 = arith.constant -1 : i32
    %619 = vector.broadcast %c-1_i32_242 : i32 to vector<1x256xi32>
    %620 = arith.addi %29, %619 : vector<1x256xi32>
    %c0_i32_243 = arith.constant 0 : i32
    %621 = vector.broadcast %c0_i32_243 : i32 to vector<1x256xi32>
    %622 = arith.cmpi sge, %620, %621 : vector<1x256xi32>
    %c-1_i32_244 = arith.constant -1 : i32
    %623 = vector.broadcast %c-1_i32_244 : i32 to vector<1x256xi32>
    %624 = arith.addi %29, %623 : vector<1x256xi32>
    %c16_i32_245 = arith.constant 16 : i32
    %625 = vector.broadcast %c16_i32_245 : i32 to vector<1x256xi32>
    %626 = arith.cmpi slt, %624, %625 : vector<1x256xi32>
    %627 = arith.andi %622, %626 : vector<1x256xi1>
    %628 = arith.andi %570, %627 : vector<1x256xi1>
    %c1_i32_246 = arith.constant 1 : i32
    %629 = tpu.dynamic_rotate %26 by %c1_i32_246 dim 1 : vector<2x256xf32>, i32 -> vector<2x256xf32>
    %c1_i32_247 = arith.constant 1 : i32
    %630 = tpu.dynamic_rotate %27 by %c1_i32_247 dim 1 : vector<2x256xf32>, i32 -> vector<2x256xf32>
    %c0_248 = arith.constant 0 : index
    %c23 = arith.constant 23 : index
    %631 = memref.load %arg5[%c0_248, %c23] : memref<2x49xf32, #tpu.memory_space<smem>>
    %632 = vector.broadcast %631 : f32 to vector<2x256xf32>
    %633 = arith.mulf %629, %632 : vector<2x256xf32>
    %c1_249 = arith.constant 1 : index
    %c23_250 = arith.constant 23 : index
    %634 = memref.load %arg5[%c1_249, %c23_250] : memref<2x49xf32, #tpu.memory_space<smem>>
    %635 = vector.broadcast %634 : f32 to vector<2x256xf32>
    %636 = arith.mulf %630, %635 : vector<2x256xf32>
    %637 = arith.addf %633, %636 : vector<2x256xf32>
    %cst_251 = arith.constant 0.000000e+00 : f32
    %638 = vector.shape_cast %628 : vector<1x256xi1> to vector<1x256xi1>
    %639 = vector.broadcast %638 : vector<1x256xi1> to vector<2x256xi1>
    %640 = vector.broadcast %cst_251 : f32 to vector<2x256xf32>
    %641 = arith.select %639, %637, %640 : vector<2x256xi1>, vector<2x256xf32>
    %642 = arith.addf %618, %641 : vector<2x256xf32>
    %c0_i32_252 = arith.constant 0 : i32
    %643 = vector.broadcast %c0_i32_252 : i32 to vector<1x256xi32>
    %644 = arith.addi %29, %643 : vector<1x256xi32>
    %c0_i32_253 = arith.constant 0 : i32
    %645 = vector.broadcast %c0_i32_253 : i32 to vector<1x256xi32>
    %646 = arith.cmpi sge, %644, %645 : vector<1x256xi32>
    %c0_i32_254 = arith.constant 0 : i32
    %647 = vector.broadcast %c0_i32_254 : i32 to vector<1x256xi32>
    %648 = arith.addi %29, %647 : vector<1x256xi32>
    %c16_i32_255 = arith.constant 16 : i32
    %649 = vector.broadcast %c16_i32_255 : i32 to vector<1x256xi32>
    %650 = arith.cmpi slt, %648, %649 : vector<1x256xi32>
    %651 = arith.andi %646, %650 : vector<1x256xi1>
    %652 = arith.andi %570, %651 : vector<1x256xi1>
    %c0_256 = arith.constant 0 : index
    %c24 = arith.constant 24 : index
    %653 = memref.load %arg5[%c0_256, %c24] : memref<2x49xf32, #tpu.memory_space<smem>>
    %654 = vector.broadcast %653 : f32 to vector<2x256xf32>
    %655 = arith.mulf %26, %654 : vector<2x256xf32>
    %c1_257 = arith.constant 1 : index
    %c24_258 = arith.constant 24 : index
    %656 = memref.load %arg5[%c1_257, %c24_258] : memref<2x49xf32, #tpu.memory_space<smem>>
    %657 = vector.broadcast %656 : f32 to vector<2x256xf32>
    %658 = arith.mulf %27, %657 : vector<2x256xf32>
    %659 = arith.addf %655, %658 : vector<2x256xf32>
    %cst_259 = arith.constant 0.000000e+00 : f32
    %660 = vector.shape_cast %652 : vector<1x256xi1> to vector<1x256xi1>
    %661 = vector.broadcast %660 : vector<1x256xi1> to vector<2x256xi1>
    %662 = vector.broadcast %cst_259 : f32 to vector<2x256xf32>
    %663 = arith.select %661, %659, %662 : vector<2x256xi1>, vector<2x256xf32>
    %664 = arith.addf %642, %663 : vector<2x256xf32>
    %c1_i32_260 = arith.constant 1 : i32
    %665 = vector.broadcast %c1_i32_260 : i32 to vector<1x256xi32>
    %666 = arith.addi %29, %665 : vector<1x256xi32>
    %c0_i32_261 = arith.constant 0 : i32
    %667 = vector.broadcast %c0_i32_261 : i32 to vector<1x256xi32>
    %668 = arith.cmpi sge, %666, %667 : vector<1x256xi32>
    %c1_i32_262 = arith.constant 1 : i32
    %669 = vector.broadcast %c1_i32_262 : i32 to vector<1x256xi32>
    %670 = arith.addi %29, %669 : vector<1x256xi32>
    %c16_i32_263 = arith.constant 16 : i32
    %671 = vector.broadcast %c16_i32_263 : i32 to vector<1x256xi32>
    %672 = arith.cmpi slt, %670, %671 : vector<1x256xi32>
    %673 = arith.andi %668, %672 : vector<1x256xi1>
    %674 = arith.andi %570, %673 : vector<1x256xi1>
    %c255_i32 = arith.constant 255 : i32
    %675 = tpu.dynamic_rotate %26 by %c255_i32 dim 1 : vector<2x256xf32>, i32 -> vector<2x256xf32>
    %c255_i32_264 = arith.constant 255 : i32
    %676 = tpu.dynamic_rotate %27 by %c255_i32_264 dim 1 : vector<2x256xf32>, i32 -> vector<2x256xf32>
    %c0_265 = arith.constant 0 : index
    %c25 = arith.constant 25 : index
    %677 = memref.load %arg5[%c0_265, %c25] : memref<2x49xf32, #tpu.memory_space<smem>>
    %678 = vector.broadcast %677 : f32 to vector<2x256xf32>
    %679 = arith.mulf %675, %678 : vector<2x256xf32>
    %c1_266 = arith.constant 1 : index
    %c25_267 = arith.constant 25 : index
    %680 = memref.load %arg5[%c1_266, %c25_267] : memref<2x49xf32, #tpu.memory_space<smem>>
    %681 = vector.broadcast %680 : f32 to vector<2x256xf32>
    %682 = arith.mulf %676, %681 : vector<2x256xf32>
    %683 = arith.addf %679, %682 : vector<2x256xf32>
    %cst_268 = arith.constant 0.000000e+00 : f32
    %684 = vector.shape_cast %674 : vector<1x256xi1> to vector<1x256xi1>
    %685 = vector.broadcast %684 : vector<1x256xi1> to vector<2x256xi1>
    %686 = vector.broadcast %cst_268 : f32 to vector<2x256xf32>
    %687 = arith.select %685, %683, %686 : vector<2x256xi1>, vector<2x256xf32>
    %688 = arith.addf %664, %687 : vector<2x256xf32>
    %c2_i32_269 = arith.constant 2 : i32
    %689 = vector.broadcast %c2_i32_269 : i32 to vector<1x256xi32>
    %690 = arith.addi %29, %689 : vector<1x256xi32>
    %c0_i32_270 = arith.constant 0 : i32
    %691 = vector.broadcast %c0_i32_270 : i32 to vector<1x256xi32>
    %692 = arith.cmpi sge, %690, %691 : vector<1x256xi32>
    %c2_i32_271 = arith.constant 2 : i32
    %693 = vector.broadcast %c2_i32_271 : i32 to vector<1x256xi32>
    %694 = arith.addi %29, %693 : vector<1x256xi32>
    %c16_i32_272 = arith.constant 16 : i32
    %695 = vector.broadcast %c16_i32_272 : i32 to vector<1x256xi32>
    %696 = arith.cmpi slt, %694, %695 : vector<1x256xi32>
    %697 = arith.andi %692, %696 : vector<1x256xi1>
    %698 = arith.andi %570, %697 : vector<1x256xi1>
    %c254_i32 = arith.constant 254 : i32
    %699 = tpu.dynamic_rotate %26 by %c254_i32 dim 1 : vector<2x256xf32>, i32 -> vector<2x256xf32>
    %c254_i32_273 = arith.constant 254 : i32
    %700 = tpu.dynamic_rotate %27 by %c254_i32_273 dim 1 : vector<2x256xf32>, i32 -> vector<2x256xf32>
    %c0_274 = arith.constant 0 : index
    %c26 = arith.constant 26 : index
    %701 = memref.load %arg5[%c0_274, %c26] : memref<2x49xf32, #tpu.memory_space<smem>>
    %702 = vector.broadcast %701 : f32 to vector<2x256xf32>
    %703 = arith.mulf %699, %702 : vector<2x256xf32>
    %c1_275 = arith.constant 1 : index
    %c26_276 = arith.constant 26 : index
    %704 = memref.load %arg5[%c1_275, %c26_276] : memref<2x49xf32, #tpu.memory_space<smem>>
    %705 = vector.broadcast %704 : f32 to vector<2x256xf32>
    %706 = arith.mulf %700, %705 : vector<2x256xf32>
    %707 = arith.addf %703, %706 : vector<2x256xf32>
    %cst_277 = arith.constant 0.000000e+00 : f32
    %708 = vector.shape_cast %698 : vector<1x256xi1> to vector<1x256xi1>
    %709 = vector.broadcast %708 : vector<1x256xi1> to vector<2x256xi1>
    %710 = vector.broadcast %cst_277 : f32 to vector<2x256xf32>
    %711 = arith.select %709, %707, %710 : vector<2x256xi1>, vector<2x256xf32>
    %712 = arith.addf %688, %711 : vector<2x256xf32>
    %c3_i32_278 = arith.constant 3 : i32
    %713 = vector.broadcast %c3_i32_278 : i32 to vector<1x256xi32>
    %714 = arith.addi %29, %713 : vector<1x256xi32>
    %c0_i32_279 = arith.constant 0 : i32
    %715 = vector.broadcast %c0_i32_279 : i32 to vector<1x256xi32>
    %716 = arith.cmpi sge, %714, %715 : vector<1x256xi32>
    %c3_i32_280 = arith.constant 3 : i32
    %717 = vector.broadcast %c3_i32_280 : i32 to vector<1x256xi32>
    %718 = arith.addi %29, %717 : vector<1x256xi32>
    %c16_i32_281 = arith.constant 16 : i32
    %719 = vector.broadcast %c16_i32_281 : i32 to vector<1x256xi32>
    %720 = arith.cmpi slt, %718, %719 : vector<1x256xi32>
    %721 = arith.andi %716, %720 : vector<1x256xi1>
    %722 = arith.andi %570, %721 : vector<1x256xi1>
    %c253_i32 = arith.constant 253 : i32
    %723 = tpu.dynamic_rotate %26 by %c253_i32 dim 1 : vector<2x256xf32>, i32 -> vector<2x256xf32>
    %c253_i32_282 = arith.constant 253 : i32
    %724 = tpu.dynamic_rotate %27 by %c253_i32_282 dim 1 : vector<2x256xf32>, i32 -> vector<2x256xf32>
    %c0_283 = arith.constant 0 : index
    %c27 = arith.constant 27 : index
    %725 = memref.load %arg5[%c0_283, %c27] : memref<2x49xf32, #tpu.memory_space<smem>>
    %726 = vector.broadcast %725 : f32 to vector<2x256xf32>
    %727 = arith.mulf %723, %726 : vector<2x256xf32>
    %c1_284 = arith.constant 1 : index
    %c27_285 = arith.constant 27 : index
    %728 = memref.load %arg5[%c1_284, %c27_285] : memref<2x49xf32, #tpu.memory_space<smem>>
    %729 = vector.broadcast %728 : f32 to vector<2x256xf32>
    %730 = arith.mulf %724, %729 : vector<2x256xf32>
    %731 = arith.addf %727, %730 : vector<2x256xf32>
    %cst_286 = arith.constant 0.000000e+00 : f32
    %732 = vector.shape_cast %722 : vector<1x256xi1> to vector<1x256xi1>
    %733 = vector.broadcast %732 : vector<1x256xi1> to vector<2x256xi1>
    %734 = vector.broadcast %cst_286 : f32 to vector<2x256xf32>
    %735 = arith.select %733, %731, %734 : vector<2x256xi1>, vector<2x256xf32>
    %736 = arith.addf %712, %735 : vector<2x256xf32>
    %c1_i32_287 = arith.constant 1 : i32
    %737 = vector.broadcast %c1_i32_287 : i32 to vector<1x256xi32>
    %738 = arith.addi %28, %737 : vector<1x256xi32>
    %c0_i32_288 = arith.constant 0 : i32
    %739 = vector.broadcast %c0_i32_288 : i32 to vector<1x256xi32>
    %740 = arith.cmpi sge, %738, %739 : vector<1x256xi32>
    %c1_i32_289 = arith.constant 1 : i32
    %741 = vector.broadcast %c1_i32_289 : i32 to vector<1x256xi32>
    %742 = arith.addi %28, %741 : vector<1x256xi32>
    %c16_i32_290 = arith.constant 16 : i32
    %743 = vector.broadcast %c16_i32_290 : i32 to vector<1x256xi32>
    %744 = arith.cmpi slt, %742, %743 : vector<1x256xi32>
    %745 = arith.andi %740, %744 : vector<1x256xi1>
    %c-3_i32_291 = arith.constant -3 : i32
    %746 = vector.broadcast %c-3_i32_291 : i32 to vector<1x256xi32>
    %747 = arith.addi %29, %746 : vector<1x256xi32>
    %c0_i32_292 = arith.constant 0 : i32
    %748 = vector.broadcast %c0_i32_292 : i32 to vector<1x256xi32>
    %749 = arith.cmpi sge, %747, %748 : vector<1x256xi32>
    %c-3_i32_293 = arith.constant -3 : i32
    %750 = vector.broadcast %c-3_i32_293 : i32 to vector<1x256xi32>
    %751 = arith.addi %29, %750 : vector<1x256xi32>
    %c16_i32_294 = arith.constant 16 : i32
    %752 = vector.broadcast %c16_i32_294 : i32 to vector<1x256xi32>
    %753 = arith.cmpi slt, %751, %752 : vector<1x256xi32>
    %754 = arith.andi %749, %753 : vector<1x256xi1>
    %755 = arith.andi %745, %754 : vector<1x256xi1>
    %c243_i32 = arith.constant 243 : i32
    %756 = tpu.dynamic_rotate %26 by %c243_i32 dim 1 : vector<2x256xf32>, i32 -> vector<2x256xf32>
    %c243_i32_295 = arith.constant 243 : i32
    %757 = tpu.dynamic_rotate %27 by %c243_i32_295 dim 1 : vector<2x256xf32>, i32 -> vector<2x256xf32>
    %c0_296 = arith.constant 0 : index
    %c28 = arith.constant 28 : index
    %758 = memref.load %arg5[%c0_296, %c28] : memref<2x49xf32, #tpu.memory_space<smem>>
    %759 = vector.broadcast %758 : f32 to vector<2x256xf32>
    %760 = arith.mulf %756, %759 : vector<2x256xf32>
    %c1_297 = arith.constant 1 : index
    %c28_298 = arith.constant 28 : index
    %761 = memref.load %arg5[%c1_297, %c28_298] : memref<2x49xf32, #tpu.memory_space<smem>>
    %762 = vector.broadcast %761 : f32 to vector<2x256xf32>
    %763 = arith.mulf %757, %762 : vector<2x256xf32>
    %764 = arith.addf %760, %763 : vector<2x256xf32>
    %cst_299 = arith.constant 0.000000e+00 : f32
    %765 = vector.shape_cast %755 : vector<1x256xi1> to vector<1x256xi1>
    %766 = vector.broadcast %765 : vector<1x256xi1> to vector<2x256xi1>
    %767 = vector.broadcast %cst_299 : f32 to vector<2x256xf32>
    %768 = arith.select %766, %764, %767 : vector<2x256xi1>, vector<2x256xf32>
    %769 = arith.addf %736, %768 : vector<2x256xf32>
    %c-2_i32_300 = arith.constant -2 : i32
    %770 = vector.broadcast %c-2_i32_300 : i32 to vector<1x256xi32>
    %771 = arith.addi %29, %770 : vector<1x256xi32>
    %c0_i32_301 = arith.constant 0 : i32
    %772 = vector.broadcast %c0_i32_301 : i32 to vector<1x256xi32>
    %773 = arith.cmpi sge, %771, %772 : vector<1x256xi32>
    %c-2_i32_302 = arith.constant -2 : i32
    %774 = vector.broadcast %c-2_i32_302 : i32 to vector<1x256xi32>
    %775 = arith.addi %29, %774 : vector<1x256xi32>
    %c16_i32_303 = arith.constant 16 : i32
    %776 = vector.broadcast %c16_i32_303 : i32 to vector<1x256xi32>
    %777 = arith.cmpi slt, %775, %776 : vector<1x256xi32>
    %778 = arith.andi %773, %777 : vector<1x256xi1>
    %779 = arith.andi %745, %778 : vector<1x256xi1>
    %c242_i32 = arith.constant 242 : i32
    %780 = tpu.dynamic_rotate %26 by %c242_i32 dim 1 : vector<2x256xf32>, i32 -> vector<2x256xf32>
    %c242_i32_304 = arith.constant 242 : i32
    %781 = tpu.dynamic_rotate %27 by %c242_i32_304 dim 1 : vector<2x256xf32>, i32 -> vector<2x256xf32>
    %c0_305 = arith.constant 0 : index
    %c29 = arith.constant 29 : index
    %782 = memref.load %arg5[%c0_305, %c29] : memref<2x49xf32, #tpu.memory_space<smem>>
    %783 = vector.broadcast %782 : f32 to vector<2x256xf32>
    %784 = arith.mulf %780, %783 : vector<2x256xf32>
    %c1_306 = arith.constant 1 : index
    %c29_307 = arith.constant 29 : index
    %785 = memref.load %arg5[%c1_306, %c29_307] : memref<2x49xf32, #tpu.memory_space<smem>>
    %786 = vector.broadcast %785 : f32 to vector<2x256xf32>
    %787 = arith.mulf %781, %786 : vector<2x256xf32>
    %788 = arith.addf %784, %787 : vector<2x256xf32>
    %cst_308 = arith.constant 0.000000e+00 : f32
    %789 = vector.shape_cast %779 : vector<1x256xi1> to vector<1x256xi1>
    %790 = vector.broadcast %789 : vector<1x256xi1> to vector<2x256xi1>
    %791 = vector.broadcast %cst_308 : f32 to vector<2x256xf32>
    %792 = arith.select %790, %788, %791 : vector<2x256xi1>, vector<2x256xf32>
    %793 = arith.addf %769, %792 : vector<2x256xf32>
    %c-1_i32_309 = arith.constant -1 : i32
    %794 = vector.broadcast %c-1_i32_309 : i32 to vector<1x256xi32>
    %795 = arith.addi %29, %794 : vector<1x256xi32>
    %c0_i32_310 = arith.constant 0 : i32
    %796 = vector.broadcast %c0_i32_310 : i32 to vector<1x256xi32>
    %797 = arith.cmpi sge, %795, %796 : vector<1x256xi32>
    %c-1_i32_311 = arith.constant -1 : i32
    %798 = vector.broadcast %c-1_i32_311 : i32 to vector<1x256xi32>
    %799 = arith.addi %29, %798 : vector<1x256xi32>
    %c16_i32_312 = arith.constant 16 : i32
    %800 = vector.broadcast %c16_i32_312 : i32 to vector<1x256xi32>
    %801 = arith.cmpi slt, %799, %800 : vector<1x256xi32>
    %802 = arith.andi %797, %801 : vector<1x256xi1>
    %803 = arith.andi %745, %802 : vector<1x256xi1>
    %c241_i32 = arith.constant 241 : i32
    %804 = tpu.dynamic_rotate %26 by %c241_i32 dim 1 : vector<2x256xf32>, i32 -> vector<2x256xf32>
    %c241_i32_313 = arith.constant 241 : i32
    %805 = tpu.dynamic_rotate %27 by %c241_i32_313 dim 1 : vector<2x256xf32>, i32 -> vector<2x256xf32>
    %c0_314 = arith.constant 0 : index
    %c30 = arith.constant 30 : index
    %806 = memref.load %arg5[%c0_314, %c30] : memref<2x49xf32, #tpu.memory_space<smem>>
    %807 = vector.broadcast %806 : f32 to vector<2x256xf32>
    %808 = arith.mulf %804, %807 : vector<2x256xf32>
    %c1_315 = arith.constant 1 : index
    %c30_316 = arith.constant 30 : index
    %809 = memref.load %arg5[%c1_315, %c30_316] : memref<2x49xf32, #tpu.memory_space<smem>>
    %810 = vector.broadcast %809 : f32 to vector<2x256xf32>
    %811 = arith.mulf %805, %810 : vector<2x256xf32>
    %812 = arith.addf %808, %811 : vector<2x256xf32>
    %cst_317 = arith.constant 0.000000e+00 : f32
    %813 = vector.shape_cast %803 : vector<1x256xi1> to vector<1x256xi1>
    %814 = vector.broadcast %813 : vector<1x256xi1> to vector<2x256xi1>
    %815 = vector.broadcast %cst_317 : f32 to vector<2x256xf32>
    %816 = arith.select %814, %812, %815 : vector<2x256xi1>, vector<2x256xf32>
    %817 = arith.addf %793, %816 : vector<2x256xf32>
    %c0_i32_318 = arith.constant 0 : i32
    %818 = vector.broadcast %c0_i32_318 : i32 to vector<1x256xi32>
    %819 = arith.addi %29, %818 : vector<1x256xi32>
    %c0_i32_319 = arith.constant 0 : i32
    %820 = vector.broadcast %c0_i32_319 : i32 to vector<1x256xi32>
    %821 = arith.cmpi sge, %819, %820 : vector<1x256xi32>
    %c0_i32_320 = arith.constant 0 : i32
    %822 = vector.broadcast %c0_i32_320 : i32 to vector<1x256xi32>
    %823 = arith.addi %29, %822 : vector<1x256xi32>
    %c16_i32_321 = arith.constant 16 : i32
    %824 = vector.broadcast %c16_i32_321 : i32 to vector<1x256xi32>
    %825 = arith.cmpi slt, %823, %824 : vector<1x256xi32>
    %826 = arith.andi %821, %825 : vector<1x256xi1>
    %827 = arith.andi %745, %826 : vector<1x256xi1>
    %c240_i32 = arith.constant 240 : i32
    %828 = tpu.dynamic_rotate %26 by %c240_i32 dim 1 : vector<2x256xf32>, i32 -> vector<2x256xf32>
    %c240_i32_322 = arith.constant 240 : i32
    %829 = tpu.dynamic_rotate %27 by %c240_i32_322 dim 1 : vector<2x256xf32>, i32 -> vector<2x256xf32>
    %c0_323 = arith.constant 0 : index
    %c31 = arith.constant 31 : index
    %830 = memref.load %arg5[%c0_323, %c31] : memref<2x49xf32, #tpu.memory_space<smem>>
    %831 = vector.broadcast %830 : f32 to vector<2x256xf32>
    %832 = arith.mulf %828, %831 : vector<2x256xf32>
    %c1_324 = arith.constant 1 : index
    %c31_325 = arith.constant 31 : index
    %833 = memref.load %arg5[%c1_324, %c31_325] : memref<2x49xf32, #tpu.memory_space<smem>>
    %834 = vector.broadcast %833 : f32 to vector<2x256xf32>
    %835 = arith.mulf %829, %834 : vector<2x256xf32>
    %836 = arith.addf %832, %835 : vector<2x256xf32>
    %cst_326 = arith.constant 0.000000e+00 : f32
    %837 = vector.shape_cast %827 : vector<1x256xi1> to vector<1x256xi1>
    %838 = vector.broadcast %837 : vector<1x256xi1> to vector<2x256xi1>
    %839 = vector.broadcast %cst_326 : f32 to vector<2x256xf32>
    %840 = arith.select %838, %836, %839 : vector<2x256xi1>, vector<2x256xf32>
    %841 = arith.addf %817, %840 : vector<2x256xf32>
    %c1_i32_327 = arith.constant 1 : i32
    %842 = vector.broadcast %c1_i32_327 : i32 to vector<1x256xi32>
    %843 = arith.addi %29, %842 : vector<1x256xi32>
    %c0_i32_328 = arith.constant 0 : i32
    %844 = vector.broadcast %c0_i32_328 : i32 to vector<1x256xi32>
    %845 = arith.cmpi sge, %843, %844 : vector<1x256xi32>
    %c1_i32_329 = arith.constant 1 : i32
    %846 = vector.broadcast %c1_i32_329 : i32 to vector<1x256xi32>
    %847 = arith.addi %29, %846 : vector<1x256xi32>
    %c16_i32_330 = arith.constant 16 : i32
    %848 = vector.broadcast %c16_i32_330 : i32 to vector<1x256xi32>
    %849 = arith.cmpi slt, %847, %848 : vector<1x256xi32>
    %850 = arith.andi %845, %849 : vector<1x256xi1>
    %851 = arith.andi %745, %850 : vector<1x256xi1>
    %c239_i32 = arith.constant 239 : i32
    %852 = tpu.dynamic_rotate %26 by %c239_i32 dim 1 : vector<2x256xf32>, i32 -> vector<2x256xf32>
    %c239_i32_331 = arith.constant 239 : i32
    %853 = tpu.dynamic_rotate %27 by %c239_i32_331 dim 1 : vector<2x256xf32>, i32 -> vector<2x256xf32>
    %c0_332 = arith.constant 0 : index
    %c32 = arith.constant 32 : index
    %854 = memref.load %arg5[%c0_332, %c32] : memref<2x49xf32, #tpu.memory_space<smem>>
    %855 = vector.broadcast %854 : f32 to vector<2x256xf32>
    %856 = arith.mulf %852, %855 : vector<2x256xf32>
    %c1_333 = arith.constant 1 : index
    %c32_334 = arith.constant 32 : index
    %857 = memref.load %arg5[%c1_333, %c32_334] : memref<2x49xf32, #tpu.memory_space<smem>>
    %858 = vector.broadcast %857 : f32 to vector<2x256xf32>
    %859 = arith.mulf %853, %858 : vector<2x256xf32>
    %860 = arith.addf %856, %859 : vector<2x256xf32>
    %cst_335 = arith.constant 0.000000e+00 : f32
    %861 = vector.shape_cast %851 : vector<1x256xi1> to vector<1x256xi1>
    %862 = vector.broadcast %861 : vector<1x256xi1> to vector<2x256xi1>
    %863 = vector.broadcast %cst_335 : f32 to vector<2x256xf32>
    %864 = arith.select %862, %860, %863 : vector<2x256xi1>, vector<2x256xf32>
    %865 = arith.addf %841, %864 : vector<2x256xf32>
    %c2_i32_336 = arith.constant 2 : i32
    %866 = vector.broadcast %c2_i32_336 : i32 to vector<1x256xi32>
    %867 = arith.addi %29, %866 : vector<1x256xi32>
    %c0_i32_337 = arith.constant 0 : i32
    %868 = vector.broadcast %c0_i32_337 : i32 to vector<1x256xi32>
    %869 = arith.cmpi sge, %867, %868 : vector<1x256xi32>
    %c2_i32_338 = arith.constant 2 : i32
    %870 = vector.broadcast %c2_i32_338 : i32 to vector<1x256xi32>
    %871 = arith.addi %29, %870 : vector<1x256xi32>
    %c16_i32_339 = arith.constant 16 : i32
    %872 = vector.broadcast %c16_i32_339 : i32 to vector<1x256xi32>
    %873 = arith.cmpi slt, %871, %872 : vector<1x256xi32>
    %874 = arith.andi %869, %873 : vector<1x256xi1>
    %875 = arith.andi %745, %874 : vector<1x256xi1>
    %c238_i32 = arith.constant 238 : i32
    %876 = tpu.dynamic_rotate %26 by %c238_i32 dim 1 : vector<2x256xf32>, i32 -> vector<2x256xf32>
    %c238_i32_340 = arith.constant 238 : i32
    %877 = tpu.dynamic_rotate %27 by %c238_i32_340 dim 1 : vector<2x256xf32>, i32 -> vector<2x256xf32>
    %c0_341 = arith.constant 0 : index
    %c33 = arith.constant 33 : index
    %878 = memref.load %arg5[%c0_341, %c33] : memref<2x49xf32, #tpu.memory_space<smem>>
    %879 = vector.broadcast %878 : f32 to vector<2x256xf32>
    %880 = arith.mulf %876, %879 : vector<2x256xf32>
    %c1_342 = arith.constant 1 : index
    %c33_343 = arith.constant 33 : index
    %881 = memref.load %arg5[%c1_342, %c33_343] : memref<2x49xf32, #tpu.memory_space<smem>>
    %882 = vector.broadcast %881 : f32 to vector<2x256xf32>
    %883 = arith.mulf %877, %882 : vector<2x256xf32>
    %884 = arith.addf %880, %883 : vector<2x256xf32>
    %cst_344 = arith.constant 0.000000e+00 : f32
    %885 = vector.shape_cast %875 : vector<1x256xi1> to vector<1x256xi1>
    %886 = vector.broadcast %885 : vector<1x256xi1> to vector<2x256xi1>
    %887 = vector.broadcast %cst_344 : f32 to vector<2x256xf32>
    %888 = arith.select %886, %884, %887 : vector<2x256xi1>, vector<2x256xf32>
    %889 = arith.addf %865, %888 : vector<2x256xf32>
    %c3_i32_345 = arith.constant 3 : i32
    %890 = vector.broadcast %c3_i32_345 : i32 to vector<1x256xi32>
    %891 = arith.addi %29, %890 : vector<1x256xi32>
    %c0_i32_346 = arith.constant 0 : i32
    %892 = vector.broadcast %c0_i32_346 : i32 to vector<1x256xi32>
    %893 = arith.cmpi sge, %891, %892 : vector<1x256xi32>
    %c3_i32_347 = arith.constant 3 : i32
    %894 = vector.broadcast %c3_i32_347 : i32 to vector<1x256xi32>
    %895 = arith.addi %29, %894 : vector<1x256xi32>
    %c16_i32_348 = arith.constant 16 : i32
    %896 = vector.broadcast %c16_i32_348 : i32 to vector<1x256xi32>
    %897 = arith.cmpi slt, %895, %896 : vector<1x256xi32>
    %898 = arith.andi %893, %897 : vector<1x256xi1>
    %899 = arith.andi %745, %898 : vector<1x256xi1>
    %c237_i32 = arith.constant 237 : i32
    %900 = tpu.dynamic_rotate %26 by %c237_i32 dim 1 : vector<2x256xf32>, i32 -> vector<2x256xf32>
    %c237_i32_349 = arith.constant 237 : i32
    %901 = tpu.dynamic_rotate %27 by %c237_i32_349 dim 1 : vector<2x256xf32>, i32 -> vector<2x256xf32>
    %c0_350 = arith.constant 0 : index
    %c34 = arith.constant 34 : index
    %902 = memref.load %arg5[%c0_350, %c34] : memref<2x49xf32, #tpu.memory_space<smem>>
    %903 = vector.broadcast %902 : f32 to vector<2x256xf32>
    %904 = arith.mulf %900, %903 : vector<2x256xf32>
    %c1_351 = arith.constant 1 : index
    %c34_352 = arith.constant 34 : index
    %905 = memref.load %arg5[%c1_351, %c34_352] : memref<2x49xf32, #tpu.memory_space<smem>>
    %906 = vector.broadcast %905 : f32 to vector<2x256xf32>
    %907 = arith.mulf %901, %906 : vector<2x256xf32>
    %908 = arith.addf %904, %907 : vector<2x256xf32>
    %cst_353 = arith.constant 0.000000e+00 : f32
    %909 = vector.shape_cast %899 : vector<1x256xi1> to vector<1x256xi1>
    %910 = vector.broadcast %909 : vector<1x256xi1> to vector<2x256xi1>
    %911 = vector.broadcast %cst_353 : f32 to vector<2x256xf32>
    %912 = arith.select %910, %908, %911 : vector<2x256xi1>, vector<2x256xf32>
    %913 = arith.addf %889, %912 : vector<2x256xf32>
    %c2_i32_354 = arith.constant 2 : i32
    %914 = vector.broadcast %c2_i32_354 : i32 to vector<1x256xi32>
    %915 = arith.addi %28, %914 : vector<1x256xi32>
    %c0_i32_355 = arith.constant 0 : i32
    %916 = vector.broadcast %c0_i32_355 : i32 to vector<1x256xi32>
    %917 = arith.cmpi sge, %915, %916 : vector<1x256xi32>
    %c2_i32_356 = arith.constant 2 : i32
    %918 = vector.broadcast %c2_i32_356 : i32 to vector<1x256xi32>
    %919 = arith.addi %28, %918 : vector<1x256xi32>
    %c16_i32_357 = arith.constant 16 : i32
    %920 = vector.broadcast %c16_i32_357 : i32 to vector<1x256xi32>
    %921 = arith.cmpi slt, %919, %920 : vector<1x256xi32>
    %922 = arith.andi %917, %921 : vector<1x256xi1>
    %c-3_i32_358 = arith.constant -3 : i32
    %923 = vector.broadcast %c-3_i32_358 : i32 to vector<1x256xi32>
    %924 = arith.addi %29, %923 : vector<1x256xi32>
    %c0_i32_359 = arith.constant 0 : i32
    %925 = vector.broadcast %c0_i32_359 : i32 to vector<1x256xi32>
    %926 = arith.cmpi sge, %924, %925 : vector<1x256xi32>
    %c-3_i32_360 = arith.constant -3 : i32
    %927 = vector.broadcast %c-3_i32_360 : i32 to vector<1x256xi32>
    %928 = arith.addi %29, %927 : vector<1x256xi32>
    %c16_i32_361 = arith.constant 16 : i32
    %929 = vector.broadcast %c16_i32_361 : i32 to vector<1x256xi32>
    %930 = arith.cmpi slt, %928, %929 : vector<1x256xi32>
    %931 = arith.andi %926, %930 : vector<1x256xi1>
    %932 = arith.andi %922, %931 : vector<1x256xi1>
    %c227_i32 = arith.constant 227 : i32
    %933 = tpu.dynamic_rotate %26 by %c227_i32 dim 1 : vector<2x256xf32>, i32 -> vector<2x256xf32>
    %c227_i32_362 = arith.constant 227 : i32
    %934 = tpu.dynamic_rotate %27 by %c227_i32_362 dim 1 : vector<2x256xf32>, i32 -> vector<2x256xf32>
    %c0_363 = arith.constant 0 : index
    %c35 = arith.constant 35 : index
    %935 = memref.load %arg5[%c0_363, %c35] : memref<2x49xf32, #tpu.memory_space<smem>>
    %936 = vector.broadcast %935 : f32 to vector<2x256xf32>
    %937 = arith.mulf %933, %936 : vector<2x256xf32>
    %c1_364 = arith.constant 1 : index
    %c35_365 = arith.constant 35 : index
    %938 = memref.load %arg5[%c1_364, %c35_365] : memref<2x49xf32, #tpu.memory_space<smem>>
    %939 = vector.broadcast %938 : f32 to vector<2x256xf32>
    %940 = arith.mulf %934, %939 : vector<2x256xf32>
    %941 = arith.addf %937, %940 : vector<2x256xf32>
    %cst_366 = arith.constant 0.000000e+00 : f32
    %942 = vector.shape_cast %932 : vector<1x256xi1> to vector<1x256xi1>
    %943 = vector.broadcast %942 : vector<1x256xi1> to vector<2x256xi1>
    %944 = vector.broadcast %cst_366 : f32 to vector<2x256xf32>
    %945 = arith.select %943, %941, %944 : vector<2x256xi1>, vector<2x256xf32>
    %946 = arith.addf %913, %945 : vector<2x256xf32>
    %c-2_i32_367 = arith.constant -2 : i32
    %947 = vector.broadcast %c-2_i32_367 : i32 to vector<1x256xi32>
    %948 = arith.addi %29, %947 : vector<1x256xi32>
    %c0_i32_368 = arith.constant 0 : i32
    %949 = vector.broadcast %c0_i32_368 : i32 to vector<1x256xi32>
    %950 = arith.cmpi sge, %948, %949 : vector<1x256xi32>
    %c-2_i32_369 = arith.constant -2 : i32
    %951 = vector.broadcast %c-2_i32_369 : i32 to vector<1x256xi32>
    %952 = arith.addi %29, %951 : vector<1x256xi32>
    %c16_i32_370 = arith.constant 16 : i32
    %953 = vector.broadcast %c16_i32_370 : i32 to vector<1x256xi32>
    %954 = arith.cmpi slt, %952, %953 : vector<1x256xi32>
    %955 = arith.andi %950, %954 : vector<1x256xi1>
    %956 = arith.andi %922, %955 : vector<1x256xi1>
    %c226_i32 = arith.constant 226 : i32
    %957 = tpu.dynamic_rotate %26 by %c226_i32 dim 1 : vector<2x256xf32>, i32 -> vector<2x256xf32>
    %c226_i32_371 = arith.constant 226 : i32
    %958 = tpu.dynamic_rotate %27 by %c226_i32_371 dim 1 : vector<2x256xf32>, i32 -> vector<2x256xf32>
    %c0_372 = arith.constant 0 : index
    %c36 = arith.constant 36 : index
    %959 = memref.load %arg5[%c0_372, %c36] : memref<2x49xf32, #tpu.memory_space<smem>>
    %960 = vector.broadcast %959 : f32 to vector<2x256xf32>
    %961 = arith.mulf %957, %960 : vector<2x256xf32>
    %c1_373 = arith.constant 1 : index
    %c36_374 = arith.constant 36 : index
    %962 = memref.load %arg5[%c1_373, %c36_374] : memref<2x49xf32, #tpu.memory_space<smem>>
    %963 = vector.broadcast %962 : f32 to vector<2x256xf32>
    %964 = arith.mulf %958, %963 : vector<2x256xf32>
    %965 = arith.addf %961, %964 : vector<2x256xf32>
    %cst_375 = arith.constant 0.000000e+00 : f32
    %966 = vector.shape_cast %956 : vector<1x256xi1> to vector<1x256xi1>
    %967 = vector.broadcast %966 : vector<1x256xi1> to vector<2x256xi1>
    %968 = vector.broadcast %cst_375 : f32 to vector<2x256xf32>
    %969 = arith.select %967, %965, %968 : vector<2x256xi1>, vector<2x256xf32>
    %970 = arith.addf %946, %969 : vector<2x256xf32>
    %c-1_i32_376 = arith.constant -1 : i32
    %971 = vector.broadcast %c-1_i32_376 : i32 to vector<1x256xi32>
    %972 = arith.addi %29, %971 : vector<1x256xi32>
    %c0_i32_377 = arith.constant 0 : i32
    %973 = vector.broadcast %c0_i32_377 : i32 to vector<1x256xi32>
    %974 = arith.cmpi sge, %972, %973 : vector<1x256xi32>
    %c-1_i32_378 = arith.constant -1 : i32
    %975 = vector.broadcast %c-1_i32_378 : i32 to vector<1x256xi32>
    %976 = arith.addi %29, %975 : vector<1x256xi32>
    %c16_i32_379 = arith.constant 16 : i32
    %977 = vector.broadcast %c16_i32_379 : i32 to vector<1x256xi32>
    %978 = arith.cmpi slt, %976, %977 : vector<1x256xi32>
    %979 = arith.andi %974, %978 : vector<1x256xi1>
    %980 = arith.andi %922, %979 : vector<1x256xi1>
    %c225_i32 = arith.constant 225 : i32
    %981 = tpu.dynamic_rotate %26 by %c225_i32 dim 1 : vector<2x256xf32>, i32 -> vector<2x256xf32>
    %c225_i32_380 = arith.constant 225 : i32
    %982 = tpu.dynamic_rotate %27 by %c225_i32_380 dim 1 : vector<2x256xf32>, i32 -> vector<2x256xf32>
    %c0_381 = arith.constant 0 : index
    %c37 = arith.constant 37 : index
    %983 = memref.load %arg5[%c0_381, %c37] : memref<2x49xf32, #tpu.memory_space<smem>>
    %984 = vector.broadcast %983 : f32 to vector<2x256xf32>
    %985 = arith.mulf %981, %984 : vector<2x256xf32>
    %c1_382 = arith.constant 1 : index
    %c37_383 = arith.constant 37 : index
    %986 = memref.load %arg5[%c1_382, %c37_383] : memref<2x49xf32, #tpu.memory_space<smem>>
    %987 = vector.broadcast %986 : f32 to vector<2x256xf32>
    %988 = arith.mulf %982, %987 : vector<2x256xf32>
    %989 = arith.addf %985, %988 : vector<2x256xf32>
    %cst_384 = arith.constant 0.000000e+00 : f32
    %990 = vector.shape_cast %980 : vector<1x256xi1> to vector<1x256xi1>
    %991 = vector.broadcast %990 : vector<1x256xi1> to vector<2x256xi1>
    %992 = vector.broadcast %cst_384 : f32 to vector<2x256xf32>
    %993 = arith.select %991, %989, %992 : vector<2x256xi1>, vector<2x256xf32>
    %994 = arith.addf %970, %993 : vector<2x256xf32>
    %c0_i32_385 = arith.constant 0 : i32
    %995 = vector.broadcast %c0_i32_385 : i32 to vector<1x256xi32>
    %996 = arith.addi %29, %995 : vector<1x256xi32>
    %c0_i32_386 = arith.constant 0 : i32
    %997 = vector.broadcast %c0_i32_386 : i32 to vector<1x256xi32>
    %998 = arith.cmpi sge, %996, %997 : vector<1x256xi32>
    %c0_i32_387 = arith.constant 0 : i32
    %999 = vector.broadcast %c0_i32_387 : i32 to vector<1x256xi32>
    %1000 = arith.addi %29, %999 : vector<1x256xi32>
    %c16_i32_388 = arith.constant 16 : i32
    %1001 = vector.broadcast %c16_i32_388 : i32 to vector<1x256xi32>
    %1002 = arith.cmpi slt, %1000, %1001 : vector<1x256xi32>
    %1003 = arith.andi %998, %1002 : vector<1x256xi1>
    %1004 = arith.andi %922, %1003 : vector<1x256xi1>
    %c224_i32 = arith.constant 224 : i32
    %1005 = tpu.dynamic_rotate %26 by %c224_i32 dim 1 : vector<2x256xf32>, i32 -> vector<2x256xf32>
    %c224_i32_389 = arith.constant 224 : i32
    %1006 = tpu.dynamic_rotate %27 by %c224_i32_389 dim 1 : vector<2x256xf32>, i32 -> vector<2x256xf32>
    %c0_390 = arith.constant 0 : index
    %c38 = arith.constant 38 : index
    %1007 = memref.load %arg5[%c0_390, %c38] : memref<2x49xf32, #tpu.memory_space<smem>>
    %1008 = vector.broadcast %1007 : f32 to vector<2x256xf32>
    %1009 = arith.mulf %1005, %1008 : vector<2x256xf32>
    %c1_391 = arith.constant 1 : index
    %c38_392 = arith.constant 38 : index
    %1010 = memref.load %arg5[%c1_391, %c38_392] : memref<2x49xf32, #tpu.memory_space<smem>>
    %1011 = vector.broadcast %1010 : f32 to vector<2x256xf32>
    %1012 = arith.mulf %1006, %1011 : vector<2x256xf32>
    %1013 = arith.addf %1009, %1012 : vector<2x256xf32>
    %cst_393 = arith.constant 0.000000e+00 : f32
    %1014 = vector.shape_cast %1004 : vector<1x256xi1> to vector<1x256xi1>
    %1015 = vector.broadcast %1014 : vector<1x256xi1> to vector<2x256xi1>
    %1016 = vector.broadcast %cst_393 : f32 to vector<2x256xf32>
    %1017 = arith.select %1015, %1013, %1016 : vector<2x256xi1>, vector<2x256xf32>
    %1018 = arith.addf %994, %1017 : vector<2x256xf32>
    %c1_i32_394 = arith.constant 1 : i32
    %1019 = vector.broadcast %c1_i32_394 : i32 to vector<1x256xi32>
    %1020 = arith.addi %29, %1019 : vector<1x256xi32>
    %c0_i32_395 = arith.constant 0 : i32
    %1021 = vector.broadcast %c0_i32_395 : i32 to vector<1x256xi32>
    %1022 = arith.cmpi sge, %1020, %1021 : vector<1x256xi32>
    %c1_i32_396 = arith.constant 1 : i32
    %1023 = vector.broadcast %c1_i32_396 : i32 to vector<1x256xi32>
    %1024 = arith.addi %29, %1023 : vector<1x256xi32>
    %c16_i32_397 = arith.constant 16 : i32
    %1025 = vector.broadcast %c16_i32_397 : i32 to vector<1x256xi32>
    %1026 = arith.cmpi slt, %1024, %1025 : vector<1x256xi32>
    %1027 = arith.andi %1022, %1026 : vector<1x256xi1>
    %1028 = arith.andi %922, %1027 : vector<1x256xi1>
    %c223_i32 = arith.constant 223 : i32
    %1029 = tpu.dynamic_rotate %26 by %c223_i32 dim 1 : vector<2x256xf32>, i32 -> vector<2x256xf32>
    %c223_i32_398 = arith.constant 223 : i32
    %1030 = tpu.dynamic_rotate %27 by %c223_i32_398 dim 1 : vector<2x256xf32>, i32 -> vector<2x256xf32>
    %c0_399 = arith.constant 0 : index
    %c39 = arith.constant 39 : index
    %1031 = memref.load %arg5[%c0_399, %c39] : memref<2x49xf32, #tpu.memory_space<smem>>
    %1032 = vector.broadcast %1031 : f32 to vector<2x256xf32>
    %1033 = arith.mulf %1029, %1032 : vector<2x256xf32>
    %c1_400 = arith.constant 1 : index
    %c39_401 = arith.constant 39 : index
    %1034 = memref.load %arg5[%c1_400, %c39_401] : memref<2x49xf32, #tpu.memory_space<smem>>
    %1035 = vector.broadcast %1034 : f32 to vector<2x256xf32>
    %1036 = arith.mulf %1030, %1035 : vector<2x256xf32>
    %1037 = arith.addf %1033, %1036 : vector<2x256xf32>
    %cst_402 = arith.constant 0.000000e+00 : f32
    %1038 = vector.shape_cast %1028 : vector<1x256xi1> to vector<1x256xi1>
    %1039 = vector.broadcast %1038 : vector<1x256xi1> to vector<2x256xi1>
    %1040 = vector.broadcast %cst_402 : f32 to vector<2x256xf32>
    %1041 = arith.select %1039, %1037, %1040 : vector<2x256xi1>, vector<2x256xf32>
    %1042 = arith.addf %1018, %1041 : vector<2x256xf32>
    %c2_i32_403 = arith.constant 2 : i32
    %1043 = vector.broadcast %c2_i32_403 : i32 to vector<1x256xi32>
    %1044 = arith.addi %29, %1043 : vector<1x256xi32>
    %c0_i32_404 = arith.constant 0 : i32
    %1045 = vector.broadcast %c0_i32_404 : i32 to vector<1x256xi32>
    %1046 = arith.cmpi sge, %1044, %1045 : vector<1x256xi32>
    %c2_i32_405 = arith.constant 2 : i32
    %1047 = vector.broadcast %c2_i32_405 : i32 to vector<1x256xi32>
    %1048 = arith.addi %29, %1047 : vector<1x256xi32>
    %c16_i32_406 = arith.constant 16 : i32
    %1049 = vector.broadcast %c16_i32_406 : i32 to vector<1x256xi32>
    %1050 = arith.cmpi slt, %1048, %1049 : vector<1x256xi32>
    %1051 = arith.andi %1046, %1050 : vector<1x256xi1>
    %1052 = arith.andi %922, %1051 : vector<1x256xi1>
    %c222_i32 = arith.constant 222 : i32
    %1053 = tpu.dynamic_rotate %26 by %c222_i32 dim 1 : vector<2x256xf32>, i32 -> vector<2x256xf32>
    %c222_i32_407 = arith.constant 222 : i32
    %1054 = tpu.dynamic_rotate %27 by %c222_i32_407 dim 1 : vector<2x256xf32>, i32 -> vector<2x256xf32>
    %c0_408 = arith.constant 0 : index
    %c40 = arith.constant 40 : index
    %1055 = memref.load %arg5[%c0_408, %c40] : memref<2x49xf32, #tpu.memory_space<smem>>
    %1056 = vector.broadcast %1055 : f32 to vector<2x256xf32>
    %1057 = arith.mulf %1053, %1056 : vector<2x256xf32>
    %c1_409 = arith.constant 1 : index
    %c40_410 = arith.constant 40 : index
    %1058 = memref.load %arg5[%c1_409, %c40_410] : memref<2x49xf32, #tpu.memory_space<smem>>
    %1059 = vector.broadcast %1058 : f32 to vector<2x256xf32>
    %1060 = arith.mulf %1054, %1059 : vector<2x256xf32>
    %1061 = arith.addf %1057, %1060 : vector<2x256xf32>
    %cst_411 = arith.constant 0.000000e+00 : f32
    %1062 = vector.shape_cast %1052 : vector<1x256xi1> to vector<1x256xi1>
    %1063 = vector.broadcast %1062 : vector<1x256xi1> to vector<2x256xi1>
    %1064 = vector.broadcast %cst_411 : f32 to vector<2x256xf32>
    %1065 = arith.select %1063, %1061, %1064 : vector<2x256xi1>, vector<2x256xf32>
    %1066 = arith.addf %1042, %1065 : vector<2x256xf32>
    %c3_i32_412 = arith.constant 3 : i32
    %1067 = vector.broadcast %c3_i32_412 : i32 to vector<1x256xi32>
    %1068 = arith.addi %29, %1067 : vector<1x256xi32>
    %c0_i32_413 = arith.constant 0 : i32
    %1069 = vector.broadcast %c0_i32_413 : i32 to vector<1x256xi32>
    %1070 = arith.cmpi sge, %1068, %1069 : vector<1x256xi32>
    %c3_i32_414 = arith.constant 3 : i32
    %1071 = vector.broadcast %c3_i32_414 : i32 to vector<1x256xi32>
    %1072 = arith.addi %29, %1071 : vector<1x256xi32>
    %c16_i32_415 = arith.constant 16 : i32
    %1073 = vector.broadcast %c16_i32_415 : i32 to vector<1x256xi32>
    %1074 = arith.cmpi slt, %1072, %1073 : vector<1x256xi32>
    %1075 = arith.andi %1070, %1074 : vector<1x256xi1>
    %1076 = arith.andi %922, %1075 : vector<1x256xi1>
    %c221_i32 = arith.constant 221 : i32
    %1077 = tpu.dynamic_rotate %26 by %c221_i32 dim 1 : vector<2x256xf32>, i32 -> vector<2x256xf32>
    %c221_i32_416 = arith.constant 221 : i32
    %1078 = tpu.dynamic_rotate %27 by %c221_i32_416 dim 1 : vector<2x256xf32>, i32 -> vector<2x256xf32>
    %c0_417 = arith.constant 0 : index
    %c41 = arith.constant 41 : index
    %1079 = memref.load %arg5[%c0_417, %c41] : memref<2x49xf32, #tpu.memory_space<smem>>
    %1080 = vector.broadcast %1079 : f32 to vector<2x256xf32>
    %1081 = arith.mulf %1077, %1080 : vector<2x256xf32>
    %c1_418 = arith.constant 1 : index
    %c41_419 = arith.constant 41 : index
    %1082 = memref.load %arg5[%c1_418, %c41_419] : memref<2x49xf32, #tpu.memory_space<smem>>
    %1083 = vector.broadcast %1082 : f32 to vector<2x256xf32>
    %1084 = arith.mulf %1078, %1083 : vector<2x256xf32>
    %1085 = arith.addf %1081, %1084 : vector<2x256xf32>
    %cst_420 = arith.constant 0.000000e+00 : f32
    %1086 = vector.shape_cast %1076 : vector<1x256xi1> to vector<1x256xi1>
    %1087 = vector.broadcast %1086 : vector<1x256xi1> to vector<2x256xi1>
    %1088 = vector.broadcast %cst_420 : f32 to vector<2x256xf32>
    %1089 = arith.select %1087, %1085, %1088 : vector<2x256xi1>, vector<2x256xf32>
    %1090 = arith.addf %1066, %1089 : vector<2x256xf32>
    %c3_i32_421 = arith.constant 3 : i32
    %1091 = vector.broadcast %c3_i32_421 : i32 to vector<1x256xi32>
    %1092 = arith.addi %28, %1091 : vector<1x256xi32>
    %c0_i32_422 = arith.constant 0 : i32
    %1093 = vector.broadcast %c0_i32_422 : i32 to vector<1x256xi32>
    %1094 = arith.cmpi sge, %1092, %1093 : vector<1x256xi32>
    %c3_i32_423 = arith.constant 3 : i32
    %1095 = vector.broadcast %c3_i32_423 : i32 to vector<1x256xi32>
    %1096 = arith.addi %28, %1095 : vector<1x256xi32>
    %c16_i32_424 = arith.constant 16 : i32
    %1097 = vector.broadcast %c16_i32_424 : i32 to vector<1x256xi32>
    %1098 = arith.cmpi slt, %1096, %1097 : vector<1x256xi32>
    %1099 = arith.andi %1094, %1098 : vector<1x256xi1>
    %c-3_i32_425 = arith.constant -3 : i32
    %1100 = vector.broadcast %c-3_i32_425 : i32 to vector<1x256xi32>
    %1101 = arith.addi %29, %1100 : vector<1x256xi32>
    %c0_i32_426 = arith.constant 0 : i32
    %1102 = vector.broadcast %c0_i32_426 : i32 to vector<1x256xi32>
    %1103 = arith.cmpi sge, %1101, %1102 : vector<1x256xi32>
    %c-3_i32_427 = arith.constant -3 : i32
    %1104 = vector.broadcast %c-3_i32_427 : i32 to vector<1x256xi32>
    %1105 = arith.addi %29, %1104 : vector<1x256xi32>
    %c16_i32_428 = arith.constant 16 : i32
    %1106 = vector.broadcast %c16_i32_428 : i32 to vector<1x256xi32>
    %1107 = arith.cmpi slt, %1105, %1106 : vector<1x256xi32>
    %1108 = arith.andi %1103, %1107 : vector<1x256xi1>
    %1109 = arith.andi %1099, %1108 : vector<1x256xi1>
    %c211_i32 = arith.constant 211 : i32
    %1110 = tpu.dynamic_rotate %26 by %c211_i32 dim 1 : vector<2x256xf32>, i32 -> vector<2x256xf32>
    %c211_i32_429 = arith.constant 211 : i32
    %1111 = tpu.dynamic_rotate %27 by %c211_i32_429 dim 1 : vector<2x256xf32>, i32 -> vector<2x256xf32>
    %c0_430 = arith.constant 0 : index
    %c42 = arith.constant 42 : index
    %1112 = memref.load %arg5[%c0_430, %c42] : memref<2x49xf32, #tpu.memory_space<smem>>
    %1113 = vector.broadcast %1112 : f32 to vector<2x256xf32>
    %1114 = arith.mulf %1110, %1113 : vector<2x256xf32>
    %c1_431 = arith.constant 1 : index
    %c42_432 = arith.constant 42 : index
    %1115 = memref.load %arg5[%c1_431, %c42_432] : memref<2x49xf32, #tpu.memory_space<smem>>
    %1116 = vector.broadcast %1115 : f32 to vector<2x256xf32>
    %1117 = arith.mulf %1111, %1116 : vector<2x256xf32>
    %1118 = arith.addf %1114, %1117 : vector<2x256xf32>
    %cst_433 = arith.constant 0.000000e+00 : f32
    %1119 = vector.shape_cast %1109 : vector<1x256xi1> to vector<1x256xi1>
    %1120 = vector.broadcast %1119 : vector<1x256xi1> to vector<2x256xi1>
    %1121 = vector.broadcast %cst_433 : f32 to vector<2x256xf32>
    %1122 = arith.select %1120, %1118, %1121 : vector<2x256xi1>, vector<2x256xf32>
    %1123 = arith.addf %1090, %1122 : vector<2x256xf32>
    %c-2_i32_434 = arith.constant -2 : i32
    %1124 = vector.broadcast %c-2_i32_434 : i32 to vector<1x256xi32>
    %1125 = arith.addi %29, %1124 : vector<1x256xi32>
    %c0_i32_435 = arith.constant 0 : i32
    %1126 = vector.broadcast %c0_i32_435 : i32 to vector<1x256xi32>
    %1127 = arith.cmpi sge, %1125, %1126 : vector<1x256xi32>
    %c-2_i32_436 = arith.constant -2 : i32
    %1128 = vector.broadcast %c-2_i32_436 : i32 to vector<1x256xi32>
    %1129 = arith.addi %29, %1128 : vector<1x256xi32>
    %c16_i32_437 = arith.constant 16 : i32
    %1130 = vector.broadcast %c16_i32_437 : i32 to vector<1x256xi32>
    %1131 = arith.cmpi slt, %1129, %1130 : vector<1x256xi32>
    %1132 = arith.andi %1127, %1131 : vector<1x256xi1>
    %1133 = arith.andi %1099, %1132 : vector<1x256xi1>
    %c210_i32 = arith.constant 210 : i32
    %1134 = tpu.dynamic_rotate %26 by %c210_i32 dim 1 : vector<2x256xf32>, i32 -> vector<2x256xf32>
    %c210_i32_438 = arith.constant 210 : i32
    %1135 = tpu.dynamic_rotate %27 by %c210_i32_438 dim 1 : vector<2x256xf32>, i32 -> vector<2x256xf32>
    %c0_439 = arith.constant 0 : index
    %c43 = arith.constant 43 : index
    %1136 = memref.load %arg5[%c0_439, %c43] : memref<2x49xf32, #tpu.memory_space<smem>>
    %1137 = vector.broadcast %1136 : f32 to vector<2x256xf32>
    %1138 = arith.mulf %1134, %1137 : vector<2x256xf32>
    %c1_440 = arith.constant 1 : index
    %c43_441 = arith.constant 43 : index
    %1139 = memref.load %arg5[%c1_440, %c43_441] : memref<2x49xf32, #tpu.memory_space<smem>>
    %1140 = vector.broadcast %1139 : f32 to vector<2x256xf32>
    %1141 = arith.mulf %1135, %1140 : vector<2x256xf32>
    %1142 = arith.addf %1138, %1141 : vector<2x256xf32>
    %cst_442 = arith.constant 0.000000e+00 : f32
    %1143 = vector.shape_cast %1133 : vector<1x256xi1> to vector<1x256xi1>
    %1144 = vector.broadcast %1143 : vector<1x256xi1> to vector<2x256xi1>
    %1145 = vector.broadcast %cst_442 : f32 to vector<2x256xf32>
    %1146 = arith.select %1144, %1142, %1145 : vector<2x256xi1>, vector<2x256xf32>
    %1147 = arith.addf %1123, %1146 : vector<2x256xf32>
    %c-1_i32_443 = arith.constant -1 : i32
    %1148 = vector.broadcast %c-1_i32_443 : i32 to vector<1x256xi32>
    %1149 = arith.addi %29, %1148 : vector<1x256xi32>
    %c0_i32_444 = arith.constant 0 : i32
    %1150 = vector.broadcast %c0_i32_444 : i32 to vector<1x256xi32>
    %1151 = arith.cmpi sge, %1149, %1150 : vector<1x256xi32>
    %c-1_i32_445 = arith.constant -1 : i32
    %1152 = vector.broadcast %c-1_i32_445 : i32 to vector<1x256xi32>
    %1153 = arith.addi %29, %1152 : vector<1x256xi32>
    %c16_i32_446 = arith.constant 16 : i32
    %1154 = vector.broadcast %c16_i32_446 : i32 to vector<1x256xi32>
    %1155 = arith.cmpi slt, %1153, %1154 : vector<1x256xi32>
    %1156 = arith.andi %1151, %1155 : vector<1x256xi1>
    %1157 = arith.andi %1099, %1156 : vector<1x256xi1>
    %c209_i32 = arith.constant 209 : i32
    %1158 = tpu.dynamic_rotate %26 by %c209_i32 dim 1 : vector<2x256xf32>, i32 -> vector<2x256xf32>
    %c209_i32_447 = arith.constant 209 : i32
    %1159 = tpu.dynamic_rotate %27 by %c209_i32_447 dim 1 : vector<2x256xf32>, i32 -> vector<2x256xf32>
    %c0_448 = arith.constant 0 : index
    %c44 = arith.constant 44 : index
    %1160 = memref.load %arg5[%c0_448, %c44] : memref<2x49xf32, #tpu.memory_space<smem>>
    %1161 = vector.broadcast %1160 : f32 to vector<2x256xf32>
    %1162 = arith.mulf %1158, %1161 : vector<2x256xf32>
    %c1_449 = arith.constant 1 : index
    %c44_450 = arith.constant 44 : index
    %1163 = memref.load %arg5[%c1_449, %c44_450] : memref<2x49xf32, #tpu.memory_space<smem>>
    %1164 = vector.broadcast %1163 : f32 to vector<2x256xf32>
    %1165 = arith.mulf %1159, %1164 : vector<2x256xf32>
    %1166 = arith.addf %1162, %1165 : vector<2x256xf32>
    %cst_451 = arith.constant 0.000000e+00 : f32
    %1167 = vector.shape_cast %1157 : vector<1x256xi1> to vector<1x256xi1>
    %1168 = vector.broadcast %1167 : vector<1x256xi1> to vector<2x256xi1>
    %1169 = vector.broadcast %cst_451 : f32 to vector<2x256xf32>
    %1170 = arith.select %1168, %1166, %1169 : vector<2x256xi1>, vector<2x256xf32>
    %1171 = arith.addf %1147, %1170 : vector<2x256xf32>
    %c0_i32_452 = arith.constant 0 : i32
    %1172 = vector.broadcast %c0_i32_452 : i32 to vector<1x256xi32>
    %1173 = arith.addi %29, %1172 : vector<1x256xi32>
    %c0_i32_453 = arith.constant 0 : i32
    %1174 = vector.broadcast %c0_i32_453 : i32 to vector<1x256xi32>
    %1175 = arith.cmpi sge, %1173, %1174 : vector<1x256xi32>
    %c0_i32_454 = arith.constant 0 : i32
    %1176 = vector.broadcast %c0_i32_454 : i32 to vector<1x256xi32>
    %1177 = arith.addi %29, %1176 : vector<1x256xi32>
    %c16_i32_455 = arith.constant 16 : i32
    %1178 = vector.broadcast %c16_i32_455 : i32 to vector<1x256xi32>
    %1179 = arith.cmpi slt, %1177, %1178 : vector<1x256xi32>
    %1180 = arith.andi %1175, %1179 : vector<1x256xi1>
    %1181 = arith.andi %1099, %1180 : vector<1x256xi1>
    %c208_i32 = arith.constant 208 : i32
    %1182 = tpu.dynamic_rotate %26 by %c208_i32 dim 1 : vector<2x256xf32>, i32 -> vector<2x256xf32>
    %c208_i32_456 = arith.constant 208 : i32
    %1183 = tpu.dynamic_rotate %27 by %c208_i32_456 dim 1 : vector<2x256xf32>, i32 -> vector<2x256xf32>
    %c0_457 = arith.constant 0 : index
    %c45 = arith.constant 45 : index
    %1184 = memref.load %arg5[%c0_457, %c45] : memref<2x49xf32, #tpu.memory_space<smem>>
    %1185 = vector.broadcast %1184 : f32 to vector<2x256xf32>
    %1186 = arith.mulf %1182, %1185 : vector<2x256xf32>
    %c1_458 = arith.constant 1 : index
    %c45_459 = arith.constant 45 : index
    %1187 = memref.load %arg5[%c1_458, %c45_459] : memref<2x49xf32, #tpu.memory_space<smem>>
    %1188 = vector.broadcast %1187 : f32 to vector<2x256xf32>
    %1189 = arith.mulf %1183, %1188 : vector<2x256xf32>
    %1190 = arith.addf %1186, %1189 : vector<2x256xf32>
    %cst_460 = arith.constant 0.000000e+00 : f32
    %1191 = vector.shape_cast %1181 : vector<1x256xi1> to vector<1x256xi1>
    %1192 = vector.broadcast %1191 : vector<1x256xi1> to vector<2x256xi1>
    %1193 = vector.broadcast %cst_460 : f32 to vector<2x256xf32>
    %1194 = arith.select %1192, %1190, %1193 : vector<2x256xi1>, vector<2x256xf32>
    %1195 = arith.addf %1171, %1194 : vector<2x256xf32>
    %c1_i32_461 = arith.constant 1 : i32
    %1196 = vector.broadcast %c1_i32_461 : i32 to vector<1x256xi32>
    %1197 = arith.addi %29, %1196 : vector<1x256xi32>
    %c0_i32_462 = arith.constant 0 : i32
    %1198 = vector.broadcast %c0_i32_462 : i32 to vector<1x256xi32>
    %1199 = arith.cmpi sge, %1197, %1198 : vector<1x256xi32>
    %c1_i32_463 = arith.constant 1 : i32
    %1200 = vector.broadcast %c1_i32_463 : i32 to vector<1x256xi32>
    %1201 = arith.addi %29, %1200 : vector<1x256xi32>
    %c16_i32_464 = arith.constant 16 : i32
    %1202 = vector.broadcast %c16_i32_464 : i32 to vector<1x256xi32>
    %1203 = arith.cmpi slt, %1201, %1202 : vector<1x256xi32>
    %1204 = arith.andi %1199, %1203 : vector<1x256xi1>
    %1205 = arith.andi %1099, %1204 : vector<1x256xi1>
    %c207_i32 = arith.constant 207 : i32
    %1206 = tpu.dynamic_rotate %26 by %c207_i32 dim 1 : vector<2x256xf32>, i32 -> vector<2x256xf32>
    %c207_i32_465 = arith.constant 207 : i32
    %1207 = tpu.dynamic_rotate %27 by %c207_i32_465 dim 1 : vector<2x256xf32>, i32 -> vector<2x256xf32>
    %c0_466 = arith.constant 0 : index
    %c46 = arith.constant 46 : index
    %1208 = memref.load %arg5[%c0_466, %c46] : memref<2x49xf32, #tpu.memory_space<smem>>
    %1209 = vector.broadcast %1208 : f32 to vector<2x256xf32>
    %1210 = arith.mulf %1206, %1209 : vector<2x256xf32>
    %c1_467 = arith.constant 1 : index
    %c46_468 = arith.constant 46 : index
    %1211 = memref.load %arg5[%c1_467, %c46_468] : memref<2x49xf32, #tpu.memory_space<smem>>
    %1212 = vector.broadcast %1211 : f32 to vector<2x256xf32>
    %1213 = arith.mulf %1207, %1212 : vector<2x256xf32>
    %1214 = arith.addf %1210, %1213 : vector<2x256xf32>
    %cst_469 = arith.constant 0.000000e+00 : f32
    %1215 = vector.shape_cast %1205 : vector<1x256xi1> to vector<1x256xi1>
    %1216 = vector.broadcast %1215 : vector<1x256xi1> to vector<2x256xi1>
    %1217 = vector.broadcast %cst_469 : f32 to vector<2x256xf32>
    %1218 = arith.select %1216, %1214, %1217 : vector<2x256xi1>, vector<2x256xf32>
    %1219 = arith.addf %1195, %1218 : vector<2x256xf32>
    %c2_i32_470 = arith.constant 2 : i32
    %1220 = vector.broadcast %c2_i32_470 : i32 to vector<1x256xi32>
    %1221 = arith.addi %29, %1220 : vector<1x256xi32>
    %c0_i32_471 = arith.constant 0 : i32
    %1222 = vector.broadcast %c0_i32_471 : i32 to vector<1x256xi32>
    %1223 = arith.cmpi sge, %1221, %1222 : vector<1x256xi32>
    %c2_i32_472 = arith.constant 2 : i32
    %1224 = vector.broadcast %c2_i32_472 : i32 to vector<1x256xi32>
    %1225 = arith.addi %29, %1224 : vector<1x256xi32>
    %c16_i32_473 = arith.constant 16 : i32
    %1226 = vector.broadcast %c16_i32_473 : i32 to vector<1x256xi32>
    %1227 = arith.cmpi slt, %1225, %1226 : vector<1x256xi32>
    %1228 = arith.andi %1223, %1227 : vector<1x256xi1>
    %1229 = arith.andi %1099, %1228 : vector<1x256xi1>
    %c206_i32 = arith.constant 206 : i32
    %1230 = tpu.dynamic_rotate %26 by %c206_i32 dim 1 : vector<2x256xf32>, i32 -> vector<2x256xf32>
    %c206_i32_474 = arith.constant 206 : i32
    %1231 = tpu.dynamic_rotate %27 by %c206_i32_474 dim 1 : vector<2x256xf32>, i32 -> vector<2x256xf32>
    %c0_475 = arith.constant 0 : index
    %c47 = arith.constant 47 : index
    %1232 = memref.load %arg5[%c0_475, %c47] : memref<2x49xf32, #tpu.memory_space<smem>>
    %1233 = vector.broadcast %1232 : f32 to vector<2x256xf32>
    %1234 = arith.mulf %1230, %1233 : vector<2x256xf32>
    %c1_476 = arith.constant 1 : index
    %c47_477 = arith.constant 47 : index
    %1235 = memref.load %arg5[%c1_476, %c47_477] : memref<2x49xf32, #tpu.memory_space<smem>>
    %1236 = vector.broadcast %1235 : f32 to vector<2x256xf32>
    %1237 = arith.mulf %1231, %1236 : vector<2x256xf32>
    %1238 = arith.addf %1234, %1237 : vector<2x256xf32>
    %cst_478 = arith.constant 0.000000e+00 : f32
    %1239 = vector.shape_cast %1229 : vector<1x256xi1> to vector<1x256xi1>
    %1240 = vector.broadcast %1239 : vector<1x256xi1> to vector<2x256xi1>
    %1241 = vector.broadcast %cst_478 : f32 to vector<2x256xf32>
    %1242 = arith.select %1240, %1238, %1241 : vector<2x256xi1>, vector<2x256xf32>
    %1243 = arith.addf %1219, %1242 : vector<2x256xf32>
    %c3_i32_479 = arith.constant 3 : i32
    %1244 = vector.broadcast %c3_i32_479 : i32 to vector<1x256xi32>
    %1245 = arith.addi %29, %1244 : vector<1x256xi32>
    %c0_i32_480 = arith.constant 0 : i32
    %1246 = vector.broadcast %c0_i32_480 : i32 to vector<1x256xi32>
    %1247 = arith.cmpi sge, %1245, %1246 : vector<1x256xi32>
    %c3_i32_481 = arith.constant 3 : i32
    %1248 = vector.broadcast %c3_i32_481 : i32 to vector<1x256xi32>
    %1249 = arith.addi %29, %1248 : vector<1x256xi32>
    %c16_i32_482 = arith.constant 16 : i32
    %1250 = vector.broadcast %c16_i32_482 : i32 to vector<1x256xi32>
    %1251 = arith.cmpi slt, %1249, %1250 : vector<1x256xi32>
    %1252 = arith.andi %1247, %1251 : vector<1x256xi1>
    %1253 = arith.andi %1099, %1252 : vector<1x256xi1>
    %c205_i32 = arith.constant 205 : i32
    %1254 = tpu.dynamic_rotate %26 by %c205_i32 dim 1 : vector<2x256xf32>, i32 -> vector<2x256xf32>
    %c205_i32_483 = arith.constant 205 : i32
    %1255 = tpu.dynamic_rotate %27 by %c205_i32_483 dim 1 : vector<2x256xf32>, i32 -> vector<2x256xf32>
    %c0_484 = arith.constant 0 : index
    %c48 = arith.constant 48 : index
    %1256 = memref.load %arg5[%c0_484, %c48] : memref<2x49xf32, #tpu.memory_space<smem>>
    %1257 = vector.broadcast %1256 : f32 to vector<2x256xf32>
    %1258 = arith.mulf %1254, %1257 : vector<2x256xf32>
    %c1_485 = arith.constant 1 : index
    %c48_486 = arith.constant 48 : index
    %1259 = memref.load %arg5[%c1_485, %c48_486] : memref<2x49xf32, #tpu.memory_space<smem>>
    %1260 = vector.broadcast %1259 : f32 to vector<2x256xf32>
    %1261 = arith.mulf %1255, %1260 : vector<2x256xf32>
    %1262 = arith.addf %1258, %1261 : vector<2x256xf32>
    %cst_487 = arith.constant 0.000000e+00 : f32
    %1263 = vector.shape_cast %1253 : vector<1x256xi1> to vector<1x256xi1>
    %1264 = vector.broadcast %1263 : vector<1x256xi1> to vector<2x256xi1>
    %1265 = vector.broadcast %cst_487 : f32 to vector<2x256xf32>
    %1266 = arith.select %1264, %1262, %1265 : vector<2x256xi1>, vector<2x256xf32>
    %1267 = arith.addf %1243, %1266 : vector<2x256xf32>
    %1268 = arith.negf %1267 : vector<2x256xf32>
    %1269 = math.exp %1268 : vector<2x256xf32>
    %cst_488 = arith.constant 1.000000e+00 : f32
    %1270 = vector.broadcast %cst_488 : f32 to vector<2x256xf32>
    %1271 = arith.addf %1270, %1269 : vector<2x256xf32>
    %1272 = arith.divf %1270, %1271 : vector<2x256xf32>
    %1273 = vector.shape_cast %1272 : vector<2x256xf32> to vector<2x1x256xf32>
    %1274 = vector.broadcast %1273 : vector<2x1x256xf32> to vector<2x128x256xf32>
    %1275 = arith.mulf %23, %1274 : vector<2x128x256xf32>
    %c0_489 = arith.constant 0 : index
    %c0_490 = arith.constant 0 : index
    %c0_491 = arith.constant 0 : index
    %1276 = vector.load %arg6[%c0_489, %c0_490, %c0_491] : memref<2x128x256xf32, #tpu.memory_space<vmem>>, vector<2x128x256xf32>
    tpu.vector_store %arg6[%c0_489, %c0_490, %c0_491], %1275 {strides = array<i32>} : memref<2x128x256xf32, #tpu.memory_space<vmem>>, vector<2x128x256xf32>,
    return
  }
  func.func @transform_0(%arg0: i32) -> (i32, i32, i32) {
    %c0_i32 = arith.constant 0 : i32
    %c0_i32_0 = arith.constant 0 : i32
    %c0_i32_1 = arith.constant 0 : i32
    return %arg0, %c0_i32, %c0_i32_0 : i32, i32, i32
  }
  func.func @transform_1(%arg0: i32) -> (i32, i32) {
    %c0_i32 = arith.constant 0 : i32
    %c0_i32_0 = arith.constant 0 : i32
    %c0_i32_1 = arith.constant 0 : i32
    return %c0_i32, %c0_i32_0 : i32, i32
  }
  func.func @transform_2(%arg0: i32) -> (i32, i32) {
    %c0_i32 = arith.constant 0 : i32
    %c0_i32_0 = arith.constant 0 : i32
    %c0_i32_1 = arith.constant 0 : i32
    return %c0_i32, %c0_i32_0 : i32, i32
  }
  func.func @transform_3(%arg0: i32) -> (i32, i32) {
    %c0_i32 = arith.constant 0 : i32
    %c0_i32_0 = arith.constant 0 : i32
    %c0_i32_1 = arith.constant 0 : i32
    return %c0_i32, %c0_i32_0 : i32, i32
  }
  func.func @transform_4(%arg0: i32) -> (i32, i32) {
    %c0_i32 = arith.constant 0 : i32
    %c0_i32_0 = arith.constant 0 : i32
    %c0_i32_1 = arith.constant 0 : i32
    return %c0_i32, %c0_i32_0 : i32, i32
  }
  func.func @transform_5(%arg0: i32) -> (i32, i32, i32) {
    %c0_i32 = arith.constant 0 : i32
    %c0_i32_0 = arith.constant 0 : i32
    %c0_i32_1 = arith.constant 0 : i32
    return %arg0, %c0_i32, %c0_i32_0 : i32, i32, i32
  }
}

</mosaic_0001>

<llo_original>
// kernel: tpu_custom_call.1
$region0: #{tpu_custom_call.1}
  #allocation0 [shape = 'u32[]', space=smem, size = 0x4, offset = 0x4, fixed_abs, tag = 'smem constant byte address 0x4 - core index']
  #allocation1 [shape = 'u32[72,128]{1,0:T(1,128)}', space=vmem, size = 0x9000, scoped, tag = 'internal scratch']
  %s0 = inlined_call_operand.hbm [shape: f32[2,128,256], index: 0, kind: input, shape index: {}]
  %s1 = inlined_call_operand.vmem [shape: f32[128,8], index: 1, kind: input, shape index: {}]
  %s2 = inlined_call_operand.vmem [shape: f32[8,128], index: 2, kind: input, shape index: {}]
  %s3 = inlined_call_operand.vmem [shape: s32[2,256], index: 3, kind: input, shape index: {}]
  %s4 = inlined_call_operand.vmem [shape: f32[2,49], index: 4, kind: input, shape index: {}]
  %s5 = inlined_call_operand.hbm [shape: f32[2,128,256], index: 5, kind: output, shape index: {}]
  %s6 = sld [smem:[#allocation0]]
  $region38: #{tpu_custom_call.1} parent=0
    _
  %s8 = ssub.s32 1, %s6
  %s9 = scalar_select 0, %s8, %s6
  $region1: #{tpu_custom_call.1} parent=0
    #allocation2 [shape = 'u8[262144]{0}', space=vmem, size = 0x40000, scoped, tag = 'input window, operand 0, single buffered']
    #allocation3 [shape = 's32[1]{0}', space=sflag, size = 0x4, scoped, tag = 'scoped memory for tpu_custom_call.1']
    #allocation4 [shape = 's32[1]{0}', space=sflag, size = 0x4, scoped, tag = 'scoped memory for tpu_custom_call.1']
    #allocation5 [shape = 's32[1]{0}', space=sflag, size = 0x4, scoped, tag = 'scoped memory for tpu_custom_call.1']
    #allocation6 [shape = 'u8[1024]{0}', space=smem, size = 0x400, scoped, tag = 'input window, operand 4, single buffered']
    #allocation7 [shape = 'u8[262144]{0}', space=vmem, size = 0x40000, scoped, tag = 'output window, operand 0, single buffered']
    %10 = vsyncpa [#allocation3], 0
    %11 = vsyncpa [#allocation5], 0
    %12 = vsyncpa [#allocation4], 0
    // Predicated region
    $region2: #{tpu_custom_call.1} parent=1 // pred_check
      _
    $region3: #{tpu_custom_call.1} parent=1 // pred_check_branch
      %14 = sbr.rel (0) target = $region5
    $region4: #{tpu_custom_call.1} parent=1 // pred_region
      %16 = vsyncadd [#allocation3], 0
      %s17 = sshll.u32 %s0, 4
      %s18 = int_to_ptr.hbm [resolvable:$true] %s17
      %s19 = sshll.u32 [#allocation2], 4
      %s20 = int_to_ptr.vmem [resolvable:$true] %s19
      %25 = dma.hbm_to_vmem [thread:$0]  %s18, 8192, %s20, [#allocation3], 256, 256, 16
    $region5: #{tpu_custom_call.1} parent=1 // pred_fallthru
      _
    // Predicated region
    $region6: #{tpu_custom_call.1} parent=1 // pred_check
      _
    $region7: #{tpu_custom_call.1} parent=1 // pred_check_branch
      %27 = sbr.rel (0) target = $region9
    $region8: #{tpu_custom_call.1} parent=1 // pred_region
      _
    $region9: #{tpu_custom_call.1} parent=1 // pred_fallthru
      _
    // Predicated region
    $region10: #{tpu_custom_call.1} parent=1 // pred_check
      _
    $region11: #{tpu_custom_call.1} parent=1 // pred_check_branch
      %29 = sbr.rel (0) target = $region13
    $region12: #{tpu_custom_call.1} parent=1 // pred_region
      _
    $region13: #{tpu_custom_call.1} parent=1 // pred_fallthru
      _
    // Predicated region
    $region14: #{tpu_custom_call.1} parent=1 // pred_check
      _
    $region15: #{tpu_custom_call.1} parent=1 // pred_check_branch
      %31 = sbr.rel (0) target = $region17
    $region16: #{tpu_custom_call.1} parent=1 // pred_region
      _
    $region17: #{tpu_custom_call.1} parent=1 // pred_fallthru
      _
    // Predicated region
    $region18: #{tpu_custom_call.1} parent=1 // pred_check
      _
    $region19: #{tpu_custom_call.1} parent=1 // pred_check_branch
      %33 = sbr.rel (0) target = $region21
    $region20: #{tpu_custom_call.1} parent=1 // pred_region
      %35 = vsyncadd [#allocation5], 0
      %s37 = sshll.u32 %s4, 4
      %s38 = int_to_ptr.vmem [resolvable:$true] %s37
      %40 = dma.vmem_to_smem %s38, 32, [#allocation6], [#allocation5]
    $region21: #{tpu_custom_call.1} parent=1 // pred_fallthru
      _
    // Predicated region
    $region22: #{tpu_custom_call.1} parent=1 // pred_check
      _
    $region23: #{tpu_custom_call.1} parent=1 // pred_check_branch
      %42 = sbr.rel (0) target = $region25
    $region24: #{tpu_custom_call.1} parent=1 // pred_region
      %44 = dma.done [#allocation3], 8192
    $region25: #{tpu_custom_call.1} parent=1 // pred_fallthru
      _
    // Predicated region
    $region26: #{tpu_custom_call.1} parent=1 // pred_check
      _
    $region27: #{tpu_custom_call.1} parent=1 // pred_check_branch
      %46 = sbr.rel (0) target = $region29
    $region28: #{tpu_custom_call.1} parent=1 // pred_region
      %48 = dma.done [#allocation5], 32
    $region29: #{tpu_custom_call.1} parent=1 // pred_fallthru
      _
    %49 = sfence
    %v50 = vld [vmem:[#allocation2] sm:$0xff]
    %v51 = vld [vmem:[#allocation2 + $0x8] sm:$0xff]
    %v52 = vld [vmem:[#allocation2 + $0x10] sm:$0xff]
    %v53 = vld [vmem:[#allocation2 + $0x18] sm:$0xff]
    %v54 = vld [vmem:[#allocation2 + $0x20] sm:$0xff]
    %v55 = vld [vmem:[#allocation2 + $0x28] sm:$0xff]
    %v56 = vld [vmem:[#allocation2 + $0x30] sm:$0xff]
    %v57 = vld [vmem:[#allocation2 + $0x38] sm:$0xff]
    %v58 = vld [vmem:[#allocation2 + $0x40] sm:$0xff]
    %v59 = vld [vmem:[#allocation2 + $0x48] sm:$0xff]
    %v60 = vld [vmem:[#allocation2 + $0x50] sm:$0xff]
    %v61 = vld [vmem:[#allocation2 + $0x58] sm:$0xff]
    %v62 = vld [vmem:[#allocation2 + $0x60] sm:$0xff]
    %v63 = vld [vmem:[#allocation2 + $0x68] sm:$0xff]
    %v64 = vld [vmem:[#allocation2 + $0x70] sm:$0xff]
    %v65 = vld [vmem:[#allocation2 + $0x78] sm:$0xff]
    %v66 = vld [vmem:[#allocation2 + $0x80] sm:$0xff]
    %v67 = vld [vmem:[#allocation2 + $0x88] sm:$0xff]
    %v68 = vld [vmem:[#allocation2 + $0x90] sm:$0xff]
    %v69 = vld [vmem:[#allocation2 + $0x98] sm:$0xff]
    %v70 = vld [vmem:[#allocation2 + $0xa0] sm:$0xff]
    %v71 = vld [vmem:[#allocation2 + $0xa8] sm:$0xff]
    %v72 = vld [vmem:[#allocation2 + $0xb0] sm:$0xff]
    %v73 = vld [vmem:[#allocation2 + $0xb8] sm:$0xff]
    %v74 = vld [vmem:[#allocation2 + $0xc0] sm:$0xff]
    %v75 = vld [vmem:[#allocation2 + $0xc8] sm:$0xff]
    %v76 = vld [vmem:[#allocation2 + $0xd0] sm:$0xff]
    %v77 = vld [vmem:[#allocation2 + $0xd8] sm:$0xff]
    %v78 = vld [vmem:[#allocation2 + $0xe0] sm:$0xff]
    %v79 = vld [vmem:[#allocation2 + $0xe8] sm:$0xff]
    %v80 = vld [vmem:[#allocation2 + $0xf0] sm:$0xff]
    %v81 = vld [vmem:[#allocation2 + $0xf8] sm:$0xff]
    %v82 = vld [vmem:[#allocation2 + $0x100] sm:$0xff]
    %v83 = vld [vmem:[#allocation2 + $0x108] sm:$0xff]
    %v84 = vld [vmem:[#allocation2 + $0x110] sm:$0xff]
    %v85 = vld [vmem:[#allocation2 + $0x118] sm:$0xff]
    %v86 = vld [vmem:[#allocation2 + $0x120] sm:$0xff]
    %v87 = vld [vmem:[#allocation2 + $0x128] sm:$0xff]
    %v88 = vld [vmem:[#allocation2 + $0x130] sm:$0xff]
    %v89 = vld [vmem:[#allocation2 + $0x138] sm:$0xff]
    %v90 = vld [vmem:[#allocation2 + $0x140] sm:$0xff]
    %v91 = vld [vmem:[#allocation2 + $0x148] sm:$0xff]
    %v92 = vld [vmem:[#allocation2 + $0x150] sm:$0xff]
    %v93 = vld [vmem:[#allocation2 + $0x158] sm:$0xff]
    %v94 = vld [vmem:[#allocation2 + $0x160] sm:$0xff]
    %v95 = vld [vmem:[#allocation2 + $0x168] sm:$0xff]
    %v96 = vld [vmem:[#allocation2 + $0x170] sm:$0xff]
    %v97 = vld [vmem:[#allocation2 + $0x178] sm:$0xff]
    %v98 = vld [vmem:[#allocation2 + $0x180] sm:$0xff]
    %v99 = vld [vmem:[#allocation2 + $0x188] sm:$0xff]
    %v100 = vld [vmem:[#allocation2 + $0x190] sm:$0xff]
    %v101 = vld [vmem:[#allocation2 + $0x198] sm:$0xff]
    %v102 = vld [vmem:[#allocation2 + $0x1a0] sm:$0xff]
    %v103 = vld [vmem:[#allocation2 + $0x1a8] sm:$0xff]
    %v104 = vld [vmem:[#allocation2 + $0x1b0] sm:$0xff]
    %v105 = vld [vmem:[#allocation2 + $0x1b8] sm:$0xff]
    %v106 = vld [vmem:[#allocation2 + $0x1c0] sm:$0xff]
    %v107 = vld [vmem:[#allocation2 + $0x1c8] sm:$0xff]
    %v108 = vld [vmem:[#allocation2 + $0x1d0] sm:$0xff]
    %v109 = vld [vmem:[#allocation2 + $0x1d8] sm:$0xff]
    %v110 = vld [vmem:[#allocation2 + $0x1e0] sm:$0xff]
    %v111 = vld [vmem:[#allocation2 + $0x1e8] sm:$0xff]
    %v112 = vld [vmem:[#allocation2 + $0x1f0] sm:$0xff]
    %v113 = vld [vmem:[#allocation2 + $0x1f8] sm:$0xff]
    %v114 = vadd.f32 %v50, %v51
    %115 = vadd.xlane.f32.xlu0 %v114
    %v116 = vpop.xlane.xlu0 %115
    %v117 = vadd.f32 %v52, %v53
    %118 = vadd.xlane.f32.xlu0 %v117
    %v119 = vpop.xlane.xlu0 %118
    %v120 = vadd.f32 %v54, %v55
    %121 = vadd.xlane.f32.xlu0 %v120
    %v122 = vpop.xlane.xlu0 %121
    %v123 = vadd.f32 %v56, %v57
    %124 = vadd.xlane.f32.xlu0 %v123
    %v125 = vpop.xlane.xlu0 %124
    %v126 = vadd.f32 %v58, %v59
    %127 = vadd.xlane.f32.xlu0 %v126
    %v128 = vpop.xlane.xlu0 %127
    %v129 = vadd.f32 %v60, %v61
    %130 = vadd.xlane.f32.xlu0 %v129
    %v131 = vpop.xlane.xlu0 %130
    %v132 = vadd.f32 %v62, %v63
    %133 = vadd.xlane.f32.xlu0 %v132
    %v134 = vpop.xlane.xlu0 %133
    %v135 = vadd.f32 %v64, %v65
    %136 = vadd.xlane.f32.xlu0 %v135
    %v137 = vpop.xlane.xlu0 %136
    %v138 = vadd.f32 %v66, %v67
    %139 = vadd.xlane.f32.xlu0 %v138
    %v140 = vpop.xlane.xlu0 %139
    %v141 = vadd.f32 %v68, %v69
    %142 = vadd.xlane.f32.xlu0 %v141
    %v143 = vpop.xlane.xlu0 %142
    %v144 = vadd.f32 %v70, %v71
    %145 = vadd.xlane.f32.xlu0 %v144
    %v146 = vpop.xlane.xlu0 %145
    %v147 = vadd.f32 %v72, %v73
    %148 = vadd.xlane.f32.xlu0 %v147
    %v149 = vpop.xlane.xlu0 %148
    %v150 = vadd.f32 %v74, %v75
    %151 = vadd.xlane.f32.xlu0 %v150
    %v152 = vpop.xlane.xlu0 %151
    %v153 = vadd.f32 %v76, %v77
    %154 = vadd.xlane.f32.xlu0 %v153
    %v155 = vpop.xlane.xlu0 %154
    %v156 = vadd.f32 %v78, %v79
    %157 = vadd.xlane.f32.xlu0 %v156
    %v158 = vpop.xlane.xlu0 %157
    %v159 = vadd.f32 %v80, %v81
    %160 = vadd.xlane.f32.xlu0 %v159
    %v161 = vpop.xlane.xlu0 %160
    %v162 = vadd.f32 %v82, %v83
    %163 = vadd.xlane.f32.xlu0 %v162
    %v164 = vpop.xlane.xlu0 %163
    %v165 = vadd.f32 %v84, %v85
    %166 = vadd.xlane.f32.xlu0 %v165
    %v167 = vpop.xlane.xlu0 %166
    %v168 = vadd.f32 %v86, %v87
    %169 = vadd.xlane.f32.xlu0 %v168
    %v170 = vpop.xlane.xlu0 %169
    %v171 = vadd.f32 %v88, %v89
    %172 = vadd.xlane.f32.xlu0 %v171
    %v173 = vpop.xlane.xlu0 %172
    %v174 = vadd.f32 %v90, %v91
    %175 = vadd.xlane.f32.xlu0 %v174
    %v176 = vpop.xlane.xlu0 %175
    %v177 = vadd.f32 %v92, %v93
    %178 = vadd.xlane.f32.xlu0 %v177
    %v179 = vpop.xlane.xlu0 %178
    %v180 = vadd.f32 %v94, %v95
    %181 = vadd.xlane.f32.xlu0 %v180
    %v182 = vpop.xlane.xlu0 %181
    %v183 = vadd.f32 %v96, %v97
    %184 = vadd.xlane.f32.xlu0 %v183
    %v185 = vpop.xlane.xlu0 %184
    %v186 = vadd.f32 %v98, %v99
    %187 = vadd.xlane.f32.xlu0 %v186
    %v188 = vpop.xlane.xlu0 %187
    %v189 = vadd.f32 %v100, %v101
    %190 = vadd.xlane.f32.xlu0 %v189
    %v191 = vpop.xlane.xlu0 %190
    %v192 = vadd.f32 %v102, %v103
    %193 = vadd.xlane.f32.xlu0 %v192
    %v194 = vpop.xlane.xlu0 %193
    %v195 = vadd.f32 %v104, %v105
    %196 = vadd.xlane.f32.xlu0 %v195
    %v197 = vpop.xlane.xlu0 %196
    %v198 = vadd.f32 %v106, %v107
    %199 = vadd.xlane.f32.xlu0 %v198
    %v200 = vpop.xlane.xlu0 %199
    %v201 = vadd.f32 %v108, %v109
    %202 = vadd.xlane.f32.xlu0 %v201
    %v203 = vpop.xlane.xlu0 %202
    %v204 = vadd.f32 %v110, %v111
    %205 = vadd.xlane.f32.xlu0 %v204
    %v206 = vpop.xlane.xlu0 %205
    %v207 = vadd.f32 %v112, %v113
    %208 = vadd.xlane.f32.xlu0 %v207
    %v209 = vpop.xlane.xlu0 %208
    %v210 = vrcp.pop 256.0
    %v211 = vmul.f32 256.0, %v210
    %v212 = vsub.f32 1.0, %v211
    %v213 = vmul.f32 %v210, %v212
    %v214 = vadd.f32 %v210, %v213
    %vm215 = vweird.f32 %v210
    %v216 = vsel %vm215, %v210, %v214
    %v217 = vmul.f32 %v116, %v216
    %v218 = vmul.f32 %v119, %v216
    %v219 = vmul.f32 %v122, %v216
    %v220 = vmul.f32 %v125, %v216
    %v221 = vmul.f32 %v128, %v216
    %v222 = vmul.f32 %v131, %v216
    %v223 = vmul.f32 %v134, %v216
    %v224 = vmul.f32 %v137, %v216
    %v225 = vmul.f32 %v140, %v216
    %v226 = vmul.f32 %v143, %v216
    %v227 = vmul.f32 %v146, %v216
    %v228 = vmul.f32 %v149, %v216
    %v229 = vmul.f32 %v152, %v216
    %v230 = vmul.f32 %v155, %v216
    %v231 = vmul.f32 %v158, %v216
    %v232 = vmul.f32 %v161, %v216
    %v233 = vmul.f32 %v164, %v216
    %v234 = vmul.f32 %v167, %v216
    %v235 = vmul.f32 %v170, %v216
    %v236 = vmul.f32 %v173, %v216
    %v237 = vmul.f32 %v176, %v216
    %v238 = vmul.f32 %v179, %v216
    %v239 = vmul.f32 %v182, %v216
    %v240 = vmul.f32 %v185, %v216
    %v241 = vmul.f32 %v188, %v216
    %v242 = vmul.f32 %v191, %v216
    %v243 = vmul.f32 %v194, %v216
    %v244 = vmul.f32 %v197, %v216
    %v245 = vmul.f32 %v200, %v216
    %v246 = vmul.f32 %v203, %v216
    %v247 = vmul.f32 %v206, %v216
    %v248 = vmul.f32 %v209, %v216
    %v249 = vmax.f32 %v50, %v51
    %250 = vmax.xlane.f32.xlu0 %v249
    %v251 = vpop.xlane.xlu0 %250
    %v252 = vmax.f32 %v52, %v53
    %253 = vmax.xlane.f32.xlu0 %v252
    %v254 = vpop.xlane.xlu0 %253
    %v255 = vmax.f32 %v54, %v55
    %256 = vmax.xlane.f32.xlu0 %v255
    %v257 = vpop.xlane.xlu0 %256
    %v258 = vmax.f32 %v56, %v57
    %259 = vmax.xlane.f32.xlu0 %v258
    %v260 = vpop.xlane.xlu0 %259
    %v261 = vmax.f32 %v58, %v59
    %262 = vmax.xlane.f32.xlu0 %v261
    %v263 = vpop.xlane.xlu0 %262
    %v264 = vmax.f32 %v60, %v61
    %265 = vmax.xlane.f32.xlu0 %v264
    %v266 = vpop.xlane.xlu0 %265
    %v267 = vmax.f32 %v62, %v63
    %268 = vmax.xlane.f32.xlu0 %v267
    %v269 = vpop.xlane.xlu0 %268
    %v270 = vmax.f32 %v64, %v65
    %271 = vmax.xlane.f32.xlu0 %v270
    %v272 = vpop.xlane.xlu0 %271
    %v273 = vmax.f32 %v66, %v67
    %274 = vmax.xlane.f32.xlu0 %v273
    %v275 = vpop.xlane.xlu0 %274
    %v276 = vmax.f32 %v68, %v69
    %277 = vmax.xlane.f32.xlu0 %v276
    %v278 = vpop.xlane.xlu0 %277
    %v279 = vmax.f32 %v70, %v71
    %280 = vmax.xlane.f32.xlu0 %v279
    %v281 = vpop.xlane.xlu0 %280
    %v282 = vmax.f32 %v72, %v73
    %283 = vmax.xlane.f32.xlu0 %v282
    %v284 = vpop.xlane.xlu0 %283
    %v285 = vmax.f32 %v74, %v75
    %286 = vmax.xlane.f32.xlu0 %v285
    %v287 = vpop.xlane.xlu0 %286
    %v288 = vmax.f32 %v76, %v77
    %289 = vmax.xlane.f32.xlu0 %v288
    %v290 = vpop.xlane.xlu0 %289
    %v291 = vmax.f32 %v78, %v79
    %292 = vmax.xlane.f32.xlu0 %v291
    %v293 = vpop.xlane.xlu0 %292
    %v294 = vmax.f32 %v80, %v81
    %295 = vmax.xlane.f32.xlu0 %v294
    %v296 = vpop.xlane.xlu0 %295
    %v297 = vmax.f32 %v82, %v83
    %298 = vmax.xlane.f32.xlu0 %v297
    %v299 = vpop.xlane.xlu0 %298
    %v300 = vmax.f32 %v84, %v85
    %301 = vmax.xlane.f32.xlu0 %v300
    %v302 = vpop.xlane.xlu0 %301
    %v303 = vmax.f32 %v86, %v87
    %304 = vmax.xlane.f32.xlu0 %v303
    %v305 = vpop.xlane.xlu0 %304
    %v306 = vmax.f32 %v88, %v89
    %307 = vmax.xlane.f32.xlu0 %v306
    %v308 = vpop.xlane.xlu0 %307
    %v309 = vmax.f32 %v90, %v91
    %310 = vmax.xlane.f32.xlu0 %v309
    %v311 = vpop.xlane.xlu0 %310
    %v312 = vmax.f32 %v92, %v93
    %313 = vmax.xlane.f32.xlu0 %v312
    %v314 = vpop.xlane.xlu0 %313
    %v315 = vmax.f32 %v94, %v95
    %316 = vmax.xlane.f32.xlu0 %v315
    %v317 = vpop.xlane.xlu0 %316
    %v318 = vmax.f32 %v96, %v97
    %319 = vmax.xlane.f32.xlu0 %v318
    %v320 = vpop.xlane.xlu0 %319
    %v321 = vmax.f32 %v98, %v99
    %322 = vmax.xlane.f32.xlu0 %v321
    %v323 = vpop.xlane.xlu0 %322
    %v324 = vmax.f32 %v100, %v101
    %325 = vmax.xlane.f32.xlu0 %v324
    %v326 = vpop.xlane.xlu0 %325
    %v327 = vmax.f32 %v102, %v103
    %328 = vmax.xlane.f32.xlu0 %v327
    %v329 = vpop.xlane.xlu0 %328
    %v330 = vmax.f32 %v104, %v105
    %331 = vmax.xlane.f32.xlu0 %v330
    %v332 = vpop.xlane.xlu0 %331
    %v333 = vmax.f32 %v106, %v107
    %334 = vmax.xlane.f32.xlu0 %v333
    %v335 = vpop.xlane.xlu0 %334
    %v336 = vmax.f32 %v108, %v109
    %337 = vmax.xlane.f32.xlu0 %v336
    %v338 = vpop.xlane.xlu0 %337
    %v339 = vmax.f32 %v110, %v111
    %340 = vmax.xlane.f32.xlu0 %v339
    %v341 = vpop.xlane.xlu0 %340
    %v342 = vmax.f32 %v112, %v113
    %343 = vmax.xlane.f32.xlu0 %v342
    %v344 = vpop.xlane.xlu0 %343
    %v345 = vld [vmem:[%s1] sm:$0xff]
    %v346 = vld [vmem:[%s1 + $0x8] sm:$0xff]
    %v347 = vld [vmem:[%s1 + $0x10] sm:$0xff]
    %v348 = vld [vmem:[%s1 + $0x18] sm:$0xff]
    %v349 = vld [vmem:[%s1 + $0x20] sm:$0xff]
    %v350 = vld [vmem:[%s1 + $0x28] sm:$0xff]
    %v351 = vld [vmem:[%s1 + $0x30] sm:$0xff]
    %v352 = vld [vmem:[%s1 + $0x38] sm:$0xff]
    %v353 = vld [vmem:[%s1 + $0x40] sm:$0xff]
    %v354 = vld [vmem:[%s1 + $0x48] sm:$0xff]
    %v355 = vld [vmem:[%s1 + $0x50] sm:$0xff]
    %v356 = vld [vmem:[%s1 + $0x58] sm:$0xff]
    %v357 = vld [vmem:[%s1 + $0x60] sm:$0xff]
    %v358 = vld [vmem:[%s1 + $0x68] sm:$0xff]
    %v359 = vld [vmem:[%s1 + $0x70] sm:$0xff]
    %v360 = vld [vmem:[%s1 + $0x78] sm:$0xff]
    %v361 = vld [vmem:[%s2] sm:$0xff]
    %v394 = vlaneseq
    %v395 = vand.u32 %v394, 127
    %v396 = vperm.slane %v217, %v395
    %v397 = vadd.s32 %v395, 4294967288
    %v398 = vperm.slane %v218, %v397
    %vm399 = vcmask 130112
    %v400 = vsel %vm399, %v398, %v396
    %v401 = vadd.s32 %v395, 4294967280
    %v402 = vperm.slane %v219, %v401
    %vm403 = vcmask 195712
    %v404 = vsel %vm403, %v402, %v400
    %v405 = vadd.s32 %v395, 4294967272
    %v406 = vperm.slane %v220, %v405
    %vm407 = vcmask 261312
    %v408 = vsel %vm407, %v406, %v404
    %v409 = vadd.s32 %v395, 4294967264
    %v410 = vperm.slane %v221, %v409
    %vm411 = vcmask 326912
    %v412 = vsel %vm411, %v410, %v408
    %v413 = vadd.s32 %v395, 4294967256
    %v414 = vperm.slane %v222, %v413
    %vm415 = vcmask 392512
    %v416 = vsel %vm415, %v414, %v412
    %v417 = vadd.s32 %v395, 4294967248
    %v418 = vperm.slane %v223, %v417
    %vm419 = vcmask 458112
    %v420 = vsel %vm419, %v418, %v416
    %v421 = vadd.s32 %v395, 4294967240
    %v422 = vperm.slane %v224, %v421
    %vm423 = vcmask 523712
    %v424 = vsel %vm423, %v422, %v420
    %v425 = vadd.s32 %v395, 4294967232
    %v426 = vperm.slane %v225, %v425
    %vm427 = vcmask 589312
    %v428 = vsel %vm427, %v426, %v424
    %v429 = vadd.s32 %v395, 4294967224
    %v430 = vperm.slane %v226, %v429
    %vm431 = vcmask 654912
    %v432 = vsel %vm431, %v430, %v428
    %v433 = vadd.s32 %v395, 4294967216
    %v434 = vperm.slane %v227, %v433
    %vm435 = vcmask 720512
    %v436 = vsel %vm435, %v434, %v432
    %v437 = vadd.s32 %v395, 4294967208
    %v438 = vperm.slane %v228, %v437
    %vm439 = vcmask 786112
    %v440 = vsel %vm439, %v438, %v436
    %v441 = vadd.s32 %v395, 4294967200
    %v442 = vperm.slane %v229, %v441
    %vm443 = vcmask 851712
    %v444 = vsel %vm443, %v442, %v440
    %v445 = vadd.s32 %v395, 4294967192
    %v446 = vperm.slane %v230, %v445
    %vm447 = vcmask 917312
    %v448 = vsel %vm447, %v446, %v444
    %v449 = vadd.s32 %v395, 4294967184
    %v450 = vperm.slane %v231, %v449
    %vm451 = vcmask 982912
    %v452 = vsel %vm451, %v450, %v448
    %v453 = vadd.s32 %v395, 4294967176
    %v454 = vperm.slane %v232, %v453
    %vm455 = vcmask 1048512
    %v456 = vsel %vm455, %v454, %v452
    %v457 = vperm.slane %v233, %v395
    %v458 = vperm.slane %v234, %v397
    %v459 = vsel %vm399, %v458, %v457
    %v460 = vperm.slane %v235, %v401
    %v461 = vsel %vm403, %v460, %v459
    %v462 = vperm.slane %v236, %v405
    %v463 = vsel %vm407, %v462, %v461
    %v464 = vperm.slane %v237, %v409
    %v465 = vsel %vm411, %v464, %v463
    %v466 = vperm.slane %v238, %v413
    %v467 = vsel %vm415, %v466, %v465
    %v468 = vperm.slane %v239, %v417
    %v469 = vsel %vm419, %v468, %v467
    %v470 = vperm.slane %v240, %v421
    %v471 = vsel %vm423, %v470, %v469
    %v472 = vperm.slane %v241, %v425
    %v473 = vsel %vm427, %v472, %v471
    %v474 = vperm.slane %v242, %v429
    %v475 = vsel %vm431, %v474, %v473
    %v476 = vperm.slane %v243, %v433
    %v477 = vsel %vm435, %v476, %v475
    %v478 = vperm.slane %v244, %v437
    %v479 = vsel %vm439, %v478, %v477
    %v480 = vperm.slane %v245, %v441
    %v481 = vsel %vm443, %v480, %v479
    %v482 = vperm.slane %v246, %v445
    %v483 = vsel %vm447, %v482, %v481
    %v484 = vperm.slane %v247, %v449
    %v485 = vsel %vm451, %v484, %v483
    %v486 = vperm.slane %v248, %v453
    %v487 = vsel %vm455, %v486, %v485
    %vm488 = vcmask 1041409
    %v489 = vsel %vm488, %v487, %v456
    %491 = vmatpush.msra.mxu0 %v360
    %492 = vmatpush.msra.mxu0 %v359
    %493 = vmatpush.msra.mxu0 %v358
    %494 = vmatpush.msra.mxu0 %v357
    %495 = vmatpush.msra.mxu0 %v356
    %496 = vmatpush.msra.mxu0 %v355
    %497 = vmatpush.msra.mxu0 %v354
    %498 = vmatpush.msra.mxu0 %v353
    %499 = vmatpush.msra.mxu0 %v352
    %500 = vmatpush.msra.mxu0 %v351
    %501 = vmatpush.msra.mxu0 %v350
    %502 = vmatpush.msra.mxu0 %v349
    %503 = vmatpush.msra.mxu0 %v348
    %504 = vmatpush.msra.mxu0 %v347
    %505 = vmatpush.msra.mxu0 %v346
    %506 = vmatpush.msra.mxu0 %v345
    %507 = vmatmul.f32.gmra.mxu0 %v489
    %v508 = vpop.f32.mrf.mxu0
    %v509 = vadd.f32 0.0, %v508
    %510 = vdwg.mxu0
    %v511 = vmax.f32 %v509, 0.0
    %v544 = vperm.slane %v251, %v395
    %v545 = vperm.slane %v254, %v397
    %v546 = vsel %vm399, %v545, %v544
    %v547 = vperm.slane %v257, %v401
    %v548 = vsel %vm403, %v547, %v546
    %v549 = vperm.slane %v260, %v405
    %v550 = vsel %vm407, %v549, %v548
    %v551 = vperm.slane %v263, %v409
    %v552 = vsel %vm411, %v551, %v550
    %v553 = vperm.slane %v266, %v413
    %v554 = vsel %vm415, %v553, %v552
    %v555 = vperm.slane %v269, %v417
    %v556 = vsel %vm419, %v555, %v554
    %v557 = vperm.slane %v272, %v421
    %v558 = vsel %vm423, %v557, %v556
    %v559 = vperm.slane %v275, %v425
    %v560 = vsel %vm427, %v559, %v558
    %v561 = vperm.slane %v278, %v429
    %v562 = vsel %vm431, %v561, %v560
    %v563 = vperm.slane %v281, %v433
    %v564 = vsel %vm435, %v563, %v562
    %v565 = vperm.slane %v284, %v437
    %v566 = vsel %vm439, %v565, %v564
    %v567 = vperm.slane %v287, %v441
    %v568 = vsel %vm443, %v567, %v566
    %v569 = vperm.slane %v290, %v445
    %v570 = vsel %vm447, %v569, %v568
    %v571 = vperm.slane %v293, %v449
    %v572 = vsel %vm451, %v571, %v570
    %v573 = vperm.slane %v296, %v453
    %v574 = vsel %vm455, %v573, %v572
    %v575 = vperm.slane %v299, %v395
    %v576 = vperm.slane %v302, %v397
    %v577 = vsel %vm399, %v576, %v575
    %v578 = vperm.slane %v305, %v401
    %v579 = vsel %vm403, %v578, %v577
    %v580 = vperm.slane %v308, %v405
    %v581 = vsel %vm407, %v580, %v579
    %v582 = vperm.slane %v311, %v409
    %v583 = vsel %vm411, %v582, %v581
    %v584 = vperm.slane %v314, %v413
    %v585 = vsel %vm415, %v584, %v583
    %v586 = vperm.slane %v317, %v417
    %v587 = vsel %vm419, %v586, %v585
    %v588 = vperm.slane %v320, %v421
    %v589 = vsel %vm423, %v588, %v587
    %v590 = vperm.slane %v323, %v425
    %v591 = vsel %vm427, %v590, %v589
    %v592 = vperm.slane %v326, %v429
    %v593 = vsel %vm431, %v592, %v591
    %v594 = vperm.slane %v329, %v433
    %v595 = vsel %vm435, %v594, %v593
    %v596 = vperm.slane %v332, %v437
    %v597 = vsel %vm439, %v596, %v595
    %v598 = vperm.slane %v335, %v441
    %v599 = vsel %vm443, %v598, %v597
    %v600 = vperm.slane %v338, %v445
    %v601 = vsel %vm447, %v600, %v599
    %v602 = vperm.slane %v341, %v449
    %v603 = vsel %vm451, %v602, %v601
    %v604 = vperm.slane %v344, %v453
    %v605 = vsel %vm455, %v604, %v603
    %v606 = vsel %vm488, %v605, %v574
    %608 = vmatpush.msra.mxu0 %v360
    %609 = vmatpush.msra.mxu0 %v359
    %610 = vmatpush.msra.mxu0 %v358
    %611 = vmatpush.msra.mxu0 %v357
    %612 = vmatpush.msra.mxu0 %v356
    %613 = vmatpush.msra.mxu0 %v355
    %614 = vmatpush.msra.mxu0 %v354
    %615 = vmatpush.msra.mxu0 %v353
    %616 = vmatpush.msra.mxu0 %v352
    %617 = vmatpush.msra.mxu0 %v351
    %618 = vmatpush.msra.mxu0 %v350
    %619 = vmatpush.msra.mxu0 %v349
    %620 = vmatpush.msra.mxu0 %v348
    %621 = vmatpush.msra.mxu0 %v347
    %622 = vmatpush.msra.mxu0 %v346
    %623 = vmatpush.msra.mxu0 %v345
    %624 = vmatmul.f32.gmra.mxu0 %v606
    %v625 = vpop.f32.mrf.mxu0
    %v626 = vadd.f32 0.0, %v625
    %627 = vdwg.mxu0
    %v628 = vmax.f32 %v626, 0.0
    %vm629 = vcmask 64512
    %v631 = vsel %vm629, %v628, 0
    %633 = vmatpush.msra.mxu0 0.0
    %634 = vmatpush.msra.mxu0 0.0
    %635 = vmatpush.msra.mxu0 0.0
    %636 = vmatpush.msra.mxu0 0.0
    %637 = vmatpush.msra.mxu0 0.0
    %638 = vmatpush.msra.mxu0 0.0
    %639 = vmatpush.msra.mxu0 0.0
    %640 = vmatpush.msra.mxu0 0.0
    %641 = vmatpush.msra.mxu0 0.0
    %642 = vmatpush.msra.mxu0 0.0
    %643 = vmatpush.msra.mxu0 0.0
    %644 = vmatpush.msra.mxu0 0.0
    %645 = vmatpush.msra.mxu0 0.0
    %646 = vmatpush.msra.mxu0 0.0
    %647 = vmatpush.msra.mxu0 0.0
    %648 = vmatpush.msra.mxu0 %v361
    %649 = vmatmul.f32.gmra.mxu0 %v631
    %v650 = vpop.f32.mrf.mxu0
    %v651 = vadd.f32 0.0, %v650
    %652 = vdwg.mxu0
    %v654 = vsel %vm629, %v511, 0
    %656 = vmatpush.msra.mxu0 0.0
    %657 = vmatpush.msra.mxu0 0.0
    %658 = vmatpush.msra.mxu0 0.0
    %659 = vmatpush.msra.mxu0 0.0
    %660 = vmatpush.msra.mxu0 0.0
    %661 = vmatpush.msra.mxu0 0.0
    %662 = vmatpush.msra.mxu0 0.0
    %663 = vmatpush.msra.mxu0 0.0
    %664 = vmatpush.msra.mxu0 0.0
    %665 = vmatpush.msra.mxu0 0.0
    %666 = vmatpush.msra.mxu0 0.0
    %667 = vmatpush.msra.mxu0 0.0
    %668 = vmatpush.msra.mxu0 0.0
    %669 = vmatpush.msra.mxu0 0.0
    %670 = vmatpush.msra.mxu0 0.0
    %671 = vmatpush.msra.mxu0 %v361
    %672 = vmatmul.f32.gmra.mxu0 %v654
    %v673 = vpop.f32.mrf.mxu0
    %v674 = vadd.f32 %v651, %v673
    %675 = vdwg.mxu0
    %v676 = vxor.u32 %v674, 2147483648
    %v677 = vmul.f32 %v676, 1.442695
    %v678 = vpow.pop %v677
    %v679 = vadd.f32 %v678, 1.0
    %v680 = vrcp.pop %v679
    %v681 = vmul.f32 %v679, %v680
    %v682 = vsub.f32 1.0, %v681
    %v683 = vmul.f32 %v680, %v682
    %v684 = vadd.f32 %v680, %v683
    %vm685 = vweird.f32 %v679
    %vm686 = vweird.f32 %v680
    %vm687 = vmor %vm685, %vm686
    %v688 = vsel %vm687, %v680, %v684
    %v689 = vand.u32 2147483647, %v679
    %vm690 = vcmp.eq.f32.partialorder %v689, 8.507059e+37
    %v691 = vand.u32 %v679, 2147483648
    %v692 = vor.u32 1.1754944e-38, %v691
    %v693 = vsel %vm690, %v692, %v688
    %v694 = vmul.f32 1.0, %v693
    %v695 = vperm.slane %v694, 0
    %v696 = vlaneseq
    %v697 = vshrl.u32 %v696, 7
    %699 = vset.pattern.permute.xlu0 %v697
    %700 = vperm.xlu0 %699, %v695
    %v701 = vpop.permute.xlu0 %700
    %v702 = vlaneseq
    %v703 = vshrl.u32 %v702, 7
    %v704 = vadd.s32 %v703, 8
    %705 = vset.pattern.permute.xlu0 %v704
    %706 = vperm.xlu0 %705, %v695
    %v707 = vpop.permute.xlu0 %706
    %v708 = vlaneseq
    %v709 = vshrl.u32 %v708, 7
    %v710 = vadd.s32 %v709, 16
    %711 = vset.pattern.permute.xlu0 %v710
    %712 = vperm.xlu0 %711, %v695
    %v713 = vpop.permute.xlu0 %712
    %v714 = vlaneseq
    %v715 = vshrl.u32 %v714, 7
    %v716 = vadd.s32 %v715, 24
    %717 = vset.pattern.permute.xlu0 %v716
    %718 = vperm.xlu0 %717, %v695
    %v719 = vpop.permute.xlu0 %718
    %v720 = vlaneseq
    %v721 = vshrl.u32 %v720, 7
    %v722 = vadd.s32 %v721, 32
    %723 = vset.pattern.permute.xlu0 %v722
    %724 = vperm.xlu0 %723, %v695
    %v725 = vpop.permute.xlu0 %724
    %v726 = vlaneseq
    %v727 = vshrl.u32 %v726, 7
    %v728 = vadd.s32 %v727, 40
    %729 = vset.pattern.permute.xlu0 %v728
    %730 = vperm.xlu0 %729, %v695
    %v731 = vpop.permute.xlu0 %730
    %v732 = vlaneseq
    %v733 = vshrl.u32 %v732, 7
    %v734 = vadd.s32 %v733, 48
    %735 = vset.pattern.permute.xlu0 %v734
    %736 = vperm.xlu0 %735, %v695
    %v737 = vpop.permute.xlu0 %736
    %v738 = vlaneseq
    %v739 = vshrl.u32 %v738, 7
    %v740 = vadd.s32 %v739, 56
    %741 = vset.pattern.permute.xlu0 %v740
    %742 = vperm.xlu0 %741, %v695
    %v743 = vpop.permute.xlu0 %742
    %v744 = vlaneseq
    %v745 = vshrl.u32 %v744, 7
    %v746 = vadd.s32 %v745, 64
    %747 = vset.pattern.permute.xlu0 %v746
    %748 = vperm.xlu0 %747, %v695
    %v749 = vpop.permute.xlu0 %748
    %v750 = vlaneseq
    %v751 = vshrl.u32 %v750, 7
    %v752 = vadd.s32 %v751, 72
    %753 = vset.pattern.permute.xlu0 %v752
    %754 = vperm.xlu0 %753, %v695
    %v755 = vpop.permute.xlu0 %754
    %v756 = vlaneseq
    %v757 = vshrl.u32 %v756, 7
    %v758 = vadd.s32 %v757, 80
    %759 = vset.pattern.permute.xlu0 %v758
    %760 = vperm.xlu0 %759, %v695
    %v761 = vpop.permute.xlu0 %760
    %v762 = vlaneseq
    %v763 = vshrl.u32 %v762, 7
    %v764 = vadd.s32 %v763, 88
    %765 = vset.pattern.permute.xlu0 %v764
    %766 = vperm.xlu0 %765, %v695
    %v767 = vpop.permute.xlu0 %766
    %v768 = vlaneseq
    %v769 = vshrl.u32 %v768, 7
    %v770 = vadd.s32 %v769, 96
    %771 = vset.pattern.permute.xlu0 %v770
    %772 = vperm.xlu0 %771, %v695
    %v773 = vpop.permute.xlu0 %772
    %v774 = vlaneseq
    %v775 = vshrl.u32 %v774, 7
    %v776 = vadd.s32 %v775, 104
    %777 = vset.pattern.permute.xlu0 %v776
    %778 = vperm.xlu0 %777, %v695
    %v779 = vpop.permute.xlu0 %778
    %v780 = vlaneseq
    %v781 = vshrl.u32 %v780, 7
    %v782 = vadd.s32 %v781, 112
    %783 = vset.pattern.permute.xlu0 %v782
    %784 = vperm.xlu0 %783, %v695
    %v785 = vpop.permute.xlu0 %784
    %v786 = vlaneseq
    %v787 = vshrl.u32 %v786, 7
    %v788 = vadd.s32 %v787, 120
    %789 = vset.pattern.permute.xlu0 %v788
    %790 = vperm.xlu0 %789, %v695
    %v791 = vpop.permute.xlu0 %790
    %v792 = vperm.slane %v694, 1
    %v793 = vlaneseq
    %v794 = vshrl.u32 %v793, 7
    %796 = vset.pattern.permute.xlu0 %v794
    %797 = vperm.xlu0 %796, %v792
    %v798 = vpop.permute.xlu0 %797
    %v799 = vlaneseq
    %v800 = vshrl.u32 %v799, 7
    %v801 = vadd.s32 %v800, 8
    %802 = vset.pattern.permute.xlu0 %v801
    %803 = vperm.xlu0 %802, %v792
    %v804 = vpop.permute.xlu0 %803
    %v805 = vlaneseq
    %v806 = vshrl.u32 %v805, 7
    %v807 = vadd.s32 %v806, 16
    %808 = vset.pattern.permute.xlu0 %v807
    %809 = vperm.xlu0 %808, %v792
    %v810 = vpop.permute.xlu0 %809
    %v811 = vlaneseq
    %v812 = vshrl.u32 %v811, 7
    %v813 = vadd.s32 %v812, 24
    %814 = vset.pattern.permute.xlu0 %v813
    %815 = vperm.xlu0 %814, %v792
    %v816 = vpop.permute.xlu0 %815
    %v817 = vlaneseq
    %v818 = vshrl.u32 %v817, 7
    %v819 = vadd.s32 %v818, 32
    %820 = vset.pattern.permute.xlu0 %v819
    %821 = vperm.xlu0 %820, %v792
    %v822 = vpop.permute.xlu0 %821
    %v823 = vlaneseq
    %v824 = vshrl.u32 %v823, 7
    %v825 = vadd.s32 %v824, 40
    %826 = vset.pattern.permute.xlu0 %v825
    %827 = vperm.xlu0 %826, %v792
    %v828 = vpop.permute.xlu0 %827
    %v829 = vlaneseq
    %v830 = vshrl.u32 %v829, 7
    %v831 = vadd.s32 %v830, 48
    %832 = vset.pattern.permute.xlu0 %v831
    %833 = vperm.xlu0 %832, %v792
    %v834 = vpop.permute.xlu0 %833
    %v835 = vlaneseq
    %v836 = vshrl.u32 %v835, 7
    %v837 = vadd.s32 %v836, 56
    %838 = vset.pattern.permute.xlu0 %v837
    %839 = vperm.xlu0 %838, %v792
    %v840 = vpop.permute.xlu0 %839
    %v841 = vlaneseq
    %v842 = vshrl.u32 %v841, 7
    %v843 = vadd.s32 %v842, 64
    %844 = vset.pattern.permute.xlu0 %v843
    %845 = vperm.xlu0 %844, %v792
    %v846 = vpop.permute.xlu0 %845
    %v847 = vlaneseq
    %v848 = vshrl.u32 %v847, 7
    %v849 = vadd.s32 %v848, 72
    %850 = vset.pattern.permute.xlu0 %v849
    %851 = vperm.xlu0 %850, %v792
    %v852 = vpop.permute.xlu0 %851
    %v853 = vlaneseq
    %v854 = vshrl.u32 %v853, 7
    %v855 = vadd.s32 %v854, 80
    %856 = vset.pattern.permute.xlu0 %v855
    %857 = vperm.xlu0 %856, %v792
    %v858 = vpop.permute.xlu0 %857
    %v859 = vlaneseq
    %v860 = vshrl.u32 %v859, 7
    %v861 = vadd.s32 %v860, 88
    %862 = vset.pattern.permute.xlu0 %v861
    %863 = vperm.xlu0 %862, %v792
    %v864 = vpop.permute.xlu0 %863
    %v865 = vlaneseq
    %v866 = vshrl.u32 %v865, 7
    %v867 = vadd.s32 %v866, 96
    %868 = vset.pattern.permute.xlu0 %v867
    %869 = vperm.xlu0 %868, %v792
    %v870 = vpop.permute.xlu0 %869
    %v871 = vlaneseq
    %v872 = vshrl.u32 %v871, 7
    %v873 = vadd.s32 %v872, 104
    %874 = vset.pattern.permute.xlu0 %v873
    %875 = vperm.xlu0 %874, %v792
    %v876 = vpop.permute.xlu0 %875
    %v877 = vlaneseq
    %v878 = vshrl.u32 %v877, 7
    %v879 = vadd.s32 %v878, 112
    %880 = vset.pattern.permute.xlu0 %v879
    %881 = vperm.xlu0 %880, %v792
    %v882 = vpop.permute.xlu0 %881
    %v883 = vlaneseq
    %v884 = vshrl.u32 %v883, 7
    %v885 = vadd.s32 %v884, 120
    %886 = vset.pattern.permute.xlu0 %v885
    %887 = vperm.xlu0 %886, %v792
    %v888 = vpop.permute.xlu0 %887
    %v889 = vmul.f32 %v50, %v701
    %v890 = vmul.f32 %v51, %v701
    %v891 = vmul.f32 %v52, %v707
    %v892 = vmul.f32 %v53, %v707
    %v893 = vmul.f32 %v54, %v713
    %v894 = vmul.f32 %v55, %v713
    %v895 = vmul.f32 %v56, %v719
    %v896 = vmul.f32 %v57, %v719
    %v897 = vmul.f32 %v58, %v725
    %v898 = vmul.f32 %v59, %v725
    %v899 = vmul.f32 %v60, %v731
    %v900 = vmul.f32 %v61, %v731
    %v901 = vmul.f32 %v62, %v737
    %v902 = vmul.f32 %v63, %v737
    %v903 = vmul.f32 %v64, %v743
    %v904 = vmul.f32 %v65, %v743
    %v905 = vmul.f32 %v66, %v749
    %v906 = vmul.f32 %v67, %v749
    %v907 = vmul.f32 %v68, %v755
    %v908 = vmul.f32 %v69, %v755
    %v909 = vmul.f32 %v70, %v761
    %v910 = vmul.f32 %v71, %v761
    %v911 = vmul.f32 %v72, %v767
    %v912 = vmul.f32 %v73, %v767
    %v913 = vmul.f32 %v74, %v773
    %v914 = vmul.f32 %v75, %v773
    %v915 = vmul.f32 %v76, %v779
    %v916 = vmul.f32 %v77, %v779
    %v917 = vmul.f32 %v78, %v785
    %v918 = vmul.f32 %v79, %v785
    %v919 = vmul.f32 %v80, %v791
    %v920 = vmul.f32 %v81, %v791
    %v921 = vmul.f32 %v82, %v798
    %v922 = vmul.f32 %v83, %v798
    %v923 = vmul.f32 %v84, %v804
    %v924 = vmul.f32 %v85, %v804
    %v925 = vmul.f32 %v86, %v810
    %v926 = vmul.f32 %v87, %v810
    %v927 = vmul.f32 %v88, %v816
    %v928 = vmul.f32 %v89, %v816
    %v929 = vmul.f32 %v90, %v822
    %v930 = vmul.f32 %v91, %v822
    %v931 = vmul.f32 %v92, %v828
    %v932 = vmul.f32 %v93, %v828
    %v933 = vmul.f32 %v94, %v834
    %v934 = vmul.f32 %v95, %v834
    %v935 = vmul.f32 %v96, %v840
    %v936 = vmul.f32 %v97, %v840
    %v937 = vmul.f32 %v98, %v846
    %v938 = vmul.f32 %v99, %v846
    %v939 = vmul.f32 %v100, %v852
    %v940 = vmul.f32 %v101, %v852
    %v941 = vmul.f32 %v102, %v858
    %v942 = vmul.f32 %v103, %v858
    %v943 = vmul.f32 %v104, %v864
    %v944 = vmul.f32 %v105, %v864
    %v945 = vmul.f32 %v106, %v870
    %v946 = vmul.f32 %v107, %v870
    %v947 = vmul.f32 %v108, %v876
    %v948 = vmul.f32 %v109, %v876
    %v949 = vmul.f32 %v110, %v882
    %v950 = vmul.f32 %v111, %v882
    %v951 = vmul.f32 %v112, %v888
    %v952 = vmul.f32 %v113, %v888
    %v953 = vadd.f32 %v889, %v891
    %v954 = vadd.f32 %v953, %v893
    %v955 = vadd.f32 %v954, %v895
    %v956 = vadd.f32 %v955, %v897
    %v957 = vadd.f32 %v956, %v899
    %v958 = vadd.f32 %v957, %v901
    %v959 = vadd.f32 %v958, %v903
    %v960 = vadd.f32 %v959, %v905
    %v961 = vadd.f32 %v960, %v907
    %v962 = vadd.f32 %v961, %v909
    %v963 = vadd.f32 %v962, %v911
    %v964 = vadd.f32 %v963, %v913
    %v965 = vadd.f32 %v964, %v915
    %v966 = vadd.f32 %v965, %v917
    %v967 = vadd.f32 %v966, %v919
    %v968 = vrot.slane %v967, 4
    %v969 = vadd.f32 %v967, %v968
    %v970 = vrot.slane %v969, 2
    %v971 = vadd.f32 %v969, %v970
    %v972 = vrot.slane %v971, 1
    %v973 = vadd.f32 %v971, %v972
    %v974 = vadd.f32 %v890, %v892
    %v975 = vadd.f32 %v974, %v894
    %v976 = vadd.f32 %v975, %v896
    %v977 = vadd.f32 %v976, %v898
    %v978 = vadd.f32 %v977, %v900
    %v979 = vadd.f32 %v978, %v902
    %v980 = vadd.f32 %v979, %v904
    %v981 = vadd.f32 %v980, %v906
    %v982 = vadd.f32 %v981, %v908
    %v983 = vadd.f32 %v982, %v910
    %v984 = vadd.f32 %v983, %v912
    %v985 = vadd.f32 %v984, %v914
    %v986 = vadd.f32 %v985, %v916
    %v987 = vadd.f32 %v986, %v918
    %v988 = vadd.f32 %v987, %v920
    %v989 = vrot.slane %v988, 4
    %v990 = vadd.f32 %v988, %v989
    %v991 = vrot.slane %v990, 2
    %v992 = vadd.f32 %v990, %v991
    %v993 = vrot.slane %v992, 1
    %v994 = vadd.f32 %v992, %v993
    %v995 = vadd.f32 %v921, %v923
    %v996 = vadd.f32 %v995, %v925
    %v997 = vadd.f32 %v996, %v927
    %v998 = vadd.f32 %v997, %v929
    %v999 = vadd.f32 %v998, %v931
    %v1000 = vadd.f32 %v999, %v933
    %v1001 = vadd.f32 %v1000, %v935
    %v1002 = vadd.f32 %v1001, %v937
    %v1003 = vadd.f32 %v1002, %v939
    %v1004 = vadd.f32 %v1003, %v941
    %v1005 = vadd.f32 %v1004, %v943
    %v1006 = vadd.f32 %v1005, %v945
    %v1007 = vadd.f32 %v1006, %v947
    %v1008 = vadd.f32 %v1007, %v949
    %v1009 = vadd.f32 %v1008, %v951
    %v1010 = vrot.slane %v1009, 4
    %v1011 = vadd.f32 %v1009, %v1010
    %v1012 = vrot.slane %v1011, 2
    %v1013 = vadd.f32 %v1011, %v1012
    %v1014 = vrot.slane %v1013, 1
    %v1015 = vadd.f32 %v1013, %v1014
    %v1016 = vadd.f32 %v922, %v924
    %v1017 = vadd.f32 %v1016, %v926
    %v1018 = vadd.f32 %v1017, %v928
    %v1019 = vadd.f32 %v1018, %v930
    %v1020 = vadd.f32 %v1019, %v932
    %v1021 = vadd.f32 %v1020, %v934
    %v1022 = vadd.f32 %v1021, %v936
    %v1023 = vadd.f32 %v1022, %v938
    %v1024 = vadd.f32 %v1023, %v940
    %v1025 = vadd.f32 %v1024, %v942
    %v1026 = vadd.f32 %v1025, %v944
    %v1027 = vadd.f32 %v1026, %v946
    %v1028 = vadd.f32 %v1027, %v948
    %v1029 = vadd.f32 %v1028, %v950
    %v1030 = vadd.f32 %v1029, %v952
    %v1031 = vrot.slane %v1030, 4
    %v1032 = vadd.f32 %v1030, %v1031
    %v1033 = vrot.slane %v1032, 2
    %v1034 = vadd.f32 %v1032, %v1033
    %v1035 = vrot.slane %v1034, 1
    %v1036 = vadd.f32 %v1034, %v1035
    %v1037 = vrcp.pop 128.0
    %v1038 = vmul.f32 128.0, %v1037
    %v1039 = vsub.f32 1.0, %v1038
    %v1040 = vmul.f32 %v1037, %v1039
    %v1041 = vadd.f32 %v1037, %v1040
    %vm1042 = vweird.f32 %v1037
    %v1043 = vsel %vm1042, %v1037, %v1041
    %v1044 = vmul.f32 %v973, %v1043
    %v1045 = vmul.f32 %v994, %v1043
    %v1046 = vmul.f32 %v1015, %v1043
    %v1047 = vmul.f32 %v1036, %v1043
    %v1048 = vmax.f32 %v889, %v891
    %v1049 = vmax.f32 %v1048, %v893
    %v1050 = vmax.f32 %v1049, %v895
    %v1051 = vmax.f32 %v1050, %v897
    %v1052 = vmax.f32 %v1051, %v899
    %v1053 = vmax.f32 %v1052, %v901
    %v1054 = vmax.f32 %v1053, %v903
    %v1055 = vmax.f32 %v1054, %v905
    %v1056 = vmax.f32 %v1055, %v907
    %v1057 = vmax.f32 %v1056, %v909
    %v1058 = vmax.f32 %v1057, %v911
    %v1059 = vmax.f32 %v1058, %v913
    %v1060 = vmax.f32 %v1059, %v915
    %v1061 = vmax.f32 %v1060, %v917
    %v1062 = vmax.f32 %v1061, %v919
    %v1063 = vrot.slane %v1062, 4
    %v1064 = vmax.f32 %v1062, %v1063
    %v1065 = vrot.slane %v1064, 2
    %v1066 = vmax.f32 %v1064, %v1065
    %v1067 = vrot.slane %v1066, 1
    %v1068 = vmax.f32 %v1066, %v1067
    %v1069 = vmax.f32 %v890, %v892
    %v1070 = vmax.f32 %v1069, %v894
    %v1071 = vmax.f32 %v1070, %v896
    %v1072 = vmax.f32 %v1071, %v898
    %v1073 = vmax.f32 %v1072, %v900
    %v1074 = vmax.f32 %v1073, %v902
    %v1075 = vmax.f32 %v1074, %v904
    %v1076 = vmax.f32 %v1075, %v906
    %v1077 = vmax.f32 %v1076, %v908
    %v1078 = vmax.f32 %v1077, %v910
    %v1079 = vmax.f32 %v1078, %v912
    %v1080 = vmax.f32 %v1079, %v914
    %v1081 = vmax.f32 %v1080, %v916
    %v1082 = vmax.f32 %v1081, %v918
    %v1083 = vmax.f32 %v1082, %v920
    %v1084 = vrot.slane %v1083, 4
    %v1085 = vmax.f32 %v1083, %v1084
    %v1086 = vrot.slane %v1085, 2
    %v1087 = vmax.f32 %v1085, %v1086
    %v1088 = vrot.slane %v1087, 1
    %v1089 = vmax.f32 %v1087, %v1088
    %v1090 = vmax.f32 %v921, %v923
    %v1091 = vmax.f32 %v1090, %v925
    %v1092 = vmax.f32 %v1091, %v927
    %v1093 = vmax.f32 %v1092, %v929
    %v1094 = vmax.f32 %v1093, %v931
    %v1095 = vmax.f32 %v1094, %v933
    %v1096 = vmax.f32 %v1095, %v935
    %v1097 = vmax.f32 %v1096, %v937
    %v1098 = vmax.f32 %v1097, %v939
    %v1099 = vmax.f32 %v1098, %v941
    %v1100 = vmax.f32 %v1099, %v943
    %v1101 = vmax.f32 %v1100, %v945
    %v1102 = vmax.f32 %v1101, %v947
    %v1103 = vmax.f32 %v1102, %v949
    %v1104 = vmax.f32 %v1103, %v951
    %v1105 = vrot.slane %v1104, 4
    %v1106 = vmax.f32 %v1104, %v1105
    %v1107 = vrot.slane %v1106, 2
    %v1108 = vmax.f32 %v1106, %v1107
    %v1109 = vrot.slane %v1108, 1
    %v1110 = vmax.f32 %v1108, %v1109
    %v1111 = vmax.f32 %v922, %v924
    %v1112 = vmax.f32 %v1111, %v926
    %v1113 = vmax.f32 %v1112, %v928
    %v1114 = vmax.f32 %v1113, %v930
    %v1115 = vmax.f32 %v1114, %v932
    %v1116 = vmax.f32 %v1115, %v934
    %v1117 = vmax.f32 %v1116, %v936
    %v1118 = vmax.f32 %v1117, %v938
    %v1119 = vmax.f32 %v1118, %v940
    %v1120 = vmax.f32 %v1119, %v942
    %v1121 = vmax.f32 %v1120, %v944
    %v1122 = vmax.f32 %v1121, %v946
    %v1123 = vmax.f32 %v1122, %v948
    %v1124 = vmax.f32 %v1123, %v950
    %v1125 = vmax.f32 %v1124, %v952
    %v1126 = vrot.slane %v1125, 4
    %v1127 = vmax.f32 %v1125, %v1126
    %v1128 = vrot.slane %v1127, 2
    %v1129 = vmax.f32 %v1127, %v1128
    %v1130 = vrot.slane %v1129, 1
    %v1131 = vmax.f32 %v1129, %v1130
    %v1132 = vld [vmem:[%s3] ss:$2 sm:$0x3]
    %s1133 = scalar_lea.vmem %s3, 1
    %v1134 = vld [vmem:[%s1133] ss:$2 sm:$0x3]
    %v1135 = vadd.s32 %v1132, 4294967293
    %vm1136 = vcmp.ge.s32.totalorder %v1135, 0
    %vm1137 = vcmp.lt.s32.totalorder %v1135, 16
    %vm1138 = vmand %vm1136, %vm1137
    %v1139 = vadd.s32 %v1134, 4294967293
    %vm1140 = vcmp.ge.s32.totalorder %v1139, 0
    %vm1141 = vcmp.lt.s32.totalorder %v1139, 16
    %vm1142 = vmand %vm1140, %vm1141
    %vm1143 = vmand %vm1138, %vm1142
    %v1148 = vsel %vm488, %v1046, %v1044
    %v1149 = vsel %vm488, %v1047, %v1045
    %1152 = vrot.lane.b32.xlu0 %v1148, 51
    %v1153 = vpop.permute.xlu0 %1152
    %1154 = vrot.lane.b32.xlu0 %v1149, 51
    %v1155 = vpop.permute.xlu0 %1154
    %vm1156 = vcmp.lt.s32.totalorder %v395, 51
    %v1157 = vsel %vm1156, %v1153, %v1155
    %v1158 = vsel %vm1156, %v1155, %v1153
    %v1163 = vsel %vm488, %v1110, %v1068
    %v1164 = vsel %vm488, %v1131, %v1089
    %1167 = vrot.lane.b32.xlu0 %v1163, 51
    %v1168 = vpop.permute.xlu0 %1167
    %1169 = vrot.lane.b32.xlu0 %v1164, 51
    %v1170 = vpop.permute.xlu0 %1169
    %v1171 = vsel %vm1156, %v1168, %v1170
    %v1172 = vsel %vm1156, %v1170, %v1168
    %s1173 = sld [smem:[#allocation6]]
    %v1174 = vstv %s1173
    %v1175 = vmul.f32 %v1158, %v1174
    %v1176 = vmul.f32 %v1157, %v1174
    %s1177 = sld [smem:[#allocation6 + $0x80]]
    %v1178 = vstv %s1177
    %v1179 = vmul.f32 %v1172, %v1178
    %v1180 = vmul.f32 %v1171, %v1178
    %v1181 = vadd.f32 %v1175, %v1179
    %v1182 = vadd.f32 %v1176, %v1180
    %v1183 = vsel %vm1143, 1, 0
    %v1184 = vperm.slane %v1183, 0
    %v1185 = vperm.slane %v1183, 1
    %vm1186 = vcmp.eq.s32.totalorder %v1184, 1
    %vm1187 = vcmp.eq.s32.totalorder %v1185, 1
    %v1188 = vsel %vm1186, %v1181, 0.0
    %v1189 = vsel %vm1187, %v1182, 0.0
    %v1190 = vadd.f32 %v1188, 0.0
    %v1191 = vadd.f32 %v1189, 0.0
    %v1192 = vadd.s32 %v1134, 4294967294
    %vm1193 = vcmp.ge.s32.totalorder %v1192, 0
    %vm1194 = vcmp.lt.s32.totalorder %v1192, 16
    %vm1195 = vmand %vm1193, %vm1194
    %vm1196 = vmand %vm1138, %vm1195
    %1197 = vrot.lane.b32.xlu0 %v1148, 50
    %v1198 = vpop.permute.xlu0 %1197
    %1199 = vrot.lane.b32.xlu0 %v1149, 50
    %v1200 = vpop.permute.xlu0 %1199
    %vm1201 = vcmp.lt.s32.totalorder %v395, 50
    %v1202 = vsel %vm1201, %v1198, %v1200
    %v1203 = vsel %vm1201, %v1200, %v1198
    %1204 = vrot.lane.b32.xlu0 %v1163, 50
    %v1205 = vpop.permute.xlu0 %1204
    %1206 = vrot.lane.b32.xlu0 %v1164, 50
    %v1207 = vpop.permute.xlu0 %1206
    %v1208 = vsel %vm1201, %v1205, %v1207
    %v1209 = vsel %vm1201, %v1207, %v1205
    %s1210 = sld [smem:[#allocation6 + $0x1]]
    %v1211 = vstv %s1210
    %v1212 = vmul.f32 %v1203, %v1211
    %v1213 = vmul.f32 %v1202, %v1211
    %s1214 = sld [smem:[#allocation6 + $0x81]]
    %v1215 = vstv %s1214
    %v1216 = vmul.f32 %v1209, %v1215
    %v1217 = vmul.f32 %v1208, %v1215
    %v1218 = vadd.f32 %v1212, %v1216
    %v1219 = vadd.f32 %v1213, %v1217
    %v1220 = vsel %vm1196, 1, 0
    %v1221 = vperm.slane %v1220, 0
    %v1222 = vperm.slane %v1220, 1
    %vm1223 = vcmp.eq.s32.totalorder %v1221, 1
    %vm1224 = vcmp.eq.s32.totalorder %v1222, 1
    %v1225 = vsel %vm1223, %v1218, 0.0
    %v1226 = vsel %vm1224, %v1219, 0.0
    %v1227 = vadd.f32 %v1190, %v1225
    %v1228 = vadd.f32 %v1191, %v1226
    %v1229 = vadd.s32 %v1134, 4294967295
    %vm1230 = vcmp.ge.s32.totalorder %v1229, 0
    %vm1231 = vcmp.lt.s32.totalorder %v1229, 16
    %vm1232 = vmand %vm1230, %vm1231
    %vm1233 = vmand %vm1138, %vm1232
    %1234 = vrot.lane.b32.xlu0 %v1148, 49
    %v1235 = vpop.permute.xlu0 %1234
    %1236 = vrot.lane.b32.xlu0 %v1149, 49
    %v1237 = vpop.permute.xlu0 %1236
    %vm1238 = vcmp.lt.s32.totalorder %v395, 49
    %v1239 = vsel %vm1238, %v1235, %v1237
    %v1240 = vsel %vm1238, %v1237, %v1235
    %1241 = vrot.lane.b32.xlu0 %v1163, 49
    %v1242 = vpop.permute.xlu0 %1241
    %1243 = vrot.lane.b32.xlu0 %v1164, 49
    %v1244 = vpop.permute.xlu0 %1243
    %v1245 = vsel %vm1238, %v1242, %v1244
    %v1246 = vsel %vm1238, %v1244, %v1242
    %s1247 = sld [smem:[#allocation6 + $0x2]]
    %v1248 = vstv %s1247
    %v1249 = vmul.f32 %v1240, %v1248
    %v1250 = vmul.f32 %v1239, %v1248
    %s1251 = sld [smem:[#allocation6 + $0x82]]
    %v1252 = vstv %s1251
    %v1253 = vmul.f32 %v1246, %v1252
    %v1254 = vmul.f32 %v1245, %v1252
    %v1255 = vadd.f32 %v1249, %v1253
    %v1256 = vadd.f32 %v1250, %v1254
    %v1257 = vsel %vm1233, 1, 0
    %v1258 = vperm.slane %v1257, 0
    %v1259 = vperm.slane %v1257, 1
    %vm1260 = vcmp.eq.s32.totalorder %v1258, 1
    %vm1261 = vcmp.eq.s32.totalorder %v1259, 1
    %v1262 = vsel %vm1260, %v1255, 0.0
    %v1263 = vsel %vm1261, %v1256, 0.0
    %v1264 = vadd.f32 %v1227, %v1262
    %v1265 = vadd.f32 %v1228, %v1263
    %vm1266 = vcmp.ge.s32.totalorder %v1134, 0
    %vm1267 = vcmp.lt.s32.totalorder %v1134, 16
    %vm1268 = vmand %vm1266, %vm1267
    %vm1269 = vmand %vm1138, %vm1268
    %1270 = vrot.lane.b32.xlu0 %v1148, 48
    %v1271 = vpop.permute.xlu0 %1270
    %1272 = vrot.lane.b32.xlu0 %v1149, 48
    %v1273 = vpop.permute.xlu0 %1272
    %vm1274 = vcmp.lt.s32.totalorder %v395, 48
    %v1275 = vsel %vm1274, %v1271, %v1273
    %v1276 = vsel %vm1274, %v1273, %v1271
    %1277 = vrot.lane.b32.xlu0 %v1163, 48
    %v1278 = vpop.permute.xlu0 %1277
    %1279 = vrot.lane.b32.xlu0 %v1164, 48
    %v1280 = vpop.permute.xlu0 %1279
    %v1281 = vsel %vm1274, %v1278, %v1280
    %v1282 = vsel %vm1274, %v1280, %v1278
    %s1283 = sld [smem:[#allocation6 + $0x3]]
    %v1284 = vstv %s1283
    %v1285 = vmul.f32 %v1276, %v1284
    %v1286 = vmul.f32 %v1275, %v1284
    %s1287 = sld [smem:[#allocation6 + $0x83]]
    %v1288 = vstv %s1287
    %v1289 = vmul.f32 %v1282, %v1288
    %v1290 = vmul.f32 %v1281, %v1288
    %v1291 = vadd.f32 %v1285, %v1289
    %v1292 = vadd.f32 %v1286, %v1290
    %v1293 = vsel %vm1269, 1, 0
    %v1294 = vperm.slane %v1293, 0
    %v1295 = vperm.slane %v1293, 1
    %vm1296 = vcmp.eq.s32.totalorder %v1294, 1
    %vm1297 = vcmp.eq.s32.totalorder %v1295, 1
    %v1298 = vsel %vm1296, %v1291, 0.0
    %v1299 = vsel %vm1297, %v1292, 0.0
    %v1300 = vadd.f32 %v1264, %v1298
    %v1301 = vadd.f32 %v1265, %v1299
    %v1302 = vadd.s32 %v1134, 1
    %vm1303 = vcmp.ge.s32.totalorder %v1302, 0
    %vm1304 = vcmp.lt.s32.totalorder %v1302, 16
    %vm1305 = vmand %vm1303, %vm1304
    %vm1306 = vmand %vm1138, %vm1305
    %1307 = vrot.lane.b32.xlu0 %v1148, 47
    %v1308 = vpop.permute.xlu0 %1307
    %1309 = vrot.lane.b32.xlu0 %v1149, 47
    %v1310 = vpop.permute.xlu0 %1309
    %vm1311 = vcmp.lt.s32.totalorder %v395, 47
    %v1312 = vsel %vm1311, %v1308, %v1310
    %v1313 = vsel %vm1311, %v1310, %v1308
    %1314 = vrot.lane.b32.xlu0 %v1163, 47
    %v1315 = vpop.permute.xlu0 %1314
    %1316 = vrot.lane.b32.xlu0 %v1164, 47
    %v1317 = vpop.permute.xlu0 %1316
    %v1318 = vsel %vm1311, %v1315, %v1317
    %v1319 = vsel %vm1311, %v1317, %v1315
    %s1320 = sld [smem:[#allocation6 + $0x4]]
    %v1321 = vstv %s1320
    %v1322 = vmul.f32 %v1313, %v1321
    %v1323 = vmul.f32 %v1312, %v1321
    %s1324 = sld [smem:[#allocation6 + $0x84]]
    %v1325 = vstv %s1324
    %v1326 = vmul.f32 %v1319, %v1325
    %v1327 = vmul.f32 %v1318, %v1325
    %v1328 = vadd.f32 %v1322, %v1326
    %v1329 = vadd.f32 %v1323, %v1327
    %v1330 = vsel %vm1306, 1, 0
    %v1331 = vperm.slane %v1330, 0
    %v1332 = vperm.slane %v1330, 1
    %vm1333 = vcmp.eq.s32.totalorder %v1331, 1
    %vm1334 = vcmp.eq.s32.totalorder %v1332, 1
    %v1335 = vsel %vm1333, %v1328, 0.0
    %v1336 = vsel %vm1334, %v1329, 0.0
    %v1337 = vadd.f32 %v1300, %v1335
    %v1338 = vadd.f32 %v1301, %v1336
    %v1339 = vadd.s32 %v1134, 2
    %vm1340 = vcmp.ge.s32.totalorder %v1339, 0
    %vm1341 = vcmp.lt.s32.totalorder %v1339, 16
    %vm1342 = vmand %vm1340, %vm1341
    %vm1343 = vmand %vm1138, %vm1342
    %1344 = vrot.lane.b32.xlu0 %v1148, 46
    %v1345 = vpop.permute.xlu0 %1344
    %1346 = vrot.lane.b32.xlu0 %v1149, 46
    %v1347 = vpop.permute.xlu0 %1346
    %vm1348 = vcmp.lt.s32.totalorder %v395, 46
    %v1349 = vsel %vm1348, %v1345, %v1347
    %v1350 = vsel %vm1348, %v1347, %v1345
    %1351 = vrot.lane.b32.xlu0 %v1163, 46
    %v1352 = vpop.permute.xlu0 %1351
    %1353 = vrot.lane.b32.xlu0 %v1164, 46
    %v1354 = vpop.permute.xlu0 %1353
    %v1355 = vsel %vm1348, %v1352, %v1354
    %v1356 = vsel %vm1348, %v1354, %v1352
    %s1357 = sld [smem:[#allocation6 + $0x5]]
    %v1358 = vstv %s1357
    %v1359 = vmul.f32 %v1350, %v1358
    %v1360 = vmul.f32 %v1349, %v1358
    %s1361 = sld [smem:[#allocation6 + $0x85]]
    %v1362 = vstv %s1361
    %v1363 = vmul.f32 %v1356, %v1362
    %v1364 = vmul.f32 %v1355, %v1362
    %v1365 = vadd.f32 %v1359, %v1363
    %v1366 = vadd.f32 %v1360, %v1364
    %v1367 = vsel %vm1343, 1, 0
    %v1368 = vperm.slane %v1367, 0
    %v1369 = vperm.slane %v1367, 1
    %vm1370 = vcmp.eq.s32.totalorder %v1368, 1
    %vm1371 = vcmp.eq.s32.totalorder %v1369, 1
    %v1372 = vsel %vm1370, %v1365, 0.0
    %v1373 = vsel %vm1371, %v1366, 0.0
    %v1374 = vadd.f32 %v1337, %v1372
    %v1375 = vadd.f32 %v1338, %v1373
    %v1376 = vadd.s32 %v1134, 3
    %vm1377 = vcmp.ge.s32.totalorder %v1376, 0
    %vm1378 = vcmp.lt.s32.totalorder %v1376, 16
    %vm1379 = vmand %vm1377, %vm1378
    %vm1380 = vmand %vm1138, %vm1379
    %1381 = vrot.lane.b32.xlu0 %v1148, 45
    %v1382 = vpop.permute.xlu0 %1381
    %1383 = vrot.lane.b32.xlu0 %v1149, 45
    %v1384 = vpop.permute.xlu0 %1383
    %vm1385 = vcmp.lt.s32.totalorder %v395, 45
    %v1386 = vsel %vm1385, %v1382, %v1384
    %v1387 = vsel %vm1385, %v1384, %v1382
    %1388 = vrot.lane.b32.xlu0 %v1163, 45
    %v1389 = vpop.permute.xlu0 %1388
    %1390 = vrot.lane.b32.xlu0 %v1164, 45
    %v1391 = vpop.permute.xlu0 %1390
    %v1392 = vsel %vm1385, %v1389, %v1391
    %v1393 = vsel %vm1385, %v1391, %v1389
    %s1394 = sld [smem:[#allocation6 + $0x6]]
    %v1395 = vstv %s1394
    %v1396 = vmul.f32 %v1387, %v1395
    %v1397 = vmul.f32 %v1386, %v1395
    %s1398 = sld [smem:[#allocation6 + $0x86]]
    %v1399 = vstv %s1398
    %v1400 = vmul.f32 %v1393, %v1399
    %v1401 = vmul.f32 %v1392, %v1399
    %v1402 = vadd.f32 %v1396, %v1400
    %v1403 = vadd.f32 %v1397, %v1401
    %v1404 = vsel %vm1380, 1, 0
    %v1405 = vperm.slane %v1404, 0
    %v1406 = vperm.slane %v1404, 1
    %vm1407 = vcmp.eq.s32.totalorder %v1405, 1
    %vm1408 = vcmp.eq.s32.totalorder %v1406, 1
    %v1409 = vsel %vm1407, %v1402, 0.0
    %v1410 = vsel %vm1408, %v1403, 0.0
    %v1411 = vadd.f32 %v1374, %v1409
    %v1412 = vadd.f32 %v1375, %v1410
    %v1413 = vadd.s32 %v1132, 4294967294
    %vm1414 = vcmp.ge.s32.totalorder %v1413, 0
    %vm1415 = vcmp.lt.s32.totalorder %v1413, 16
    %vm1416 = vmand %vm1414, %vm1415
    %vm1417 = vmand %vm1416, %vm1142
    %1418 = vrot.lane.b32.xlu0 %v1148, 35
    %v1419 = vpop.permute.xlu0 %1418
    %1420 = vrot.lane.b32.xlu0 %v1149, 35
    %v1421 = vpop.permute.xlu0 %1420
    %vm1422 = vcmp.lt.s32.totalorder %v395, 35
    %v1423 = vsel %vm1422, %v1419, %v1421
    %v1424 = vsel %vm1422, %v1421, %v1419
    %1425 = vrot.lane.b32.xlu0 %v1163, 35
    %v1426 = vpop.permute.xlu0 %1425
    %1427 = vrot.lane.b32.xlu0 %v1164, 35
    %v1428 = vpop.permute.xlu0 %1427
    %v1429 = vsel %vm1422, %v1426, %v1428
    %v1430 = vsel %vm1422, %v1428, %v1426
    %s1431 = sld [smem:[#allocation6 + $0x7]]
    %v1432 = vstv %s1431
    %v1433 = vmul.f32 %v1424, %v1432
    %v1434 = vmul.f32 %v1423, %v1432
    %s1435 = sld [smem:[#allocation6 + $0x87]]
    %v1436 = vstv %s1435
    %v1437 = vmul.f32 %v1430, %v1436
    %v1438 = vmul.f32 %v1429, %v1436
    %v1439 = vadd.f32 %v1433, %v1437
    %v1440 = vadd.f32 %v1434, %v1438
    %v1441 = vsel %vm1417, 1, 0
    %v1442 = vperm.slane %v1441, 0
    %v1443 = vperm.slane %v1441, 1
    %vm1444 = vcmp.eq.s32.totalorder %v1442, 1
    %vm1445 = vcmp.eq.s32.totalorder %v1443, 1
    %v1446 = vsel %vm1444, %v1439, 0.0
    %v1447 = vsel %vm1445, %v1440, 0.0
    %v1448 = vadd.f32 %v1411, %v1446
    %v1449 = vadd.f32 %v1412, %v1447
    %vm1450 = vmand %vm1416, %vm1195
    %1451 = vrot.lane.b32.xlu0 %v1148, 34
    %v1452 = vpop.permute.xlu0 %1451
    %1453 = vrot.lane.b32.xlu0 %v1149, 34
    %v1454 = vpop.permute.xlu0 %1453
    %vm1455 = vcmp.lt.s32.totalorder %v395, 34
    %v1456 = vsel %vm1455, %v1452, %v1454
    %v1457 = vsel %vm1455, %v1454, %v1452
    %1458 = vrot.lane.b32.xlu0 %v1163, 34
    %v1459 = vpop.permute.xlu0 %1458
    %1460 = vrot.lane.b32.xlu0 %v1164, 34
    %v1461 = vpop.permute.xlu0 %1460
    %v1462 = vsel %vm1455, %v1459, %v1461
    %v1463 = vsel %vm1455, %v1461, %v1459
    %s1464 = sld [smem:[#allocation6 + $0x8]]
    %v1465 = vstv %s1464
    %v1466 = vmul.f32 %v1457, %v1465
    %v1467 = vmul.f32 %v1456, %v1465
    %s1468 = sld [smem:[#allocation6 + $0x88]]
    %v1469 = vstv %s1468
    %v1470 = vmul.f32 %v1463, %v1469
    %v1471 = vmul.f32 %v1462, %v1469
    %v1472 = vadd.f32 %v1466, %v1470
    %v1473 = vadd.f32 %v1467, %v1471
    %v1474 = vsel %vm1450, 1, 0
    %v1475 = vperm.slane %v1474, 0
    %v1476 = vperm.slane %v1474, 1
    %vm1477 = vcmp.eq.s32.totalorder %v1475, 1
    %vm1478 = vcmp.eq.s32.totalorder %v1476, 1
    %v1479 = vsel %vm1477, %v1472, 0.0
    %v1480 = vsel %vm1478, %v1473, 0.0
    %v1481 = vadd.f32 %v1448, %v1479
    %v1482 = vadd.f32 %v1449, %v1480
    %vm1483 = vmand %vm1416, %vm1232
    %1484 = vrot.lane.b32.xlu0 %v1148, 33
    %v1485 = vpop.permute.xlu0 %1484
    %1486 = vrot.lane.b32.xlu0 %v1149, 33
    %v1487 = vpop.permute.xlu0 %1486
    %vm1488 = vcmp.lt.s32.totalorder %v395, 33
    %v1489 = vsel %vm1488, %v1485, %v1487
    %v1490 = vsel %vm1488, %v1487, %v1485
    %1491 = vrot.lane.b32.xlu0 %v1163, 33
    %v1492 = vpop.permute.xlu0 %1491
    %1493 = vrot.lane.b32.xlu0 %v1164, 33
    %v1494 = vpop.permute.xlu0 %1493
    %v1495 = vsel %vm1488, %v1492, %v1494
    %v1496 = vsel %vm1488, %v1494, %v1492
    %s1497 = sld [smem:[#allocation6 + $0x9]]
    %v1498 = vstv %s1497
    %v1499 = vmul.f32 %v1490, %v1498
    %v1500 = vmul.f32 %v1489, %v1498
    %s1501 = sld [smem:[#allocation6 + $0x89]]
    %v1502 = vstv %s1501
    %v1503 = vmul.f32 %v1496, %v1502
    %v1504 = vmul.f32 %v1495, %v1502
    %v1505 = vadd.f32 %v1499, %v1503
    %v1506 = vadd.f32 %v1500, %v1504
    %v1507 = vsel %vm1483, 1, 0
    %v1508 = vperm.slane %v1507, 0
    %v1509 = vperm.slane %v1507, 1
    %vm1510 = vcmp.eq.s32.totalorder %v1508, 1
    %vm1511 = vcmp.eq.s32.totalorder %v1509, 1
    %v1512 = vsel %vm1510, %v1505, 0.0
    %v1513 = vsel %vm1511, %v1506, 0.0
    %v1514 = vadd.f32 %v1481, %v1512
    %v1515 = vadd.f32 %v1482, %v1513
    %vm1516 = vmand %vm1416, %vm1268
    %1517 = vrot.lane.b32.xlu0 %v1148, 32
    %v1518 = vpop.permute.xlu0 %1517
    %1519 = vrot.lane.b32.xlu0 %v1149, 32
    %v1520 = vpop.permute.xlu0 %1519
    %vm1521 = vcmp.lt.s32.totalorder %v395, 32
    %v1522 = vsel %vm1521, %v1518, %v1520
    %v1523 = vsel %vm1521, %v1520, %v1518
    %1524 = vrot.lane.b32.xlu0 %v1163, 32
    %v1525 = vpop.permute.xlu0 %1524
    %1526 = vrot.lane.b32.xlu0 %v1164, 32
    %v1527 = vpop.permute.xlu0 %1526
    %v1528 = vsel %vm1521, %v1525, %v1527
    %v1529 = vsel %vm1521, %v1527, %v1525
    %s1530 = sld [smem:[#allocation6 + $0xa]]
    %v1531 = vstv %s1530
    %v1532 = vmul.f32 %v1523, %v1531
    %v1533 = vmul.f32 %v1522, %v1531
    %s1534 = sld [smem:[#allocation6 + $0x8a]]
    %v1535 = vstv %s1534
    %v1536 = vmul.f32 %v1529, %v1535
    %v1537 = vmul.f32 %v1528, %v1535
    %v1538 = vadd.f32 %v1532, %v1536
    %v1539 = vadd.f32 %v1533, %v1537
    %v1540 = vsel %vm1516, 1, 0
    %v1541 = vperm.slane %v1540, 0
    %v1542 = vperm.slane %v1540, 1
    %vm1543 = vcmp.eq.s32.totalorder %v1541, 1
    %vm1544 = vcmp.eq.s32.totalorder %v1542, 1
    %v1545 = vsel %vm1543, %v1538, 0.0
    %v1546 = vsel %vm1544, %v1539, 0.0
    %v1547 = vadd.f32 %v1514, %v1545
    %v1548 = vadd.f32 %v1515, %v1546
    %vm1549 = vmand %vm1416, %vm1305
    %1550 = vrot.lane.b32.xlu0 %v1148, 31
    %v1551 = vpop.permute.xlu0 %1550
    %1552 = vrot.lane.b32.xlu0 %v1149, 31
    %v1553 = vpop.permute.xlu0 %1552
    %vm1554 = vcmp.lt.s32.totalorder %v395, 31
    %v1555 = vsel %vm1554, %v1551, %v1553
    %v1556 = vsel %vm1554, %v1553, %v1551
    %1557 = vrot.lane.b32.xlu0 %v1163, 31
    %v1558 = vpop.permute.xlu0 %1557
    %1559 = vrot.lane.b32.xlu0 %v1164, 31
    %v1560 = vpop.permute.xlu0 %1559
    %v1561 = vsel %vm1554, %v1558, %v1560
    %v1562 = vsel %vm1554, %v1560, %v1558
    %s1563 = sld [smem:[#allocation6 + $0xb]]
    %v1564 = vstv %s1563
    %v1565 = vmul.f32 %v1556, %v1564
    %v1566 = vmul.f32 %v1555, %v1564
    %s1567 = sld [smem:[#allocation6 + $0x8b]]
    %v1568 = vstv %s1567
    %v1569 = vmul.f32 %v1562, %v1568
    %v1570 = vmul.f32 %v1561, %v1568
    %v1571 = vadd.f32 %v1565, %v1569
    %v1572 = vadd.f32 %v1566, %v1570
    %v1573 = vsel %vm1549, 1, 0
    %v1574 = vperm.slane %v1573, 0
    %v1575 = vperm.slane %v1573, 1
    %vm1576 = vcmp.eq.s32.totalorder %v1574, 1
    %vm1577 = vcmp.eq.s32.totalorder %v1575, 1
    %v1578 = vsel %vm1576, %v1571, 0.0
    %v1579 = vsel %vm1577, %v1572, 0.0
    %v1580 = vadd.f32 %v1547, %v1578
    %v1581 = vadd.f32 %v1548, %v1579
    %vm1582 = vmand %vm1416, %vm1342
    %1583 = vrot.lane.b32.xlu0 %v1148, 30
    %v1584 = vpop.permute.xlu0 %1583
    %1585 = vrot.lane.b32.xlu0 %v1149, 30
    %v1586 = vpop.permute.xlu0 %1585
    %vm1587 = vcmp.lt.s32.totalorder %v395, 30
    %v1588 = vsel %vm1587, %v1584, %v1586
    %v1589 = vsel %vm1587, %v1586, %v1584
    %1590 = vrot.lane.b32.xlu0 %v1163, 30
    %v1591 = vpop.permute.xlu0 %1590
    %1592 = vrot.lane.b32.xlu0 %v1164, 30
    %v1593 = vpop.permute.xlu0 %1592
    %v1594 = vsel %vm1587, %v1591, %v1593
    %v1595 = vsel %vm1587, %v1593, %v1591
    %s1596 = sld [smem:[#allocation6 + $0xc]]
    %v1597 = vstv %s1596
    %v1598 = vmul.f32 %v1589, %v1597
    %v1599 = vmul.f32 %v1588, %v1597
    %s1600 = sld [smem:[#allocation6 + $0x8c]]
    %v1601 = vstv %s1600
    %v1602 = vmul.f32 %v1595, %v1601
    %v1603 = vmul.f32 %v1594, %v1601
    %v1604 = vadd.f32 %v1598, %v1602
    %v1605 = vadd.f32 %v1599, %v1603
    %v1606 = vsel %vm1582, 1, 0
    %v1607 = vperm.slane %v1606, 0
    %v1608 = vperm.slane %v1606, 1
    %vm1609 = vcmp.eq.s32.totalorder %v1607, 1
    %vm1610 = vcmp.eq.s32.totalorder %v1608, 1
    %v1611 = vsel %vm1609, %v1604, 0.0
    %v1612 = vsel %vm1610, %v1605, 0.0
    %v1613 = vadd.f32 %v1580, %v1611
    %v1614 = vadd.f32 %v1581, %v1612
    %vm1615 = vmand %vm1416, %vm1379
    %1616 = vrot.lane.b32.xlu0 %v1148, 29
    %v1617 = vpop.permute.xlu0 %1616
    %1618 = vrot.lane.b32.xlu0 %v1149, 29
    %v1619 = vpop.permute.xlu0 %1618
    %vm1620 = vcmp.lt.s32.totalorder %v395, 29
    %v1621 = vsel %vm1620, %v1617, %v1619
    %v1622 = vsel %vm1620, %v1619, %v1617
    %1623 = vrot.lane.b32.xlu0 %v1163, 29
    %v1624 = vpop.permute.xlu0 %1623
    %1625 = vrot.lane.b32.xlu0 %v1164, 29
    %v1626 = vpop.permute.xlu0 %1625
    %v1627 = vsel %vm1620, %v1624, %v1626
    %v1628 = vsel %vm1620, %v1626, %v1624
    %s1629 = sld [smem:[#allocation6 + $0xd]]
    %v1630 = vstv %s1629
    %v1631 = vmul.f32 %v1622, %v1630
    %v1632 = vmul.f32 %v1621, %v1630
    %s1633 = sld [smem:[#allocation6 + $0x8d]]
    %v1634 = vstv %s1633
    %v1635 = vmul.f32 %v1628, %v1634
    %v1636 = vmul.f32 %v1627, %v1634
    %v1637 = vadd.f32 %v1631, %v1635
    %v1638 = vadd.f32 %v1632, %v1636
    %v1639 = vsel %vm1615, 1, 0
    %v1640 = vperm.slane %v1639, 0
    %v1641 = vperm.slane %v1639, 1
    %vm1642 = vcmp.eq.s32.totalorder %v1640, 1
    %vm1643 = vcmp.eq.s32.totalorder %v1641, 1
    %v1644 = vsel %vm1642, %v1637, 0.0
    %v1645 = vsel %vm1643, %v1638, 0.0
    %v1646 = vadd.f32 %v1613, %v1644
    %v1647 = vadd.f32 %v1614, %v1645
    %v1648 = vadd.s32 %v1132, 4294967295
    %vm1649 = vcmp.ge.s32.totalorder %v1648, 0
    %vm1650 = vcmp.lt.s32.totalorder %v1648, 16
    %vm1651 = vmand %vm1649, %vm1650
    %vm1652 = vmand %vm1651, %vm1142
    %1653 = vrot.lane.b32.xlu0 %v1148, 19
    %v1654 = vpop.permute.xlu0 %1653
    %1655 = vrot.lane.b32.xlu0 %v1149, 19
    %v1656 = vpop.permute.xlu0 %1655
    %vm1657 = vcmp.lt.s32.totalorder %v395, 19
    %v1658 = vsel %vm1657, %v1654, %v1656
    %v1659 = vsel %vm1657, %v1656, %v1654
    %1660 = vrot.lane.b32.xlu0 %v1163, 19
    %v1661 = vpop.permute.xlu0 %1660
    %1662 = vrot.lane.b32.xlu0 %v1164, 19
    %v1663 = vpop.permute.xlu0 %1662
    %v1664 = vsel %vm1657, %v1661, %v1663
    %v1665 = vsel %vm1657, %v1663, %v1661
    %s1666 = sld [smem:[#allocation6 + $0xe]]
    %v1667 = vstv %s1666
    %v1668 = vmul.f32 %v1659, %v1667
    %v1669 = vmul.f32 %v1658, %v1667
    %s1670 = sld [smem:[#allocation6 + $0x8e]]
    %v1671 = vstv %s1670
    %v1672 = vmul.f32 %v1665, %v1671
    %v1673 = vmul.f32 %v1664, %v1671
    %v1674 = vadd.f32 %v1668, %v1672
    %v1675 = vadd.f32 %v1669, %v1673
    %v1676 = vsel %vm1652, 1, 0
    %v1677 = vperm.slane %v1676, 0
    %v1678 = vperm.slane %v1676, 1
    %vm1679 = vcmp.eq.s32.totalorder %v1677, 1
    %vm1680 = vcmp.eq.s32.totalorder %v1678, 1
    %v1681 = vsel %vm1679, %v1674, 0.0
    %v1682 = vsel %vm1680, %v1675, 0.0
    %v1683 = vadd.f32 %v1646, %v1681
    %v1684 = vadd.f32 %v1647, %v1682
    %vm1685 = vmand %vm1651, %vm1195
    %1686 = vrot.lane.b32.xlu0 %v1148, 18
    %v1687 = vpop.permute.xlu0 %1686
    %1688 = vrot.lane.b32.xlu0 %v1149, 18
    %v1689 = vpop.permute.xlu0 %1688
    %vm1690 = vcmp.lt.s32.totalorder %v395, 18
    %v1691 = vsel %vm1690, %v1687, %v1689
    %v1692 = vsel %vm1690, %v1689, %v1687
    %1693 = vrot.lane.b32.xlu0 %v1163, 18
    %v1694 = vpop.permute.xlu0 %1693
    %1695 = vrot.lane.b32.xlu0 %v1164, 18
    %v1696 = vpop.permute.xlu0 %1695
    %v1697 = vsel %vm1690, %v1694, %v1696
    %v1698 = vsel %vm1690, %v1696, %v1694
    %s1699 = sld [smem:[#allocation6 + $0xf]]
    %v1700 = vstv %s1699
    %v1701 = vmul.f32 %v1692, %v1700
    %v1702 = vmul.f32 %v1691, %v1700
    %s1703 = sld [smem:[#allocation6 + $0x8f]]
    %v1704 = vstv %s1703
    %v1705 = vmul.f32 %v1698, %v1704
    %v1706 = vmul.f32 %v1697, %v1704
    %v1707 = vadd.f32 %v1701, %v1705
    %v1708 = vadd.f32 %v1702, %v1706
    %v1709 = vsel %vm1685, 1, 0
    %v1710 = vperm.slane %v1709, 0
    %v1711 = vperm.slane %v1709, 1
    %vm1712 = vcmp.eq.s32.totalorder %v1710, 1
    %vm1713 = vcmp.eq.s32.totalorder %v1711, 1
    %v1714 = vsel %vm1712, %v1707, 0.0
    %v1715 = vsel %vm1713, %v1708, 0.0
    %v1716 = vadd.f32 %v1683, %v1714
    %v1717 = vadd.f32 %v1684, %v1715
    %vm1718 = vmand %vm1651, %vm1232
    %1719 = vrot.lane.b32.xlu0 %v1148, 17
    %v1720 = vpop.permute.xlu0 %1719
    %1721 = vrot.lane.b32.xlu0 %v1149, 17
    %v1722 = vpop.permute.xlu0 %1721
    %vm1723 = vcmp.lt.s32.totalorder %v395, 17
    %v1724 = vsel %vm1723, %v1720, %v1722
    %v1725 = vsel %vm1723, %v1722, %v1720
    %1726 = vrot.lane.b32.xlu0 %v1163, 17
    %v1727 = vpop.permute.xlu0 %1726
    %1728 = vrot.lane.b32.xlu0 %v1164, 17
    %v1729 = vpop.permute.xlu0 %1728
    %v1730 = vsel %vm1723, %v1727, %v1729
    %v1731 = vsel %vm1723, %v1729, %v1727
    %s1732 = sld [smem:[#allocation6 + $0x10]]
    %v1733 = vstv %s1732
    %v1734 = vmul.f32 %v1725, %v1733
    %v1735 = vmul.f32 %v1724, %v1733
    %s1736 = sld [smem:[#allocation6 + $0x90]]
    %v1737 = vstv %s1736
    %v1738 = vmul.f32 %v1731, %v1737
    %v1739 = vmul.f32 %v1730, %v1737
    %v1740 = vadd.f32 %v1734, %v1738
    %v1741 = vadd.f32 %v1735, %v1739
    %v1742 = vsel %vm1718, 1, 0
    %v1743 = vperm.slane %v1742, 0
    %v1744 = vperm.slane %v1742, 1
    %vm1745 = vcmp.eq.s32.totalorder %v1743, 1
    %vm1746 = vcmp.eq.s32.totalorder %v1744, 1
    %v1747 = vsel %vm1745, %v1740, 0.0
    %v1748 = vsel %vm1746, %v1741, 0.0
    %v1749 = vadd.f32 %v1716, %v1747
    %v1750 = vadd.f32 %v1717, %v1748
    %vm1751 = vmand %vm1651, %vm1268
    %1752 = vrot.lane.b32.xlu0 %v1148, 16
    %v1753 = vpop.permute.xlu0 %1752
    %1754 = vrot.lane.b32.xlu0 %v1149, 16
    %v1755 = vpop.permute.xlu0 %1754
    %vm1756 = vcmp.lt.s32.totalorder %v395, 16
    %v1757 = vsel %vm1756, %v1753, %v1755
    %v1758 = vsel %vm1756, %v1755, %v1753
    %1759 = vrot.lane.b32.xlu0 %v1163, 16
    %v1760 = vpop.permute.xlu0 %1759
    %1761 = vrot.lane.b32.xlu0 %v1164, 16
    %v1762 = vpop.permute.xlu0 %1761
    %v1763 = vsel %vm1756, %v1760, %v1762
    %v1764 = vsel %vm1756, %v1762, %v1760
    %s1765 = sld [smem:[#allocation6 + $0x11]]
    %v1766 = vstv %s1765
    %v1767 = vmul.f32 %v1758, %v1766
    %v1768 = vmul.f32 %v1757, %v1766
    %s1769 = sld [smem:[#allocation6 + $0x91]]
    %v1770 = vstv %s1769
    %v1771 = vmul.f32 %v1764, %v1770
    %v1772 = vmul.f32 %v1763, %v1770
    %v1773 = vadd.f32 %v1767, %v1771
    %v1774 = vadd.f32 %v1768, %v1772
    %v1775 = vsel %vm1751, 1, 0
    %v1776 = vperm.slane %v1775, 0
    %v1777 = vperm.slane %v1775, 1
    %vm1778 = vcmp.eq.s32.totalorder %v1776, 1
    %vm1779 = vcmp.eq.s32.totalorder %v1777, 1
    %v1780 = vsel %vm1778, %v1773, 0.0
    %v1781 = vsel %vm1779, %v1774, 0.0
    %v1782 = vadd.f32 %v1749, %v1780
    %v1783 = vadd.f32 %v1750, %v1781
    %vm1784 = vmand %vm1651, %vm1305
    %1785 = vrot.lane.b32.xlu0 %v1148, 15
    %v1786 = vpop.permute.xlu0 %1785
    %1787 = vrot.lane.b32.xlu0 %v1149, 15
    %v1788 = vpop.permute.xlu0 %1787
    %vm1789 = vcmp.lt.s32.totalorder %v395, 15
    %v1790 = vsel %vm1789, %v1786, %v1788
    %v1791 = vsel %vm1789, %v1788, %v1786
    %1792 = vrot.lane.b32.xlu0 %v1163, 15
    %v1793 = vpop.permute.xlu0 %1792
    %1794 = vrot.lane.b32.xlu0 %v1164, 15
    %v1795 = vpop.permute.xlu0 %1794
    %v1796 = vsel %vm1789, %v1793, %v1795
    %v1797 = vsel %vm1789, %v1795, %v1793
    %s1798 = sld [smem:[#allocation6 + $0x12]]
    %v1799 = vstv %s1798
    %v1800 = vmul.f32 %v1791, %v1799
    %v1801 = vmul.f32 %v1790, %v1799
    %s1802 = sld [smem:[#allocation6 + $0x92]]
    %v1803 = vstv %s1802
    %v1804 = vmul.f32 %v1797, %v1803
    %v1805 = vmul.f32 %v1796, %v1803
    %v1806 = vadd.f32 %v1800, %v1804
    %v1807 = vadd.f32 %v1801, %v1805
    %v1808 = vsel %vm1784, 1, 0
    %v1809 = vperm.slane %v1808, 0
    %v1810 = vperm.slane %v1808, 1
    %vm1811 = vcmp.eq.s32.totalorder %v1809, 1
    %vm1812 = vcmp.eq.s32.totalorder %v1810, 1
    %v1813 = vsel %vm1811, %v1806, 0.0
    %v1814 = vsel %vm1812, %v1807, 0.0
    %v1815 = vadd.f32 %v1782, %v1813
    %v1816 = vadd.f32 %v1783, %v1814
    %vm1817 = vmand %vm1651, %vm1342
    %1818 = vrot.lane.b32.xlu0 %v1148, 14
    %v1819 = vpop.permute.xlu0 %1818
    %1820 = vrot.lane.b32.xlu0 %v1149, 14
    %v1821 = vpop.permute.xlu0 %1820
    %vm1822 = vcmp.lt.s32.totalorder %v395, 14
    %v1823 = vsel %vm1822, %v1819, %v1821
    %v1824 = vsel %vm1822, %v1821, %v1819
    %1825 = vrot.lane.b32.xlu0 %v1163, 14
    %v1826 = vpop.permute.xlu0 %1825
    %1827 = vrot.lane.b32.xlu0 %v1164, 14
    %v1828 = vpop.permute.xlu0 %1827
    %v1829 = vsel %vm1822, %v1826, %v1828
    %v1830 = vsel %vm1822, %v1828, %v1826
    %s1831 = sld [smem:[#allocation6 + $0x13]]
    %v1832 = vstv %s1831
    %v1833 = vmul.f32 %v1824, %v1832
    %v1834 = vmul.f32 %v1823, %v1832
    %s1835 = sld [smem:[#allocation6 + $0x93]]
    %v1836 = vstv %s1835
    %v1837 = vmul.f32 %v1830, %v1836
    %v1838 = vmul.f32 %v1829, %v1836
    %v1839 = vadd.f32 %v1833, %v1837
    %v1840 = vadd.f32 %v1834, %v1838
    %v1841 = vsel %vm1817, 1, 0
    %v1842 = vperm.slane %v1841, 0
    %v1843 = vperm.slane %v1841, 1
    %vm1844 = vcmp.eq.s32.totalorder %v1842, 1
    %vm1845 = vcmp.eq.s32.totalorder %v1843, 1
    %v1846 = vsel %vm1844, %v1839, 0.0
    %v1847 = vsel %vm1845, %v1840, 0.0
    %v1848 = vadd.f32 %v1815, %v1846
    %v1849 = vadd.f32 %v1816, %v1847
    %vm1850 = vmand %vm1651, %vm1379
    %1851 = vrot.lane.b32.xlu0 %v1148, 13
    %v1852 = vpop.permute.xlu0 %1851
    %1853 = vrot.lane.b32.xlu0 %v1149, 13
    %v1854 = vpop.permute.xlu0 %1853
    %vm1855 = vcmp.lt.s32.totalorder %v395, 13
    %v1856 = vsel %vm1855, %v1852, %v1854
    %v1857 = vsel %vm1855, %v1854, %v1852
    %1858 = vrot.lane.b32.xlu0 %v1163, 13
    %v1859 = vpop.permute.xlu0 %1858
    %1860 = vrot.lane.b32.xlu0 %v1164, 13
    %v1861 = vpop.permute.xlu0 %1860
    %v1862 = vsel %vm1855, %v1859, %v1861
    %v1863 = vsel %vm1855, %v1861, %v1859
    %s1864 = sld [smem:[#allocation6 + $0x14]]
    %v1865 = vstv %s1864
    %v1866 = vmul.f32 %v1857, %v1865
    %v1867 = vmul.f32 %v1856, %v1865
    %s1868 = sld [smem:[#allocation6 + $0x94]]
    %v1869 = vstv %s1868
    %v1870 = vmul.f32 %v1863, %v1869
    %v1871 = vmul.f32 %v1862, %v1869
    %v1872 = vadd.f32 %v1866, %v1870
    %v1873 = vadd.f32 %v1867, %v1871
    %v1874 = vsel %vm1850, 1, 0
    %v1875 = vperm.slane %v1874, 0
    %v1876 = vperm.slane %v1874, 1
    %vm1877 = vcmp.eq.s32.totalorder %v1875, 1
    %vm1878 = vcmp.eq.s32.totalorder %v1876, 1
    %v1879 = vsel %vm1877, %v1872, 0.0
    %v1880 = vsel %vm1878, %v1873, 0.0
    %v1881 = vadd.f32 %v1848, %v1879
    %v1882 = vadd.f32 %v1849, %v1880
    %vm1883 = vcmp.ge.s32.totalorder %v1132, 0
    %vm1884 = vcmp.lt.s32.totalorder %v1132, 16
    %vm1885 = vmand %vm1883, %vm1884
    %vm1886 = vmand %vm1885, %vm1142
    %1887 = vrot.lane.b32.xlu0 %v1148, 3
    %v1888 = vpop.permute.xlu0 %1887
    %1889 = vrot.lane.b32.xlu0 %v1149, 3
    %v1890 = vpop.permute.xlu0 %1889
    %vm1891 = vcmp.lt.s32.totalorder %v395, 3
    %v1892 = vsel %vm1891, %v1888, %v1890
    %v1893 = vsel %vm1891, %v1890, %v1888
    %1894 = vrot.lane.b32.xlu0 %v1163, 3
    %v1895 = vpop.permute.xlu0 %1894
    %1896 = vrot.lane.b32.xlu0 %v1164, 3
    %v1897 = vpop.permute.xlu0 %1896
    %v1898 = vsel %vm1891, %v1895, %v1897
    %v1899 = vsel %vm1891, %v1897, %v1895
    %s1900 = sld [smem:[#allocation6 + $0x15]]
    %v1901 = vstv %s1900
    %v1902 = vmul.f32 %v1893, %v1901
    %v1903 = vmul.f32 %v1892, %v1901
    %s1904 = sld [smem:[#allocation6 + $0x95]]
    %v1905 = vstv %s1904
    %v1906 = vmul.f32 %v1899, %v1905
    %v1907 = vmul.f32 %v1898, %v1905
    %v1908 = vadd.f32 %v1902, %v1906
    %v1909 = vadd.f32 %v1903, %v1907
    %v1910 = vsel %vm1886, 1, 0
    %v1911 = vperm.slane %v1910, 0
    %v1912 = vperm.slane %v1910, 1
    %vm1913 = vcmp.eq.s32.totalorder %v1911, 1
    %vm1914 = vcmp.eq.s32.totalorder %v1912, 1
    %v1915 = vsel %vm1913, %v1908, 0.0
    %v1916 = vsel %vm1914, %v1909, 0.0
    %v1917 = vadd.f32 %v1881, %v1915
    %v1918 = vadd.f32 %v1882, %v1916
    %vm1919 = vmand %vm1885, %vm1195
    %1920 = vrot.lane.b32.xlu0 %v1148, 2
    %v1921 = vpop.permute.xlu0 %1920
    %1922 = vrot.lane.b32.xlu0 %v1149, 2
    %v1923 = vpop.permute.xlu0 %1922
    %vm1924 = vcmp.lt.s32.totalorder %v395, 2
    %v1925 = vsel %vm1924, %v1921, %v1923
    %v1926 = vsel %vm1924, %v1923, %v1921
    %1927 = vrot.lane.b32.xlu0 %v1163, 2
    %v1928 = vpop.permute.xlu0 %1927
    %1929 = vrot.lane.b32.xlu0 %v1164, 2
    %v1930 = vpop.permute.xlu0 %1929
    %v1931 = vsel %vm1924, %v1928, %v1930
    %v1932 = vsel %vm1924, %v1930, %v1928
    %s1933 = sld [smem:[#allocation6 + $0x16]]
    %v1934 = vstv %s1933
    %v1935 = vmul.f32 %v1926, %v1934
    %v1936 = vmul.f32 %v1925, %v1934
    %s1937 = sld [smem:[#allocation6 + $0x96]]
    %v1938 = vstv %s1937
    %v1939 = vmul.f32 %v1932, %v1938
    %v1940 = vmul.f32 %v1931, %v1938
    %v1941 = vadd.f32 %v1935, %v1939
    %v1942 = vadd.f32 %v1936, %v1940
    %v1943 = vsel %vm1919, 1, 0
    %v1944 = vperm.slane %v1943, 0
    %v1945 = vperm.slane %v1943, 1
    %vm1946 = vcmp.eq.s32.totalorder %v1944, 1
    %vm1947 = vcmp.eq.s32.totalorder %v1945, 1
    %v1948 = vsel %vm1946, %v1941, 0.0
    %v1949 = vsel %vm1947, %v1942, 0.0
    %v1950 = vadd.f32 %v1917, %v1948
    %v1951 = vadd.f32 %v1918, %v1949
    %vm1952 = vmand %vm1885, %vm1232
    %1953 = vrot.lane.b32.xlu0 %v1148, 1
    %v1954 = vpop.permute.xlu0 %1953
    %1955 = vrot.lane.b32.xlu0 %v1149, 1
    %v1956 = vpop.permute.xlu0 %1955
    %vm1957 = vcmp.lt.s32.totalorder %v395, 1
    %v1958 = vsel %vm1957, %v1954, %v1956
    %v1959 = vsel %vm1957, %v1956, %v1954
    %1960 = vrot.lane.b32.xlu0 %v1163, 1
    %v1961 = vpop.permute.xlu0 %1960
    %1962 = vrot.lane.b32.xlu0 %v1164, 1
    %v1963 = vpop.permute.xlu0 %1962
    %v1964 = vsel %vm1957, %v1961, %v1963
    %v1965 = vsel %vm1957, %v1963, %v1961
    %s1966 = sld [smem:[#allocation6 + $0x17]]
    %v1967 = vstv %s1966
    %v1968 = vmul.f32 %v1959, %v1967
    %v1969 = vmul.f32 %v1958, %v1967
    %s1970 = sld [smem:[#allocation6 + $0x97]]
    %v1971 = vstv %s1970
    %v1972 = vmul.f32 %v1965, %v1971
    %v1973 = vmul.f32 %v1964, %v1971
    %v1974 = vadd.f32 %v1968, %v1972
    %v1975 = vadd.f32 %v1969, %v1973
    %v1976 = vsel %vm1952, 1, 0
    %v1977 = vperm.slane %v1976, 0
    %v1978 = vperm.slane %v1976, 1
    %vm1979 = vcmp.eq.s32.totalorder %v1977, 1
    %vm1980 = vcmp.eq.s32.totalorder %v1978, 1
    %v1981 = vsel %vm1979, %v1974, 0.0
    %v1982 = vsel %vm1980, %v1975, 0.0
    %v1983 = vadd.f32 %v1950, %v1981
    %v1984 = vadd.f32 %v1951, %v1982
    %vm1985 = vmand %vm1885, %vm1268
    %s1986 = sld [smem:[#allocation6 + $0x18]]
    %v1987 = vstv %s1986
    %v1988 = vmul.f32 %v1044, %v1987
    %v1989 = vmul.f32 %v1045, %v1987
    %v1990 = vmul.f32 %v1046, %v1987
    %v1991 = vmul.f32 %v1047, %v1987
    %s1992 = sld [smem:[#allocation6 + $0x98]]
    %v1993 = vstv %s1992
    %v1994 = vmul.f32 %v1068, %v1993
    %v1995 = vmul.f32 %v1089, %v1993
    %v1996 = vmul.f32 %v1110, %v1993
    %v1997 = vmul.f32 %v1131, %v1993
    %v1998 = vadd.f32 %v1988, %v1994
    %v1999 = vadd.f32 %v1989, %v1995
    %v2000 = vadd.f32 %v1990, %v1996
    %v2001 = vadd.f32 %v1991, %v1997
    %v2002 = vsel %vm1985, 1, 0
    %v2003 = vperm.slane %v2002, 0
    %v2004 = vperm.slane %v2002, 1
    %vm2005 = vcmp.eq.s32.totalorder %v2003, 1
    %vm2006 = vcmp.eq.s32.totalorder %v2004, 1
    %v2011 = vsel %vm488, %v2000, %v1998
    %v2012 = vsel %vm488, %v2001, %v1999
    %v2015 = vsel %vm2005, %v2011, 0.0
    %v2016 = vsel %vm2006, %v2012, 0.0
    %v2017 = vadd.f32 %v1983, %v2015
    %v2018 = vadd.f32 %v1984, %v2016
    %vm2019 = vmand %vm1885, %vm1305
    %2020 = vrot.lane.b32.xlu0 %v1148, 127
    %v2021 = vpop.permute.xlu0 %2020
    %2022 = vrot.lane.b32.xlu0 %v1149, 127
    %v2023 = vpop.permute.xlu0 %2022
    %vm2024 = vcmp.lt.s32.totalorder %v395, 127
    %v2025 = vsel %vm2024, %v2021, %v2023
    %v2026 = vsel %vm2024, %v2023, %v2021
    %2027 = vrot.lane.b32.xlu0 %v1163, 127
    %v2028 = vpop.permute.xlu0 %2027
    %2029 = vrot.lane.b32.xlu0 %v1164, 127
    %v2030 = vpop.permute.xlu0 %2029
    %v2031 = vsel %vm2024, %v2028, %v2030
    %v2032 = vsel %vm2024, %v2030, %v2028
    %s2033 = sld [smem:[#allocation6 + $0x19]]
    %v2034 = vstv %s2033
    %v2035 = vmul.f32 %v2025, %v2034
    %v2036 = vmul.f32 %v2026, %v2034
    %s2037 = sld [smem:[#allocation6 + $0x99]]
    %v2038 = vstv %s2037
    %v2039 = vmul.f32 %v2031, %v2038
    %v2040 = vmul.f32 %v2032, %v2038
    %v2041 = vadd.f32 %v2035, %v2039
    %v2042 = vadd.f32 %v2036, %v2040
    %v2043 = vsel %vm2019, 1, 0
    %v2044 = vperm.slane %v2043, 0
    %v2045 = vperm.slane %v2043, 1
    %vm2046 = vcmp.eq.s32.totalorder %v2044, 1
    %vm2047 = vcmp.eq.s32.totalorder %v2045, 1
    %v2048 = vsel %vm2046, %v2041, 0.0
    %v2049 = vsel %vm2047, %v2042, 0.0
    %v2050 = vadd.f32 %v2017, %v2048
    %v2051 = vadd.f32 %v2018, %v2049
    %vm2052 = vmand %vm1885, %vm1342
    %2053 = vrot.lane.b32.xlu0 %v1148, 126
    %v2054 = vpop.permute.xlu0 %2053
    %2055 = vrot.lane.b32.xlu0 %v1149, 126
    %v2056 = vpop.permute.xlu0 %2055
    %vm2057 = vcmp.lt.s32.totalorder %v395, 126
    %v2058 = vsel %vm2057, %v2054, %v2056
    %v2059 = vsel %vm2057, %v2056, %v2054
    %2060 = vrot.lane.b32.xlu0 %v1163, 126
    %v2061 = vpop.permute.xlu0 %2060
    %2062 = vrot.lane.b32.xlu0 %v1164, 126
    %v2063 = vpop.permute.xlu0 %2062
    %v2064 = vsel %vm2057, %v2061, %v2063
    %v2065 = vsel %vm2057, %v2063, %v2061
    %s2066 = sld [smem:[#allocation6 + $0x1a]]
    %v2067 = vstv %s2066
    %v2068 = vmul.f32 %v2058, %v2067
    %v2069 = vmul.f32 %v2059, %v2067
    %s2070 = sld [smem:[#allocation6 + $0x9a]]
    %v2071 = vstv %s2070
    %v2072 = vmul.f32 %v2064, %v2071
    %v2073 = vmul.f32 %v2065, %v2071
    %v2074 = vadd.f32 %v2068, %v2072
    %v2075 = vadd.f32 %v2069, %v2073
    %v2076 = vsel %vm2052, 1, 0
    %v2077 = vperm.slane %v2076, 0
    %v2078 = vperm.slane %v2076, 1
    %vm2079 = vcmp.eq.s32.totalorder %v2077, 1
    %vm2080 = vcmp.eq.s32.totalorder %v2078, 1
    %v2081 = vsel %vm2079, %v2074, 0.0
    %v2082 = vsel %vm2080, %v2075, 0.0
    %v2083 = vadd.f32 %v2050, %v2081
    %v2084 = vadd.f32 %v2051, %v2082
    %vm2085 = vmand %vm1885, %vm1379
    %2086 = vrot.lane.b32.xlu0 %v1148, 125
    %v2087 = vpop.permute.xlu0 %2086
    %2088 = vrot.lane.b32.xlu0 %v1149, 125
    %v2089 = vpop.permute.xlu0 %2088
    %vm2090 = vcmp.lt.s32.totalorder %v395, 125
    %v2091 = vsel %vm2090, %v2087, %v2089
    %v2092 = vsel %vm2090, %v2089, %v2087
    %2093 = vrot.lane.b32.xlu0 %v1163, 125
    %v2094 = vpop.permute.xlu0 %2093
    %2095 = vrot.lane.b32.xlu0 %v1164, 125
    %v2096 = vpop.permute.xlu0 %2095
    %v2097 = vsel %vm2090, %v2094, %v2096
    %v2098 = vsel %vm2090, %v2096, %v2094
    %s2099 = sld [smem:[#allocation6 + $0x1b]]
    %v2100 = vstv %s2099
    %v2101 = vmul.f32 %v2091, %v2100
    %v2102 = vmul.f32 %v2092, %v2100
    %s2103 = sld [smem:[#allocation6 + $0x9b]]
    %v2104 = vstv %s2103
    %v2105 = vmul.f32 %v2097, %v2104
    %v2106 = vmul.f32 %v2098, %v2104
    %v2107 = vadd.f32 %v2101, %v2105
    %v2108 = vadd.f32 %v2102, %v2106
    %v2109 = vsel %vm2085, 1, 0
    %v2110 = vperm.slane %v2109, 0
    %v2111 = vperm.slane %v2109, 1
    %vm2112 = vcmp.eq.s32.totalorder %v2110, 1
    %vm2113 = vcmp.eq.s32.totalorder %v2111, 1
    %v2114 = vsel %vm2112, %v2107, 0.0
    %v2115 = vsel %vm2113, %v2108, 0.0
    %v2116 = vadd.f32 %v2083, %v2114
    %v2117 = vadd.f32 %v2084, %v2115
    %v2118 = vadd.s32 %v1132, 1
    %vm2119 = vcmp.ge.s32.totalorder %v2118, 0
    %vm2120 = vcmp.lt.s32.totalorder %v2118, 16
    %vm2121 = vmand %vm2119, %vm2120
    %vm2122 = vmand %vm2121, %vm1142
    %2123 = vrot.lane.b32.xlu0 %v1148, 115
    %v2124 = vpop.permute.xlu0 %2123
    %2125 = vrot.lane.b32.xlu0 %v1149, 115
    %v2126 = vpop.permute.xlu0 %2125
    %vm2127 = vcmp.lt.s32.totalorder %v395, 115
    %v2128 = vsel %vm2127, %v2124, %v2126
    %v2129 = vsel %vm2127, %v2126, %v2124
    %2130 = vrot.lane.b32.xlu0 %v1163, 115
    %v2131 = vpop.permute.xlu0 %2130
    %2132 = vrot.lane.b32.xlu0 %v1164, 115
    %v2133 = vpop.permute.xlu0 %2132
    %v2134 = vsel %vm2127, %v2131, %v2133
    %v2135 = vsel %vm2127, %v2133, %v2131
    %s2136 = sld [smem:[#allocation6 + $0x1c]]
    %v2137 = vstv %s2136
    %v2138 = vmul.f32 %v2128, %v2137
    %v2139 = vmul.f32 %v2129, %v2137
    %s2140 = sld [smem:[#allocation6 + $0x9c]]
    %v2141 = vstv %s2140
    %v2142 = vmul.f32 %v2134, %v2141
    %v2143 = vmul.f32 %v2135, %v2141
    %v2144 = vadd.f32 %v2138, %v2142
    %v2145 = vadd.f32 %v2139, %v2143
    %v2146 = vsel %vm2122, 1, 0
    %v2147 = vperm.slane %v2146, 0
    %v2148 = vperm.slane %v2146, 1
    %vm2149 = vcmp.eq.s32.totalorder %v2147, 1
    %vm2150 = vcmp.eq.s32.totalorder %v2148, 1
    %v2151 = vsel %vm2149, %v2144, 0.0
    %v2152 = vsel %vm2150, %v2145, 0.0
    %v2153 = vadd.f32 %v2116, %v2151
    %v2154 = vadd.f32 %v2117, %v2152
    %vm2155 = vmand %vm2121, %vm1195
    %2156 = vrot.lane.b32.xlu0 %v1148, 114
    %v2157 = vpop.permute.xlu0 %2156
    %2158 = vrot.lane.b32.xlu0 %v1149, 114
    %v2159 = vpop.permute.xlu0 %2158
    %vm2160 = vcmp.lt.s32.totalorder %v395, 114
    %v2161 = vsel %vm2160, %v2157, %v2159
    %v2162 = vsel %vm2160, %v2159, %v2157
    %2163 = vrot.lane.b32.xlu0 %v1163, 114
    %v2164 = vpop.permute.xlu0 %2163
    %2165 = vrot.lane.b32.xlu0 %v1164, 114
    %v2166 = vpop.permute.xlu0 %2165
    %v2167 = vsel %vm2160, %v2164, %v2166
    %v2168 = vsel %vm2160, %v2166, %v2164
    %s2169 = sld [smem:[#allocation6 + $0x1d]]
    %v2170 = vstv %s2169
    %v2171 = vmul.f32 %v2161, %v2170
    %v2172 = vmul.f32 %v2162, %v2170
    %s2173 = sld [smem:[#allocation6 + $0x9d]]
    %v2174 = vstv %s2173
    %v2175 = vmul.f32 %v2167, %v2174
    %v2176 = vmul.f32 %v2168, %v2174
    %v2177 = vadd.f32 %v2171, %v2175
    %v2178 = vadd.f32 %v2172, %v2176
    %v2179 = vsel %vm2155, 1, 0
    %v2180 = vperm.slane %v2179, 0
    %v2181 = vperm.slane %v2179, 1
    %vm2182 = vcmp.eq.s32.totalorder %v2180, 1
    %vm2183 = vcmp.eq.s32.totalorder %v2181, 1
    %v2184 = vsel %vm2182, %v2177, 0.0
    %v2185 = vsel %vm2183, %v2178, 0.0
    %v2186 = vadd.f32 %v2153, %v2184
    %v2187 = vadd.f32 %v2154, %v2185
    %vm2188 = vmand %vm2121, %vm1232
    %2189 = vrot.lane.b32.xlu0 %v1148, 113
    %v2190 = vpop.permute.xlu0 %2189
    %2191 = vrot.lane.b32.xlu0 %v1149, 113
    %v2192 = vpop.permute.xlu0 %2191
    %vm2193 = vcmp.lt.s32.totalorder %v395, 113
    %v2194 = vsel %vm2193, %v2190, %v2192
    %v2195 = vsel %vm2193, %v2192, %v2190
    %2196 = vrot.lane.b32.xlu0 %v1163, 113
    %v2197 = vpop.permute.xlu0 %2196
    %2198 = vrot.lane.b32.xlu0 %v1164, 113
    %v2199 = vpop.permute.xlu0 %2198
    %v2200 = vsel %vm2193, %v2197, %v2199
    %v2201 = vsel %vm2193, %v2199, %v2197
    %s2202 = sld [smem:[#allocation6 + $0x1e]]
    %v2203 = vstv %s2202
    %v2204 = vmul.f32 %v2194, %v2203
    %v2205 = vmul.f32 %v2195, %v2203
    %s2206 = sld [smem:[#allocation6 + $0x9e]]
    %v2207 = vstv %s2206
    %v2208 = vmul.f32 %v2200, %v2207
    %v2209 = vmul.f32 %v2201, %v2207
    %v2210 = vadd.f32 %v2204, %v2208
    %v2211 = vadd.f32 %v2205, %v2209
    %v2212 = vsel %vm2188, 1, 0
    %v2213 = vperm.slane %v2212, 0
    %v2214 = vperm.slane %v2212, 1
    %vm2215 = vcmp.eq.s32.totalorder %v2213, 1
    %vm2216 = vcmp.eq.s32.totalorder %v2214, 1
    %v2217 = vsel %vm2215, %v2210, 0.0
    %v2218 = vsel %vm2216, %v2211, 0.0
    %v2219 = vadd.f32 %v2186, %v2217
    %v2220 = vadd.f32 %v2187, %v2218
    %vm2221 = vmand %vm2121, %vm1268
    %2222 = vrot.lane.b32.xlu0 %v1148, 112
    %v2223 = vpop.permute.xlu0 %2222
    %2224 = vrot.lane.b32.xlu0 %v1149, 112
    %v2225 = vpop.permute.xlu0 %2224
    %vm2226 = vcmp.lt.s32.totalorder %v395, 112
    %v2227 = vsel %vm2226, %v2223, %v2225
    %v2228 = vsel %vm2226, %v2225, %v2223
    %2229 = vrot.lane.b32.xlu0 %v1163, 112
    %v2230 = vpop.permute.xlu0 %2229
    %2231 = vrot.lane.b32.xlu0 %v1164, 112
    %v2232 = vpop.permute.xlu0 %2231
    %v2233 = vsel %vm2226, %v2230, %v2232
    %v2234 = vsel %vm2226, %v2232, %v2230
    %s2235 = sld [smem:[#allocation6 + $0x1f]]
    %v2236 = vstv %s2235
    %v2237 = vmul.f32 %v2227, %v2236
    %v2238 = vmul.f32 %v2228, %v2236
    %s2239 = sld [smem:[#allocation6 + $0x9f]]
    %v2240 = vstv %s2239
    %v2241 = vmul.f32 %v2233, %v2240
    %v2242 = vmul.f32 %v2234, %v2240
    %v2243 = vadd.f32 %v2237, %v2241
    %v2244 = vadd.f32 %v2238, %v2242
    %v2245 = vsel %vm2221, 1, 0
    %v2246 = vperm.slane %v2245, 0
    %v2247 = vperm.slane %v2245, 1
    %vm2248 = vcmp.eq.s32.totalorder %v2246, 1
    %vm2249 = vcmp.eq.s32.totalorder %v2247, 1
    %v2250 = vsel %vm2248, %v2243, 0.0
    %v2251 = vsel %vm2249, %v2244, 0.0
    %v2252 = vadd.f32 %v2219, %v2250
    %v2253 = vadd.f32 %v2220, %v2251
    %vm2254 = vmand %vm2121, %vm1305
    %2255 = vrot.lane.b32.xlu0 %v1148, 111
    %v2256 = vpop.permute.xlu0 %2255
    %2257 = vrot.lane.b32.xlu0 %v1149, 111
    %v2258 = vpop.permute.xlu0 %2257
    %vm2259 = vcmp.lt.s32.totalorder %v395, 111
    %v2260 = vsel %vm2259, %v2256, %v2258
    %v2261 = vsel %vm2259, %v2258, %v2256
    %2262 = vrot.lane.b32.xlu0 %v1163, 111
    %v2263 = vpop.permute.xlu0 %2262
    %2264 = vrot.lane.b32.xlu0 %v1164, 111
    %v2265 = vpop.permute.xlu0 %2264
    %v2266 = vsel %vm2259, %v2263, %v2265
    %v2267 = vsel %vm2259, %v2265, %v2263
    %s2268 = sld [smem:[#allocation6 + $0x20]]
    %v2269 = vstv %s2268
    %v2270 = vmul.f32 %v2260, %v2269
    %v2271 = vmul.f32 %v2261, %v2269
    %s2272 = sld [smem:[#allocation6 + $0xa0]]
    %v2273 = vstv %s2272
    %v2274 = vmul.f32 %v2266, %v2273
    %v2275 = vmul.f32 %v2267, %v2273
    %v2276 = vadd.f32 %v2270, %v2274
    %v2277 = vadd.f32 %v2271, %v2275
    %v2278 = vsel %vm2254, 1, 0
    %v2279 = vperm.slane %v2278, 0
    %v2280 = vperm.slane %v2278, 1
    %vm2281 = vcmp.eq.s32.totalorder %v2279, 1
    %vm2282 = vcmp.eq.s32.totalorder %v2280, 1
    %v2283 = vsel %vm2281, %v2276, 0.0
    %v2284 = vsel %vm2282, %v2277, 0.0
    %v2285 = vadd.f32 %v2252, %v2283
    %v2286 = vadd.f32 %v2253, %v2284
    %vm2287 = vmand %vm2121, %vm1342
    %2288 = vrot.lane.b32.xlu0 %v1148, 110
    %v2289 = vpop.permute.xlu0 %2288
    %2290 = vrot.lane.b32.xlu0 %v1149, 110
    %v2291 = vpop.permute.xlu0 %2290
    %vm2292 = vcmp.lt.s32.totalorder %v395, 110
    %v2293 = vsel %vm2292, %v2289, %v2291
    %v2294 = vsel %vm2292, %v2291, %v2289
    %2295 = vrot.lane.b32.xlu0 %v1163, 110
    %v2296 = vpop.permute.xlu0 %2295
    %2297 = vrot.lane.b32.xlu0 %v1164, 110
    %v2298 = vpop.permute.xlu0 %2297
    %v2299 = vsel %vm2292, %v2296, %v2298
    %v2300 = vsel %vm2292, %v2298, %v2296
    %s2301 = sld [smem:[#allocation6 + $0x21]]
    %v2302 = vstv %s2301
    %v2303 = vmul.f32 %v2293, %v2302
    %v2304 = vmul.f32 %v2294, %v2302
    %s2305 = sld [smem:[#allocation6 + $0xa1]]
    %v2306 = vstv %s2305
    %v2307 = vmul.f32 %v2299, %v2306
    %v2308 = vmul.f32 %v2300, %v2306
    %v2309 = vadd.f32 %v2303, %v2307
    %v2310 = vadd.f32 %v2304, %v2308
    %v2311 = vsel %vm2287, 1, 0
    %v2312 = vperm.slane %v2311, 0
    %v2313 = vperm.slane %v2311, 1
    %vm2314 = vcmp.eq.s32.totalorder %v2312, 1
    %vm2315 = vcmp.eq.s32.totalorder %v2313, 1
    %v2316 = vsel %vm2314, %v2309, 0.0
    %v2317 = vsel %vm2315, %v2310, 0.0
    %v2318 = vadd.f32 %v2285, %v2316
    %v2319 = vadd.f32 %v2286, %v2317
    %vm2320 = vmand %vm2121, %vm1379
    %2321 = vrot.lane.b32.xlu0 %v1148, 109
    %v2322 = vpop.permute.xlu0 %2321
    %2323 = vrot.lane.b32.xlu0 %v1149, 109
    %v2324 = vpop.permute.xlu0 %2323
    %vm2325 = vcmp.lt.s32.totalorder %v395, 109
    %v2326 = vsel %vm2325, %v2322, %v2324
    %v2327 = vsel %vm2325, %v2324, %v2322
    %2328 = vrot.lane.b32.xlu0 %v1163, 109
    %v2329 = vpop.permute.xlu0 %2328
    %2330 = vrot.lane.b32.xlu0 %v1164, 109
    %v2331 = vpop.permute.xlu0 %2330
    %v2332 = vsel %vm2325, %v2329, %v2331
    %v2333 = vsel %vm2325, %v2331, %v2329
    %s2334 = sld [smem:[#allocation6 + $0x22]]
    %v2335 = vstv %s2334
    %v2336 = vmul.f32 %v2326, %v2335
    %v2337 = vmul.f32 %v2327, %v2335
    %s2338 = sld [smem:[#allocation6 + $0xa2]]
    %v2339 = vstv %s2338
    %v2340 = vmul.f32 %v2332, %v2339
    %v2341 = vmul.f32 %v2333, %v2339
    %v2342 = vadd.f32 %v2336, %v2340
    %v2343 = vadd.f32 %v2337, %v2341
    %v2344 = vsel %vm2320, 1, 0
    %v2345 = vperm.slane %v2344, 0
    %v2346 = vperm.slane %v2344, 1
    %vm2347 = vcmp.eq.s32.totalorder %v2345, 1
    %vm2348 = vcmp.eq.s32.totalorder %v2346, 1
    %v2349 = vsel %vm2347, %v2342, 0.0
    %v2350 = vsel %vm2348, %v2343, 0.0
    %v2351 = vadd.f32 %v2318, %v2349
    %v2352 = vadd.f32 %v2319, %v2350
    %v2353 = vadd.s32 %v1132, 2
    %vm2354 = vcmp.ge.s32.totalorder %v2353, 0
    %vm2355 = vcmp.lt.s32.totalorder %v2353, 16
    %vm2356 = vmand %vm2354, %vm2355
    %vm2357 = vmand %vm2356, %vm1142
    %2358 = vrot.lane.b32.xlu0 %v1148, 99
    %v2359 = vpop.permute.xlu0 %2358
    %2360 = vrot.lane.b32.xlu0 %v1149, 99
    %v2361 = vpop.permute.xlu0 %2360
    %vm2362 = vcmp.lt.s32.totalorder %v395, 99
    %v2363 = vsel %vm2362, %v2359, %v2361
    %v2364 = vsel %vm2362, %v2361, %v2359
    %2365 = vrot.lane.b32.xlu0 %v1163, 99
    %v2366 = vpop.permute.xlu0 %2365
    %2367 = vrot.lane.b32.xlu0 %v1164, 99
    %v2368 = vpop.permute.xlu0 %2367
    %v2369 = vsel %vm2362, %v2366, %v2368
    %v2370 = vsel %vm2362, %v2368, %v2366
    %s2371 = sld [smem:[#allocation6 + $0x23]]
    %v2372 = vstv %s2371
    %v2373 = vmul.f32 %v2363, %v2372
    %v2374 = vmul.f32 %v2364, %v2372
    %s2375 = sld [smem:[#allocation6 + $0xa3]]
    %v2376 = vstv %s2375
    %v2377 = vmul.f32 %v2369, %v2376
    %v2378 = vmul.f32 %v2370, %v2376
    %v2379 = vadd.f32 %v2373, %v2377
    %v2380 = vadd.f32 %v2374, %v2378
    %v2381 = vsel %vm2357, 1, 0
    %v2382 = vperm.slane %v2381, 0
    %v2383 = vperm.slane %v2381, 1
    %vm2384 = vcmp.eq.s32.totalorder %v2382, 1
    %vm2385 = vcmp.eq.s32.totalorder %v2383, 1
    %v2386 = vsel %vm2384, %v2379, 0.0
    %v2387 = vsel %vm2385, %v2380, 0.0
    %v2388 = vadd.f32 %v2351, %v2386
    %v2389 = vadd.f32 %v2352, %v2387
    %vm2390 = vmand %vm2356, %vm1195
    %2391 = vrot.lane.b32.xlu0 %v1148, 98
    %v2392 = vpop.permute.xlu0 %2391
    %2393 = vrot.lane.b32.xlu0 %v1149, 98
    %v2394 = vpop.permute.xlu0 %2393
    %vm2395 = vcmp.lt.s32.totalorder %v395, 98
    %v2396 = vsel %vm2395, %v2392, %v2394
    %v2397 = vsel %vm2395, %v2394, %v2392
    %2398 = vrot.lane.b32.xlu0 %v1163, 98
    %v2399 = vpop.permute.xlu0 %2398
    %2400 = vrot.lane.b32.xlu0 %v1164, 98
    %v2401 = vpop.permute.xlu0 %2400
    %v2402 = vsel %vm2395, %v2399, %v2401
    %v2403 = vsel %vm2395, %v2401, %v2399
    %s2404 = sld [smem:[#allocation6 + $0x24]]
    %v2405 = vstv %s2404
    %v2406 = vmul.f32 %v2396, %v2405
    %v2407 = vmul.f32 %v2397, %v2405
    %s2408 = sld [smem:[#allocation6 + $0xa4]]
    %v2409 = vstv %s2408
    %v2410 = vmul.f32 %v2402, %v2409
    %v2411 = vmul.f32 %v2403, %v2409
    %v2412 = vadd.f32 %v2406, %v2410
    %v2413 = vadd.f32 %v2407, %v2411
    %v2414 = vsel %vm2390, 1, 0
    %v2415 = vperm.slane %v2414, 0
    %v2416 = vperm.slane %v2414, 1
    %vm2417 = vcmp.eq.s32.totalorder %v2415, 1
    %vm2418 = vcmp.eq.s32.totalorder %v2416, 1
    %v2419 = vsel %vm2417, %v2412, 0.0
    %v2420 = vsel %vm2418, %v2413, 0.0
    %v2421 = vadd.f32 %v2388, %v2419
    %v2422 = vadd.f32 %v2389, %v2420
    %vm2423 = vmand %vm2356, %vm1232
    %2424 = vrot.lane.b32.xlu0 %v1148, 97
    %v2425 = vpop.permute.xlu0 %2424
    %2426 = vrot.lane.b32.xlu0 %v1149, 97
    %v2427 = vpop.permute.xlu0 %2426
    %vm2428 = vcmp.lt.s32.totalorder %v395, 97
    %v2429 = vsel %vm2428, %v2425, %v2427
    %v2430 = vsel %vm2428, %v2427, %v2425
    %2431 = vrot.lane.b32.xlu0 %v1163, 97
    %v2432 = vpop.permute.xlu0 %2431
    %2433 = vrot.lane.b32.xlu0 %v1164, 97
    %v2434 = vpop.permute.xlu0 %2433
    %v2435 = vsel %vm2428, %v2432, %v2434
    %v2436 = vsel %vm2428, %v2434, %v2432
    %s2437 = sld [smem:[#allocation6 + $0x25]]
    %v2438 = vstv %s2437
    %v2439 = vmul.f32 %v2429, %v2438
    %v2440 = vmul.f32 %v2430, %v2438
    %s2441 = sld [smem:[#allocation6 + $0xa5]]
    %v2442 = vstv %s2441
    %v2443 = vmul.f32 %v2435, %v2442
    %v2444 = vmul.f32 %v2436, %v2442
    %v2445 = vadd.f32 %v2439, %v2443
    %v2446 = vadd.f32 %v2440, %v2444
    %v2447 = vsel %vm2423, 1, 0
    %v2448 = vperm.slane %v2447, 0
    %v2449 = vperm.slane %v2447, 1
    %vm2450 = vcmp.eq.s32.totalorder %v2448, 1
    %vm2451 = vcmp.eq.s32.totalorder %v2449, 1
    %v2452 = vsel %vm2450, %v2445, 0.0
    %v2453 = vsel %vm2451, %v2446, 0.0
    %v2454 = vadd.f32 %v2421, %v2452
    %v2455 = vadd.f32 %v2422, %v2453
    %vm2456 = vmand %vm2356, %vm1268
    %2457 = vrot.lane.b32.xlu0 %v1148, 96
    %v2458 = vpop.permute.xlu0 %2457
    %2459 = vrot.lane.b32.xlu0 %v1149, 96
    %v2460 = vpop.permute.xlu0 %2459
    %vm2461 = vcmp.lt.s32.totalorder %v395, 96
    %v2462 = vsel %vm2461, %v2458, %v2460
    %v2463 = vsel %vm2461, %v2460, %v2458
    %2464 = vrot.lane.b32.xlu0 %v1163, 96
    %v2465 = vpop.permute.xlu0 %2464
    %2466 = vrot.lane.b32.xlu0 %v1164, 96
    %v2467 = vpop.permute.xlu0 %2466
    %v2468 = vsel %vm2461, %v2465, %v2467
    %v2469 = vsel %vm2461, %v2467, %v2465
    %s2470 = sld [smem:[#allocation6 + $0x26]]
    %v2471 = vstv %s2470
    %v2472 = vmul.f32 %v2462, %v2471
    %v2473 = vmul.f32 %v2463, %v2471
    %s2474 = sld [smem:[#allocation6 + $0xa6]]
    %v2475 = vstv %s2474
    %v2476 = vmul.f32 %v2468, %v2475
    %v2477 = vmul.f32 %v2469, %v2475
    %v2478 = vadd.f32 %v2472, %v2476
    %v2479 = vadd.f32 %v2473, %v2477
    %v2480 = vsel %vm2456, 1, 0
    %v2481 = vperm.slane %v2480, 0
    %v2482 = vperm.slane %v2480, 1
    %vm2483 = vcmp.eq.s32.totalorder %v2481, 1
    %vm2484 = vcmp.eq.s32.totalorder %v2482, 1
    %v2485 = vsel %vm2483, %v2478, 0.0
    %v2486 = vsel %vm2484, %v2479, 0.0
    %v2487 = vadd.f32 %v2454, %v2485
    %v2488 = vadd.f32 %v2455, %v2486
    %vm2489 = vmand %vm2356, %vm1305
    %2490 = vrot.lane.b32.xlu0 %v1148, 95
    %v2491 = vpop.permute.xlu0 %2490
    %2492 = vrot.lane.b32.xlu0 %v1149, 95
    %v2493 = vpop.permute.xlu0 %2492
    %vm2494 = vcmp.lt.s32.totalorder %v395, 95
    %v2495 = vsel %vm2494, %v2491, %v2493
    %v2496 = vsel %vm2494, %v2493, %v2491
    %2497 = vrot.lane.b32.xlu0 %v1163, 95
    %v2498 = vpop.permute.xlu0 %2497
    %2499 = vrot.lane.b32.xlu0 %v1164, 95
    %v2500 = vpop.permute.xlu0 %2499
    %v2501 = vsel %vm2494, %v2498, %v2500
    %v2502 = vsel %vm2494, %v2500, %v2498
    %s2503 = sld [smem:[#allocation6 + $0x27]]
    %v2504 = vstv %s2503
    %v2505 = vmul.f32 %v2495, %v2504
    %v2506 = vmul.f32 %v2496, %v2504
    %s2507 = sld [smem:[#allocation6 + $0xa7]]
    %v2508 = vstv %s2507
    %v2509 = vmul.f32 %v2501, %v2508
    %v2510 = vmul.f32 %v2502, %v2508
    %v2511 = vadd.f32 %v2505, %v2509
    %v2512 = vadd.f32 %v2506, %v2510
    %v2513 = vsel %vm2489, 1, 0
    %v2514 = vperm.slane %v2513, 0
    %v2515 = vperm.slane %v2513, 1
    %vm2516 = vcmp.eq.s32.totalorder %v2514, 1
    %vm2517 = vcmp.eq.s32.totalorder %v2515, 1
    %v2518 = vsel %vm2516, %v2511, 0.0
    %v2519 = vsel %vm2517, %v2512, 0.0
    %v2520 = vadd.f32 %v2487, %v2518
    %v2521 = vadd.f32 %v2488, %v2519
    %vm2522 = vmand %vm2356, %vm1342
    %2523 = vrot.lane.b32.xlu0 %v1148, 94
    %v2524 = vpop.permute.xlu0 %2523
    %2525 = vrot.lane.b32.xlu0 %v1149, 94
    %v2526 = vpop.permute.xlu0 %2525
    %vm2527 = vcmp.lt.s32.totalorder %v395, 94
    %v2528 = vsel %vm2527, %v2524, %v2526
    %v2529 = vsel %vm2527, %v2526, %v2524
    %2530 = vrot.lane.b32.xlu0 %v1163, 94
    %v2531 = vpop.permute.xlu0 %2530
    %2532 = vrot.lane.b32.xlu0 %v1164, 94
    %v2533 = vpop.permute.xlu0 %2532
    %v2534 = vsel %vm2527, %v2531, %v2533
    %v2535 = vsel %vm2527, %v2533, %v2531
    %s2536 = sld [smem:[#allocation6 + $0x28]]
    %v2537 = vstv %s2536
    %v2538 = vmul.f32 %v2528, %v2537
    %v2539 = vmul.f32 %v2529, %v2537
    %s2540 = sld [smem:[#allocation6 + $0xa8]]
    %v2541 = vstv %s2540
    %v2542 = vmul.f32 %v2534, %v2541
    %v2543 = vmul.f32 %v2535, %v2541
    %v2544 = vadd.f32 %v2538, %v2542
    %v2545 = vadd.f32 %v2539, %v2543
    %v2546 = vsel %vm2522, 1, 0
    %v2547 = vperm.slane %v2546, 0
    %v2548 = vperm.slane %v2546, 1
    %vm2549 = vcmp.eq.s32.totalorder %v2547, 1
    %vm2550 = vcmp.eq.s32.totalorder %v2548, 1
    %v2551 = vsel %vm2549, %v2544, 0.0
    %v2552 = vsel %vm2550, %v2545, 0.0
    %v2553 = vadd.f32 %v2520, %v2551
    %v2554 = vadd.f32 %v2521, %v2552
    %vm2555 = vmand %vm2356, %vm1379
    %2556 = vrot.lane.b32.xlu0 %v1148, 93
    %v2557 = vpop.permute.xlu0 %2556
    %2558 = vrot.lane.b32.xlu0 %v1149, 93
    %v2559 = vpop.permute.xlu0 %2558
    %vm2560 = vcmp.lt.s32.totalorder %v395, 93
    %v2561 = vsel %vm2560, %v2557, %v2559
    %v2562 = vsel %vm2560, %v2559, %v2557
    %2563 = vrot.lane.b32.xlu0 %v1163, 93
    %v2564 = vpop.permute.xlu0 %2563
    %2565 = vrot.lane.b32.xlu0 %v1164, 93
    %v2566 = vpop.permute.xlu0 %2565
    %v2567 = vsel %vm2560, %v2564, %v2566
    %v2568 = vsel %vm2560, %v2566, %v2564
    %s2569 = sld [smem:[#allocation6 + $0x29]]
    %v2570 = vstv %s2569
    %v2571 = vmul.f32 %v2561, %v2570
    %v2572 = vmul.f32 %v2562, %v2570
    %s2573 = sld [smem:[#allocation6 + $0xa9]]
    %v2574 = vstv %s2573
    %v2575 = vmul.f32 %v2567, %v2574
    %v2576 = vmul.f32 %v2568, %v2574
    %v2577 = vadd.f32 %v2571, %v2575
    %v2578 = vadd.f32 %v2572, %v2576
    %v2579 = vsel %vm2555, 1, 0
    %v2580 = vperm.slane %v2579, 0
    %v2581 = vperm.slane %v2579, 1
    %vm2582 = vcmp.eq.s32.totalorder %v2580, 1
    %vm2583 = vcmp.eq.s32.totalorder %v2581, 1
    %v2584 = vsel %vm2582, %v2577, 0.0
    %v2585 = vsel %vm2583, %v2578, 0.0
    %v2586 = vadd.f32 %v2553, %v2584
    %v2587 = vadd.f32 %v2554, %v2585
    %v2588 = vadd.s32 %v1132, 3
    %vm2589 = vcmp.ge.s32.totalorder %v2588, 0
    %vm2590 = vcmp.lt.s32.totalorder %v2588, 16
    %vm2591 = vmand %vm2589, %vm2590
    %vm2592 = vmand %vm2591, %vm1142
    %2593 = vrot.lane.b32.xlu0 %v1148, 83
    %v2594 = vpop.permute.xlu0 %2593
    %2595 = vrot.lane.b32.xlu0 %v1149, 83
    %v2596 = vpop.permute.xlu0 %2595
    %vm2597 = vcmp.lt.s32.totalorder %v395, 83
    %v2598 = vsel %vm2597, %v2594, %v2596
    %v2599 = vsel %vm2597, %v2596, %v2594
    %2600 = vrot.lane.b32.xlu0 %v1163, 83
    %v2601 = vpop.permute.xlu0 %2600
    %2602 = vrot.lane.b32.xlu0 %v1164, 83
    %v2603 = vpop.permute.xlu0 %2602
    %v2604 = vsel %vm2597, %v2601, %v2603
    %v2605 = vsel %vm2597, %v2603, %v2601
    %s2606 = sld [smem:[#allocation6 + $0x2a]]
    %v2607 = vstv %s2606
    %v2608 = vmul.f32 %v2598, %v2607
    %v2609 = vmul.f32 %v2599, %v2607
    %s2610 = sld [smem:[#allocation6 + $0xaa]]
    %v2611 = vstv %s2610
    %v2612 = vmul.f32 %v2604, %v2611
    %v2613 = vmul.f32 %v2605, %v2611
    %v2614 = vadd.f32 %v2608, %v2612
    %v2615 = vadd.f32 %v2609, %v2613
    %v2616 = vsel %vm2592, 1, 0
    %v2617 = vperm.slane %v2616, 0
    %v2618 = vperm.slane %v2616, 1
    %vm2619 = vcmp.eq.s32.totalorder %v2617, 1
    %vm2620 = vcmp.eq.s32.totalorder %v2618, 1
    %v2621 = vsel %vm2619, %v2614, 0.0
    %v2622 = vsel %vm2620, %v2615, 0.0
    %v2623 = vadd.f32 %v2586, %v2621
    %v2624 = vadd.f32 %v2587, %v2622
    %vm2625 = vmand %vm2591, %vm1195
    %2626 = vrot.lane.b32.xlu0 %v1148, 82
    %v2627 = vpop.permute.xlu0 %2626
    %2628 = vrot.lane.b32.xlu0 %v1149, 82
    %v2629 = vpop.permute.xlu0 %2628
    %vm2630 = vcmp.lt.s32.totalorder %v395, 82
    %v2631 = vsel %vm2630, %v2627, %v2629
    %v2632 = vsel %vm2630, %v2629, %v2627
    %2633 = vrot.lane.b32.xlu0 %v1163, 82
    %v2634 = vpop.permute.xlu0 %2633
    %2635 = vrot.lane.b32.xlu0 %v1164, 82
    %v2636 = vpop.permute.xlu0 %2635
    %v2637 = vsel %vm2630, %v2634, %v2636
    %v2638 = vsel %vm2630, %v2636, %v2634
    %s2639 = sld [smem:[#allocation6 + $0x2b]]
    %v2640 = vstv %s2639
    %v2641 = vmul.f32 %v2631, %v2640
    %v2642 = vmul.f32 %v2632, %v2640
    %s2643 = sld [smem:[#allocation6 + $0xab]]
    %v2644 = vstv %s2643
    %v2645 = vmul.f32 %v2637, %v2644
    %v2646 = vmul.f32 %v2638, %v2644
    %v2647 = vadd.f32 %v2641, %v2645
    %v2648 = vadd.f32 %v2642, %v2646
    %v2649 = vsel %vm2625, 1, 0
    %v2650 = vperm.slane %v2649, 0
    %v2651 = vperm.slane %v2649, 1
    %vm2652 = vcmp.eq.s32.totalorder %v2650, 1
    %vm2653 = vcmp.eq.s32.totalorder %v2651, 1
    %v2654 = vsel %vm2652, %v2647, 0.0
    %v2655 = vsel %vm2653, %v2648, 0.0
    %v2656 = vadd.f32 %v2623, %v2654
    %v2657 = vadd.f32 %v2624, %v2655
    %vm2658 = vmand %vm2591, %vm1232
    %2659 = vrot.lane.b32.xlu0 %v1148, 81
    %v2660 = vpop.permute.xlu0 %2659
    %2661 = vrot.lane.b32.xlu0 %v1149, 81
    %v2662 = vpop.permute.xlu0 %2661
    %vm2663 = vcmp.lt.s32.totalorder %v395, 81
    %v2664 = vsel %vm2663, %v2660, %v2662
    %v2665 = vsel %vm2663, %v2662, %v2660
    %2666 = vrot.lane.b32.xlu0 %v1163, 81
    %v2667 = vpop.permute.xlu0 %2666
    %2668 = vrot.lane.b32.xlu0 %v1164, 81
    %v2669 = vpop.permute.xlu0 %2668
    %v2670 = vsel %vm2663, %v2667, %v2669
    %v2671 = vsel %vm2663, %v2669, %v2667
    %s2672 = sld [smem:[#allocation6 + $0x2c]]
    %v2673 = vstv %s2672
    %v2674 = vmul.f32 %v2664, %v2673
    %v2675 = vmul.f32 %v2665, %v2673
    %s2676 = sld [smem:[#allocation6 + $0xac]]
    %v2677 = vstv %s2676
    %v2678 = vmul.f32 %v2670, %v2677
    %v2679 = vmul.f32 %v2671, %v2677
    %v2680 = vadd.f32 %v2674, %v2678
    %v2681 = vadd.f32 %v2675, %v2679
    %v2682 = vsel %vm2658, 1, 0
    %v2683 = vperm.slane %v2682, 0
    %v2684 = vperm.slane %v2682, 1
    %vm2685 = vcmp.eq.s32.totalorder %v2683, 1
    %vm2686 = vcmp.eq.s32.totalorder %v2684, 1
    %v2687 = vsel %vm2685, %v2680, 0.0
    %v2688 = vsel %vm2686, %v2681, 0.0
    %v2689 = vadd.f32 %v2656, %v2687
    %v2690 = vadd.f32 %v2657, %v2688
    %vm2691 = vmand %vm2591, %vm1268
    %2692 = vrot.lane.b32.xlu0 %v1148, 80
    %v2693 = vpop.permute.xlu0 %2692
    %2694 = vrot.lane.b32.xlu0 %v1149, 80
    %v2695 = vpop.permute.xlu0 %2694
    %vm2696 = vcmp.lt.s32.totalorder %v395, 80
    %v2697 = vsel %vm2696, %v2693, %v2695
    %v2698 = vsel %vm2696, %v2695, %v2693
    %2699 = vrot.lane.b32.xlu0 %v1163, 80
    %v2700 = vpop.permute.xlu0 %2699
    %2701 = vrot.lane.b32.xlu0 %v1164, 80
    %v2702 = vpop.permute.xlu0 %2701
    %v2703 = vsel %vm2696, %v2700, %v2702
    %v2704 = vsel %vm2696, %v2702, %v2700
    %s2705 = sld [smem:[#allocation6 + $0x2d]]
    %v2706 = vstv %s2705
    %v2707 = vmul.f32 %v2697, %v2706
    %v2708 = vmul.f32 %v2698, %v2706
    %s2709 = sld [smem:[#allocation6 + $0xad]]
    %v2710 = vstv %s2709
    %v2711 = vmul.f32 %v2703, %v2710
    %v2712 = vmul.f32 %v2704, %v2710
    %v2713 = vadd.f32 %v2707, %v2711
    %v2714 = vadd.f32 %v2708, %v2712
    %v2715 = vsel %vm2691, 1, 0
    %v2716 = vperm.slane %v2715, 0
    %v2717 = vperm.slane %v2715, 1
    %vm2718 = vcmp.eq.s32.totalorder %v2716, 1
    %vm2719 = vcmp.eq.s32.totalorder %v2717, 1
    %v2720 = vsel %vm2718, %v2713, 0.0
    %v2721 = vsel %vm2719, %v2714, 0.0
    %v2722 = vadd.f32 %v2689, %v2720
    %v2723 = vadd.f32 %v2690, %v2721
    %vm2724 = vmand %vm2591, %vm1305
    %2725 = vrot.lane.b32.xlu0 %v1148, 79
    %v2726 = vpop.permute.xlu0 %2725
    %2727 = vrot.lane.b32.xlu0 %v1149, 79
    %v2728 = vpop.permute.xlu0 %2727
    %vm2729 = vcmp.lt.s32.totalorder %v395, 79
    %v2730 = vsel %vm2729, %v2726, %v2728
    %v2731 = vsel %vm2729, %v2728, %v2726
    %2732 = vrot.lane.b32.xlu0 %v1163, 79
    %v2733 = vpop.permute.xlu0 %2732
    %2734 = vrot.lane.b32.xlu0 %v1164, 79
    %v2735 = vpop.permute.xlu0 %2734
    %v2736 = vsel %vm2729, %v2733, %v2735
    %v2737 = vsel %vm2729, %v2735, %v2733
    %s2738 = sld [smem:[#allocation6 + $0x2e]]
    %v2739 = vstv %s2738
    %v2740 = vmul.f32 %v2730, %v2739
    %v2741 = vmul.f32 %v2731, %v2739
    %s2742 = sld [smem:[#allocation6 + $0xae]]
    %v2743 = vstv %s2742
    %v2744 = vmul.f32 %v2736, %v2743
    %v2745 = vmul.f32 %v2737, %v2743
    %v2746 = vadd.f32 %v2740, %v2744
    %v2747 = vadd.f32 %v2741, %v2745
    %v2748 = vsel %vm2724, 1, 0
    %v2749 = vperm.slane %v2748, 0
    %v2750 = vperm.slane %v2748, 1
    %vm2751 = vcmp.eq.s32.totalorder %v2749, 1
    %vm2752 = vcmp.eq.s32.totalorder %v2750, 1
    %v2753 = vsel %vm2751, %v2746, 0.0
    %v2754 = vsel %vm2752, %v2747, 0.0
    %v2755 = vadd.f32 %v2722, %v2753
    %v2756 = vadd.f32 %v2723, %v2754
    %vm2757 = vmand %vm2591, %vm1342
    %2758 = vrot.lane.b32.xlu0 %v1148, 78
    %v2759 = vpop.permute.xlu0 %2758
    %2760 = vrot.lane.b32.xlu0 %v1149, 78
    %v2761 = vpop.permute.xlu0 %2760
    %vm2762 = vcmp.lt.s32.totalorder %v395, 78
    %v2763 = vsel %vm2762, %v2759, %v2761
    %v2764 = vsel %vm2762, %v2761, %v2759
    %2765 = vrot.lane.b32.xlu0 %v1163, 78
    %v2766 = vpop.permute.xlu0 %2765
    %2767 = vrot.lane.b32.xlu0 %v1164, 78
    %v2768 = vpop.permute.xlu0 %2767
    %v2769 = vsel %vm2762, %v2766, %v2768
    %v2770 = vsel %vm2762, %v2768, %v2766
    %s2771 = sld [smem:[#allocation6 + $0x2f]]
    %v2772 = vstv %s2771
    %v2773 = vmul.f32 %v2763, %v2772
    %v2774 = vmul.f32 %v2764, %v2772
    %s2775 = sld [smem:[#allocation6 + $0xaf]]
    %v2776 = vstv %s2775
    %v2777 = vmul.f32 %v2769, %v2776
    %v2778 = vmul.f32 %v2770, %v2776
    %v2779 = vadd.f32 %v2773, %v2777
    %v2780 = vadd.f32 %v2774, %v2778
    %v2781 = vsel %vm2757, 1, 0
    %v2782 = vperm.slane %v2781, 0
    %v2783 = vperm.slane %v2781, 1
    %vm2784 = vcmp.eq.s32.totalorder %v2782, 1
    %vm2785 = vcmp.eq.s32.totalorder %v2783, 1
    %v2786 = vsel %vm2784, %v2779, 0.0
    %v2787 = vsel %vm2785, %v2780, 0.0
    %v2788 = vadd.f32 %v2755, %v2786
    %v2789 = vadd.f32 %v2756, %v2787
    %vm2790 = vmand %vm2591, %vm1379
    %2791 = vrot.lane.b32.xlu0 %v1148, 77
    %v2792 = vpop.permute.xlu0 %2791
    %2793 = vrot.lane.b32.xlu0 %v1149, 77
    %v2794 = vpop.permute.xlu0 %2793
    %vm2795 = vcmp.lt.s32.totalorder %v395, 77
    %v2796 = vsel %vm2795, %v2792, %v2794
    %v2797 = vsel %vm2795, %v2794, %v2792
    %2798 = vrot.lane.b32.xlu0 %v1163, 77
    %v2799 = vpop.permute.xlu0 %2798
    %2800 = vrot.lane.b32.xlu0 %v1164, 77
    %v2801 = vpop.permute.xlu0 %2800
    %v2802 = vsel %vm2795, %v2799, %v2801
    %v2803 = vsel %vm2795, %v2801, %v2799
    %s2804 = sld [smem:[#allocation6 + $0x30]]
    %v2805 = vstv %s2804
    %v2806 = vmul.f32 %v2796, %v2805
    %v2807 = vmul.f32 %v2797, %v2805
    %s2808 = sld [smem:[#allocation6 + $0xb0]]
    %v2809 = vstv %s2808
    %v2810 = vmul.f32 %v2802, %v2809
    %v2811 = vmul.f32 %v2803, %v2809
    %v2812 = vadd.f32 %v2806, %v2810
    %v2813 = vadd.f32 %v2807, %v2811
    %v2814 = vsel %vm2790, 1, 0
    %v2815 = vperm.slane %v2814, 0
    %v2816 = vperm.slane %v2814, 1
    %vm2817 = vcmp.eq.s32.totalorder %v2815, 1
    %vm2818 = vcmp.eq.s32.totalorder %v2816, 1
    %v2819 = vsel %vm2817, %v2812, 0.0
    %v2820 = vsel %vm2818, %v2813, 0.0
    %v2821 = vadd.f32 %v2788, %v2819
    %v2822 = vadd.f32 %v2789, %v2820
    %v2823 = vxor.u32 %v2821, 2147483648
    %v2824 = vxor.u32 %v2822, 2147483648
    %v2825 = vmul.f32 %v2823, 1.442695
    %v2826 = vpow.pop %v2825
    %v2827 = vmul.f32 %v2824, 1.442695
    %v2828 = vpow.pop %v2827
    %v2829 = vadd.f32 %v2826, 1.0
    %v2830 = vadd.f32 %v2828, 1.0
    %v2831 = vrcp.pop %v2829
    %v2832 = vmul.f32 %v2829, %v2831
    %v2833 = vsub.f32 1.0, %v2832
    %v2834 = vmul.f32 %v2831, %v2833
    %v2835 = vadd.f32 %v2831, %v2834
    %vm2836 = vweird.f32 %v2829
    %vm2837 = vweird.f32 %v2831
    %vm2838 = vmor %vm2836, %vm2837
    %v2839 = vsel %vm2838, %v2831, %v2835
    %v2840 = vand.u32 2147483647, %v2829
    %vm2841 = vcmp.eq.f32.partialorder %v2840, 8.507059e+37
    %v2842 = vand.u32 %v2829, 2147483648
    %v2843 = vor.u32 1.1754944e-38, %v2842
    %v2844 = vsel %vm2841, %v2843, %v2839
    %v2845 = vmul.f32 1.0, %v2844
    %v2846 = vrcp.pop %v2830
    %v2847 = vmul.f32 %v2830, %v2846
    %v2848 = vsub.f32 1.0, %v2847
    %v2849 = vmul.f32 %v2846, %v2848
    %v2850 = vadd.f32 %v2846, %v2849
    %vm2851 = vweird.f32 %v2830
    %vm2852 = vweird.f32 %v2846
    %vm2853 = vmor %vm2851, %vm2852
    %v2854 = vsel %vm2853, %v2846, %v2850
    %v2855 = vand.u32 2147483647, %v2830
    %vm2856 = vcmp.eq.f32.partialorder %v2855, 8.507059e+37
    %v2857 = vand.u32 %v2830, 2147483648
    %v2858 = vor.u32 1.1754944e-38, %v2857
    %v2859 = vsel %vm2856, %v2858, %v2854
    %v2860 = vmul.f32 1.0, %v2859
    %v2863 = vrot.slane %v2860, 7
    %vm2864 = vcmask 1040384
    %v2865 = vsel %vm2864, %v2845, %v2863
    %v2866 = vsel %vm488, %v2845, %v2863
    %v2867 = vrot.slane %v2866, 1
    %v2868 = vperm.slane %v2865, 0
    %v2869 = vperm.slane %v2865, 1
    %v2870 = vperm.slane %v2867, 0
    %v2871 = vperm.slane %v2867, 1
    %v2876 = vmul.f32 %v889, %v2868
    %v2877 = vmul.f32 %v890, %v2869
    %v2878 = vmul.f32 %v891, %v2868
    %v2879 = vmul.f32 %v892, %v2869
    %v2880 = vmul.f32 %v893, %v2868
    %v2881 = vmul.f32 %v894, %v2869
    %v2882 = vmul.f32 %v895, %v2868
    %v2883 = vmul.f32 %v896, %v2869
    %v2884 = vmul.f32 %v897, %v2868
    %v2885 = vmul.f32 %v898, %v2869
    %v2886 = vmul.f32 %v899, %v2868
    %v2887 = vmul.f32 %v900, %v2869
    %v2888 = vmul.f32 %v901, %v2868
    %v2889 = vmul.f32 %v902, %v2869
    %v2890 = vmul.f32 %v903, %v2868
    %v2891 = vmul.f32 %v904, %v2869
    %v2892 = vmul.f32 %v905, %v2868
    %v2893 = vmul.f32 %v906, %v2869
    %v2894 = vmul.f32 %v907, %v2868
    %v2895 = vmul.f32 %v908, %v2869
    %v2896 = vmul.f32 %v909, %v2868
    %v2897 = vmul.f32 %v910, %v2869
    %v2898 = vmul.f32 %v911, %v2868
    %v2899 = vmul.f32 %v912, %v2869
    %v2900 = vmul.f32 %v913, %v2868
    %v2901 = vmul.f32 %v914, %v2869
    %v2902 = vmul.f32 %v915, %v2868
    %v2903 = vmul.f32 %v916, %v2869
    %v2904 = vmul.f32 %v917, %v2868
    %v2905 = vmul.f32 %v918, %v2869
    %v2906 = vmul.f32 %v919, %v2868
    %v2907 = vmul.f32 %v920, %v2869
    %v2908 = vmul.f32 %v921, %v2870
    %v2909 = vmul.f32 %v922, %v2871
    %v2910 = vmul.f32 %v923, %v2870
    %v2911 = vmul.f32 %v924, %v2871
    %v2912 = vmul.f32 %v925, %v2870
    %v2913 = vmul.f32 %v926, %v2871
    %v2914 = vmul.f32 %v927, %v2870
    %v2915 = vmul.f32 %v928, %v2871
    %v2916 = vmul.f32 %v929, %v2870
    %v2917 = vmul.f32 %v930, %v2871
    %v2918 = vmul.f32 %v931, %v2870
    %v2919 = vmul.f32 %v932, %v2871
    %v2920 = vmul.f32 %v933, %v2870
    %v2921 = vmul.f32 %v934, %v2871
    %v2922 = vmul.f32 %v935, %v2870
    %v2923 = vmul.f32 %v936, %v2871
    %v2924 = vmul.f32 %v937, %v2870
    %v2925 = vmul.f32 %v938, %v2871
    %v2926 = vmul.f32 %v939, %v2870
    %v2927 = vmul.f32 %v940, %v2871
    %v2928 = vmul.f32 %v941, %v2870
    %v2929 = vmul.f32 %v942, %v2871
    %v2930 = vmul.f32 %v943, %v2870
    %v2931 = vmul.f32 %v944, %v2871
    %v2932 = vmul.f32 %v945, %v2870
    %v2933 = vmul.f32 %v946, %v2871
    %v2934 = vmul.f32 %v947, %v2870
    %v2935 = vmul.f32 %v948, %v2871
    %v2936 = vmul.f32 %v949, %v2870
    %v2937 = vmul.f32 %v950, %v2871
    %v2938 = vmul.f32 %v951, %v2870
    %v2939 = vmul.f32 %v952, %v2871
    %2940 = vst [vmem:[#allocation7] sm:$0xff] %v2876
    %2941 = vst [vmem:[#allocation7 + $0x8] sm:$0xff] %v2877
    %2942 = vst [vmem:[#allocation7 + $0x10] sm:$0xff] %v2878
    %2943 = vst [vmem:[#allocation7 + $0x18] sm:$0xff] %v2879
    %2944 = vst [vmem:[#allocation7 + $0x20] sm:$0xff] %v2880
    %2945 = vst [vmem:[#allocation7 + $0x28] sm:$0xff] %v2881
    %2946 = vst [vmem:[#allocation7 + $0x30] sm:$0xff] %v2882
    %2947 = vst [vmem:[#allocation7 + $0x38] sm:$0xff] %v2883
    %2948 = vst [vmem:[#allocation7 + $0x40] sm:$0xff] %v2884
    %2949 = vst [vmem:[#allocation7 + $0x48] sm:$0xff] %v2885
    %2950 = vst [vmem:[#allocation7 + $0x50] sm:$0xff] %v2886
    %2951 = vst [vmem:[#allocation7 + $0x58] sm:$0xff] %v2887
    %2952 = vst [vmem:[#allocation7 + $0x60] sm:$0xff] %v2888
    %2953 = vst [vmem:[#allocation7 + $0x68] sm:$0xff] %v2889
    %2954 = vst [vmem:[#allocation7 + $0x70] sm:$0xff] %v2890
    %2955 = vst [vmem:[#allocation7 + $0x78] sm:$0xff] %v2891
    %2956 = vst [vmem:[#allocation7 + $0x80] sm:$0xff] %v2892
    %2957 = vst [vmem:[#allocation7 + $0x88] sm:$0xff] %v2893
    %2958 = vst [vmem:[#allocation7 + $0x90] sm:$0xff] %v2894
    %2959 = vst [vmem:[#allocation7 + $0x98] sm:$0xff] %v2895
    %2960 = vst [vmem:[#allocation7 + $0xa0] sm:$0xff] %v2896
    %2961 = vst [vmem:[#allocation7 + $0xa8] sm:$0xff] %v2897
    %2962 = vst [vmem:[#allocation7 + $0xb0] sm:$0xff] %v2898
    %2963 = vst [vmem:[#allocation7 + $0xb8] sm:$0xff] %v2899
    %2964 = vst [vmem:[#allocation7 + $0xc0] sm:$0xff] %v2900
    %2965 = vst [vmem:[#allocation7 + $0xc8] sm:$0xff] %v2901
    %2966 = vst [vmem:[#allocation7 + $0xd0] sm:$0xff] %v2902
    %2967 = vst [vmem:[#allocation7 + $0xd8] sm:$0xff] %v2903
    %2968 = vst [vmem:[#allocation7 + $0xe0] sm:$0xff] %v2904
    %2969 = vst [vmem:[#allocation7 + $0xe8] sm:$0xff] %v2905
    %2970 = vst [vmem:[#allocation7 + $0xf0] sm:$0xff] %v2906
    %2971 = vst [vmem:[#allocation7 + $0xf8] sm:$0xff] %v2907
    %2972 = vst [vmem:[#allocation7 + $0x100] sm:$0xff] %v2908
    %2973 = vst [vmem:[#allocation7 + $0x108] sm:$0xff] %v2909
    %2974 = vst [vmem:[#allocation7 + $0x110] sm:$0xff] %v2910
    %2975 = vst [vmem:[#allocation7 + $0x118] sm:$0xff] %v2911
    %2976 = vst [vmem:[#allocation7 + $0x120] sm:$0xff] %v2912
    %2977 = vst [vmem:[#allocation7 + $0x128] sm:$0xff] %v2913
    %2978 = vst [vmem:[#allocation7 + $0x130] sm:$0xff] %v2914
    %2979 = vst [vmem:[#allocation7 + $0x138] sm:$0xff] %v2915
    %2980 = vst [vmem:[#allocation7 + $0x140] sm:$0xff] %v2916
    %2981 = vst [vmem:[#allocation7 + $0x148] sm:$0xff] %v2917
    %2982 = vst [vmem:[#allocation7 + $0x150] sm:$0xff] %v2918
    %2983 = vst [vmem:[#allocation7 + $0x158] sm:$0xff] %v2919
    %2984 = vst [vmem:[#allocation7 + $0x160] sm:$0xff] %v2920
    %2985 = vst [vmem:[#allocation7 + $0x168] sm:$0xff] %v2921
    %2986 = vst [vmem:[#allocation7 + $0x170] sm:$0xff] %v2922
    %2987 = vst [vmem:[#allocation7 + $0x178] sm:$0xff] %v2923
    %2988 = vst [vmem:[#allocation7 + $0x180] sm:$0xff] %v2924
    %2989 = vst [vmem:[#allocation7 + $0x188] sm:$0xff] %v2925
    %2990 = vst [vmem:[#allocation7 + $0x190] sm:$0xff] %v2926
    %2991 = vst [vmem:[#allocation7 + $0x198] sm:$0xff] %v2927
    %2992 = vst [vmem:[#allocation7 + $0x1a0] sm:$0xff] %v2928
    %2993 = vst [vmem:[#allocation7 + $0x1a8] sm:$0xff] %v2929
    %2994 = vst [vmem:[#allocation7 + $0x1b0] sm:$0xff] %v2930
    %2995 = vst [vmem:[#allocation7 + $0x1b8] sm:$0xff] %v2931
    %2996 = vst [vmem:[#allocation7 + $0x1c0] sm:$0xff] %v2932
    %2997 = vst [vmem:[#allocation7 + $0x1c8] sm:$0xff] %v2933
    %2998 = vst [vmem:[#allocation7 + $0x1d0] sm:$0xff] %v2934
    %2999 = vst [vmem:[#allocation7 + $0x1d8] sm:$0xff] %v2935
    %3000 = vst [vmem:[#allocation7 + $0x1e0] sm:$0xff] %v2936
    %3001 = vst [vmem:[#allocation7 + $0x1e8] sm:$0xff] %v2937
    %3002 = vst [vmem:[#allocation7 + $0x1f0] sm:$0xff] %v2938
    %3003 = vst [vmem:[#allocation7 + $0x1f8] sm:$0xff] %v2939
    // Predicated region
    $region30: #{tpu_custom_call.1} parent=1 // pred_check
      _
    $region31: #{tpu_custom_call.1} parent=1 // pred_check_branch
      %3005 = sbr.rel (0) target = $region33
    $region32: #{tpu_custom_call.1} parent=1 // pred_region
      %3007 = vsyncadd [#allocation4], 0
      %s3008 = sshll.u32 [#allocation7], 4
      %s3009 = int_to_ptr.vmem [resolvable:$true] %s3008
      %s3010 = sshll.u32 %s5, 4
      %s3011 = int_to_ptr.hbm [resolvable:$true] %s3010
      %3016 = dma.vmem_to_hbm [thread:$0]  %s3009, 8192, %s3011, [#allocation4], 256, 256, 16
    $region33: #{tpu_custom_call.1} parent=1 // pred_fallthru
      _
    // Predicated region
    $region34: #{tpu_custom_call.1} parent=1 // pred_check
      _
    $region35: #{tpu_custom_call.1} parent=1 // pred_check_branch
      %3018 = sbr.rel (0) target = $region37
    $region36: #{tpu_custom_call.1} parent=1 // pred_region
      %3020 = dma.done [#allocation4], 8192
    $region37: #{tpu_custom_call.1} parent=1 // pred_fallthru
      _
    %3021 = vsyncpa [#allocation3], 1
    %3022 = vsyncpa [#allocation4], 1
    %3023 = vsyncpa [#allocation5], 1

</llo_original>
